<compile_context>
chip_gen: v5e
topology: v5e:2x2
jax: 0.10.0
libtpu: 0.0.40
codegen_flags: <defaults>
</compile_context>

<pallas_src>
import functools

import jax
import jax.numpy as jnp
from jax.experimental import pallas as pl
from jax.experimental.pallas import tpu as pltpu

NEG_SLOPE = 0.2
BN_EPS = 1e-5
LN_EPS = 1e-5
KMAX = 9          # all conv kernels are zero-padded (centered) to 9 taps, padding = 4
PAD = KMAX // 2
KERNEL_SIZES = (3, 5, 7, 9)
NBLK = len(KERNEL_SIZES)

_VMEM_LIMIT = None


def _vmem_limit():
    """Scoped-VMEM limit derived from the actual chip (v5e/v6e: 128 MiB, v7x: 64 MiB)."""
    global _VMEM_LIMIT
    if _VMEM_LIMIT is None:
        try:
            cap = int(getattr(pltpu.get_tpu_info(), "vmem_capacity_bytes", 0)) or (128 << 20)
        except Exception:  # pragma: no cover - interpret / unusual backends
            cap = 128 << 20
        _VMEM_LIMIT = int(min(cap // 2, 64 << 20))
    return _VMEM_LIMIT


def _leaky_relu(x):
    return jnp.where(x > 0, x, NEG_SLOPE * x)


def _unet_block_kernel(mode, B, L_in, C_in, C_out,
                       x_ref, w1_ref, b1_ref, vc4_ref, w2_ref,
                       fc1w_ref, fc2w_ref, fc3w_ref, vh_ref, vco_ref,
                       out_ref):
    f32, bf16 = jnp.float32, jnp.bfloat16
    C4 = NBLK * C_out
    CE = C4 + C_out                      # conv1 outputs (4 blocks) + fused skip-conv columns

    # ---- load input (B, C_in, L_in) and move to NLC (B, L_in, C_in) ----------
    x_nlc = jnp.transpose(x_ref[...].astype(f32), (0, 2, 1))

    # ---- nonparametric step: MaxPool1d(2) (floor) / nearest Upsample(x2) -----
    if mode == "downsample":
        L = L_in // 2
        pooled = jnp.max(x_nlc[:, :2 * L, :].reshape(B * L, 2, C_in), axis=1)
    else:
        L = L_in * 2
        xf = x_nlc.reshape(B * L_in, C_in)
        pooled = jnp.broadcast_to(xf[:, None, :], (B * L_in, 2, C_in)).reshape(B * L, C_in)
    M = B * L
    inv_m = 1.0 / float(M)

    # ---- helpers --------------------------------------------------------------
    def batchnorm(y, gamma, beta):
        """Training-mode BatchNorm1d on the (M, C) slab: per-channel batch statistics
        (biased variance), f32, fused single-pass sum / sum-of-squares, one scale/shift FMA."""
        mean = jnp.sum(y, axis=0, keepdims=True) * inv_m
        msq = jnp.sum(y * y, axis=0, keepdims=True) * inv_m
        var = jnp.maximum(msq - mean * mean, 0.0)
        scale = jax.lax.rsqrt(var + BN_EPS) * gamma
        shift = beta - mean * scale
        return y * scale + shift

    def pad_L(slab_mc, C):
        """(M, C) slab -> (B, L + 2*PAD, C) zero-haloed slab (per-batch halo)."""
        zp = jnp.zeros((B, PAD, C), f32)
        return jnp.concatenate([zp, slab_mc.reshape(B, L, C), zp], axis=1)

    # ---- conv1 of the 4 ConvBlocks (stacked output channels) + fused 1x1 skip ----
    # 9-tap accumulation: one (M, C_in) x (C_in, C4 + C_out) bf16 matmul per tap, f32 acc.
    xp1 = pad_L(pooled, C_in)
    acc1 = jnp.zeros((M, CE), f32)
    for t in range(KMAX):                                   # static unrolled tap loop
        xt = xp1[:, t:t + L, :].reshape(M, C_in).astype(bf16)
        acc1 = acc1 + jnp.dot(xt, w1_ref[t], preferred_element_type=f32)
    acc1 = acc1 + b1_ref[...]
    h = acc1[:, :C4]                                        # conv1 outputs (block-concat)
    res = acc1[:, C4:]                                      # skip-conv path

    h = _leaky_relu(h)
    h = batchnorm(h, vc4_ref[0:1, :], vc4_ref[1:2, :])      # bn1 (per-block stats == per-column)

    # ---- conv2 per block (no block-diagonal zero weights): 9 taps x 4 blocks ----
    xp2 = pad_L(h, C4)
    accs = [jnp.zeros((M, C_out), f32) for _ in range(NBLK)]
    for t in range(KMAX):
        xt = xp2[:, t:t + L, :].reshape(M, C4)
        for blk in range(NBLK):
            a = xt[:, blk * C_out:(blk + 1) * C_out].astype(bf16)
            accs[blk] = accs[blk] + jnp.dot(a, w2_ref[t * NBLK + blk],
                                            preferred_element_type=f32)
    h = jnp.concatenate(accs, axis=1) + vc4_ref[2:3, :]     # + conv2 bias

    h = batchnorm(h, vc4_ref[3:4, :], vc4_ref[4:5, :])
    h = _leaky_relu(h)
    h = batchnorm(h, vc4_ref[3:4, :], vc4_ref[4:5, :])      # bn2 applied twice per ConvBlock.forward

    # ---- MLP (bf16 operands, f32 accumulate) + residual + LayerNorm -----------
    z = jnp.dot(h.astype(bf16), fc1w_ref[...], preferred_element_type=f32) + vh_ref[0:1, :]
    z = jnp.maximum(z, 0.0)
    z = jnp.dot(z.astype(bf16), fc2w_ref[...], preferred_element_type=f32) + vh_ref[1:2, :]
    z = jnp.maximum(z, 0.0)
    y = jnp.dot(z.astype(bf16), fc3w_ref[...], preferred_element_type=f32) + vco_ref[0:1, :] + res

    mu = jnp.mean(y, axis=1, keepdims=True)
    var = jnp.mean((y - mu) ** 2, axis=1, keepdims=True)
    y = (y - mu) * jax.lax.rsqrt(var + LN_EPS) * vco_ref[1:2, :] + vco_ref[2:3, :]

    # ---- store lane-dense in the PyTorch NCL layout (B, C_out, L_out) ---------
    out_ref[...] = jnp.transpose(y.reshape(B, L, C_out), (0, 2, 1)).astype(out_ref.dtype)


def pack_params(params):
    """One-time weight packing (outside the per-call path).

    Returns bf16 matmul weights and three small f32 bias/scale tables instead of ~18
    separately-DMAed tiny arrays."""
    f32, bf16 = jnp.float32, jnp.bfloat16
    c1_w = params["c1_w"].astype(f32)            # (NBLK, KMAX, C_in, C_out)
    c2_w = params["c2_w"].astype(f32)            # (NBLK, KMAX, C_out, C_out)
    nblk, kmax, C_in, C_out = c1_w.shape
    C4 = nblk * C_out

    # conv1 of all blocks stacked along output channels, 1x1 skip conv fused into the
    # centre tap as C_out extra output columns: (KMAX, C_in, C4 + C_out).
    w1 = jnp.transpose(c1_w, (1, 2, 0, 3)).reshape(kmax, C_in, C4)
    skip_cols = jnp.zeros((kmax, C_in, C_out), f32).at[PAD].set(params["skip_w"].astype(f32))
    w1ext = jnp.concatenate([w1, skip_cols], axis=2).astype(bf16)
    b1ext = jnp.concatenate([params["c1_b"].reshape(1, C4),
                             params["skip_b"].reshape(1, C_out)], axis=1).astype(f32)

    # conv2: per-block per-tap weights, flat leading axis (no block-diagonal zeros):
    # index t*NBLK + blk -> (C_out, C_out).
    w2 = jnp.transpose(c2_w, (1, 0, 2, 3)).reshape(kmax * nblk, C_out, C_out).astype(bf16)

    vec_c4 = jnp.concatenate([params["bn1_g"].reshape(1, C4),
                              params["bn1_b"].reshape(1, C4),
                              params["c2_b"].reshape(1, C4),
                              params["bn2_g"].reshape(1, C4),
                              params["bn2_b"].reshape(1, C4)], axis=0).astype(f32)
    vec_h = jnp.concatenate([params["fc1_b"], params["fc2_b"]], axis=0).astype(f32)
    vec_co = jnp.concatenate([params["fc3_b"], params["ln_g"], params["ln_b"]], axis=0).astype(f32)

    return dict(
        w1=w1ext, b1=b1ext, vec_c4=vec_c4, w2=w2,
        fc1_w=params["fc1_w"].astype(bf16),
        fc2_w=params["fc2_w"].astype(bf16),
        fc3_w=params["fc3_w"].astype(bf16),
        vec_h=vec_h, vec_co=vec_co,
    )


@functools.partial(jax.jit, static_argnames=("mode",))
def unet_block_forward(x_ncl, packed, mode):
    """x_ncl: (B, C_in, L_in) in PyTorch NCL layout.  Returns (B, C_out, L_out) float32."""
    assert mode in ("downsample", "upsample")
    B, C_in, L_in = x_ncl.shape
    C_out = packed["vec_co"].shape[1]
    C4 = NBLK * C_out
    H = packed["fc1_w"].shape[1]
    L_out = L_in // 2 if mode == "downsample" else L_in * 2
    M = B * L_out

    args = (x_ncl.astype(jnp.float32),
            packed["w1"], packed["b1"], packed["vec_c4"], packed["w2"],
            packed["fc1_w"], packed["fc2_w"], packed["fc3_w"],
            packed["vec_h"], packed["vec_co"])

    kern = functools.partial(_unet_block_kernel, mode, B, L_in, C_in, C_out)

    flops = 2 * M * (KMAX * C_in * (C4 + C_out)      # conv1 + fused skip
                     + KMAX * C4 * C_out             # conv2 (per block, no zero padding)
                     + C4 * H + H * H + H * C_out)   # MLP
    bytes_accessed = sum(int(a.size) * a.dtype.itemsize for a in args) + 4 * M * C_out
    cost = pl.CostEstimate(flops=int(flops),
                           transcendentals=int(M + 3 * C4),
                           bytes_accessed=int(bytes_accessed))

    vmem = pl.BlockSpec(memory_space=pltpu.MemorySpace.VMEM)
    return pl.pallas_call(
        kern,
        out_shape=jax.ShapeDtypeStruct((B, C_out, L_out), jnp.float32),
        in_specs=[vmem] * len(args),
        out_specs=vmem,
        cost_estimate=cost,
        compiler_params=pltpu.CompilerParams(vmem_limit_bytes=_vmem_limit()),
    )(*args)


def init_params(key, C_in, C_out, H=256):
    nblk = NBLK

    def nrm(k, shape, scale):
        return jax.random.normal(k, shape, jnp.float32) * scale

    keys = iter(jax.random.split(key, 32))

    # conv weights stored as (block, tap, in_ch, out_ch), zero-padded/centered to 9 taps
    c1_w = jnp.zeros((nblk, KMAX, C_in, C_out), jnp.float32)
    c2_w = jnp.zeros((nblk, KMAX, C_out, C_out), jnp.float32)
    for i, ks in enumerate(KERNEL_SIZES):
        off = (KMAX - ks) // 2
        c1_w = c1_w.at[i, off:off + ks].set(nrm(next(keys), (ks, C_in, C_out), 0.2))
        c2_w = c2_w.at[i, off:off + ks].set(nrm(next(keys), (ks, C_out, C_out), 0.1))

    return dict(
        c1_w=c1_w,
        c1_b=nrm(next(keys), (nblk, 1, C_out), 0.05),
        bn1_g=1.0 + nrm(next(keys), (nblk, 1, C_out), 0.05),
        bn1_b=nrm(next(keys), (nblk, 1, C_out), 0.05),
        c2_w=c2_w,
        c2_b=nrm(next(keys), (nblk, 1, C_out), 0.05),
        bn2_g=1.0 + nrm(next(keys), (nblk, 1, C_out), 0.05),
        bn2_b=nrm(next(keys), (nblk, 1, C_out), 0.05),
        skip_w=nrm(next(keys), (C_in, C_out), 0.2),
        skip_b=nrm(next(keys), (1, C_out), 0.05),
        fc1_w=nrm(next(keys), (nblk * C_out, H), 0.1),
        fc1_b=nrm(next(keys), (1, H), 0.05),
        fc2_w=nrm(next(keys), (H, H), 0.05),
        fc2_b=nrm(next(keys), (1, H), 0.05),
        fc3_w=nrm(next(keys), (H, C_out), 0.1),
        fc3_b=nrm(next(keys), (1, C_out), 0.05),
        ln_g=1.0 + nrm(next(keys), (1, C_out), 0.05),
        ln_b=nrm(next(keys), (1, C_out), 0.05),
    )


if __name__ == "__main__":
    key = jax.random.PRNGKey(0)
    kp, kx = jax.random.split(key)

    B, C_in, C_out, L_in = 2, 4, 8, 16
    params = init_params(kp, C_in, C_out, H=256)
    packed = pack_params(params)            # one-time weight packing, outside the jit'd call path
    x = jax.random.normal(kx, (B, C_in, L_in), jnp.float32)   # PyTorch NCL layout

    y_down = unet_block_forward(x, packed, mode="downsample")
    y_up = unet_block_forward(x, packed, mode="upsample")
    jax.block_until_ready(y_down)
    jax.block_until_ready(y_up)

    assert y_down.shape == (B, C_out, L_in // 2)
    assert y_up.shape == (B, C_out, L_in * 2)
    assert bool(jnp.all(jnp.isfinite(y_down))) and bool(jnp.all(jnp.isfinite(y_up)))
    print("KERNEL_OK")
</pallas_src>

<mosaic_0001>
module attributes {stable_mosaic.version = 11 : i64} {
  func.func @_unet_block_kernel(%arg0: memref<2x4x16xf32, #tpu.memory_space<vmem>>, %arg1: memref<9x4x40xbf16, #tpu.memory_space<vmem>>, %arg2: memref<1x40xf32, #tpu.memory_space<vmem>>, %arg3: memref<5x32xf32, #tpu.memory_space<vmem>>, %arg4: memref<36x8x8xbf16, #tpu.memory_space<vmem>>, %arg5: memref<32x256xbf16, #tpu.memory_space<vmem>>, %arg6: memref<256x256xbf16, #tpu.memory_space<vmem>>, %arg7: memref<256x8xbf16, #tpu.memory_space<vmem>>, %arg8: memref<2x256xf32, #tpu.memory_space<vmem>>, %arg9: memref<3x8xf32, #tpu.memory_space<vmem>>, %arg10: memref<2x8x8xf32, #tpu.memory_space<vmem>>) attributes {dimension_semantics = [], scalar_prefetch = 0 : i64, scratch_operands = 0 : i64, tpu.core_type = #tpu.core_type<tc>} {
    %c0 = arith.constant 0 : index
    %c0_0 = arith.constant 0 : index
    %c0_1 = arith.constant 0 : index
    %0 = vector.load %arg0[%c0, %c0_0, %c0_1] : memref<2x4x16xf32, #tpu.memory_space<vmem>>, vector<2x4x16xf32>
    %1 = tpu.transpose %0, [0, 2, 1] : vector<2x4x16xf32> -> vector<2x16x4xf32>
    %2 = vector.shape_cast %1 : vector<2x16x4xf32> to vector<16x2x4xf32>
    %cst = arith.constant dense<0xFF800000> : vector<16x4xf32>
    %3 = vector.multi_reduction <maximumf>, %2, %cst [1] : vector<16x2x4xf32> to vector<16x4xf32>
    %cst_2 = arith.constant 0.000000e+00 : f32
    %4 = vector.broadcast %cst_2 : f32 to vector<2x4x4xf32>
    %5 = vector.shape_cast %3 : vector<16x4xf32> to vector<2x8x4xf32>
    %6 = tpu.concatenate %4, %5, %4 in 1 : vector<2x4x4xf32>, vector<2x8x4xf32>, vector<2x4x4xf32> -> vector<2x16x4xf32>
    %cst_3 = arith.constant 0.000000e+00 : f32
    %7 = vector.broadcast %cst_3 : f32 to vector<16x40xf32>
    %8 = vector.extract_strided_slice %6 {offsets = [0, 0, 0], sizes = [2, 8, 4], strides = [1, 1, 1]} : vector<2x16x4xf32> to vector<2x8x4xf32>
    %9 = vector.shape_cast %8 : vector<2x8x4xf32> to vector<16x4xf32>
    %10 = arith.truncf %9 : vector<16x4xf32> to vector<16x4xbf16>
    %c0_4 = arith.constant 0 : index
    %c0_5 = arith.constant 0 : index
    %c0_6 = arith.constant 0 : index
    %11 = vector.load %arg1[%c0_4, %c0_5, %c0_6] : memref<9x4x40xbf16, #tpu.memory_space<vmem>>, vector<1x4x40xbf16>
    %12 = vector.shape_cast %11 : vector<1x4x40xbf16> to vector<4x40xbf16>
    %cst_7 = arith.constant dense<0.000000e+00> : vector<16x40xf32>
    %13 = tpu.matmul %10, %12, %cst_7 {dimension_numbers = #tpu.dot_dimension_numbers<[1], [0], [0], [1], [0, 0, 1, 1], [], []>} : vector<16x4xbf16>, vector<4x40xbf16>, vector<16x40xf32> -> vector<16x40xf32>
    %14 = arith.addf %7, %13 : vector<16x40xf32>
    %15 = vector.extract_strided_slice %6 {offsets = [0, 1, 0], sizes = [2, 8, 4], strides = [1, 1, 1]} : vector<2x16x4xf32> to vector<2x8x4xf32>
    %16 = vector.shape_cast %15 : vector<2x8x4xf32> to vector<16x4xf32>
    %17 = arith.truncf %16 : vector<16x4xf32> to vector<16x4xbf16>
    %c1 = arith.constant 1 : index
    %c0_8 = arith.constant 0 : index
    %c0_9 = arith.constant 0 : index
    %18 = vector.load %arg1[%c1, %c0_8, %c0_9] : memref<9x4x40xbf16, #tpu.memory_space<vmem>>, vector<1x4x40xbf16>
    %19 = vector.shape_cast %18 : vector<1x4x40xbf16> to vector<4x40xbf16>
    %cst_10 = arith.constant dense<0.000000e+00> : vector<16x40xf32>
    %20 = tpu.matmul %17, %19, %cst_10 {dimension_numbers = #tpu.dot_dimension_numbers<[1], [0], [0], [1], [0, 0, 1, 1], [], []>} : vector<16x4xbf16>, vector<4x40xbf16>, vector<16x40xf32> -> vector<16x40xf32>
    %21 = arith.addf %14, %20 : vector<16x40xf32>
    %22 = vector.extract_strided_slice %6 {offsets = [0, 2, 0], sizes = [2, 8, 4], strides = [1, 1, 1]} : vector<2x16x4xf32> to vector<2x8x4xf32>
    %23 = vector.shape_cast %22 : vector<2x8x4xf32> to vector<16x4xf32>
    %24 = arith.truncf %23 : vector<16x4xf32> to vector<16x4xbf16>
    %c2 = arith.constant 2 : index
    %c0_11 = arith.constant 0 : index
    %c0_12 = arith.constant 0 : index
    %25 = vector.load %arg1[%c2, %c0_11, %c0_12] : memref<9x4x40xbf16, #tpu.memory_space<vmem>>, vector<1x4x40xbf16>
    %26 = vector.shape_cast %25 : vector<1x4x40xbf16> to vector<4x40xbf16>
    %cst_13 = arith.constant dense<0.000000e+00> : vector<16x40xf32>
    %27 = tpu.matmul %24, %26, %cst_13 {dimension_numbers = #tpu.dot_dimension_numbers<[1], [0], [0], [1], [0, 0, 1, 1], [], []>} : vector<16x4xbf16>, vector<4x40xbf16>, vector<16x40xf32> -> vector<16x40xf32>
    %28 = arith.addf %21, %27 : vector<16x40xf32>
    %29 = vector.extract_strided_slice %6 {offsets = [0, 3, 0], sizes = [2, 8, 4], strides = [1, 1, 1]} : vector<2x16x4xf32> to vector<2x8x4xf32>
    %30 = vector.shape_cast %29 : vector<2x8x4xf32> to vector<16x4xf32>
    %31 = arith.truncf %30 : vector<16x4xf32> to vector<16x4xbf16>
    %c3 = arith.constant 3 : index
    %c0_14 = arith.constant 0 : index
    %c0_15 = arith.constant 0 : index
    %32 = vector.load %arg1[%c3, %c0_14, %c0_15] : memref<9x4x40xbf16, #tpu.memory_space<vmem>>, vector<1x4x40xbf16>
    %33 = vector.shape_cast %32 : vector<1x4x40xbf16> to vector<4x40xbf16>
    %cst_16 = arith.constant dense<0.000000e+00> : vector<16x40xf32>
    %34 = tpu.matmul %31, %33, %cst_16 {dimension_numbers = #tpu.dot_dimension_numbers<[1], [0], [0], [1], [0, 0, 1, 1], [], []>} : vector<16x4xbf16>, vector<4x40xbf16>, vector<16x40xf32> -> vector<16x40xf32>
    %35 = arith.addf %28, %34 : vector<16x40xf32>
    %36 = vector.extract_strided_slice %6 {offsets = [0, 4, 0], sizes = [2, 8, 4], strides = [1, 1, 1]} : vector<2x16x4xf32> to vector<2x8x4xf32>
    %37 = vector.shape_cast %36 : vector<2x8x4xf32> to vector<16x4xf32>
    %38 = arith.truncf %37 : vector<16x4xf32> to vector<16x4xbf16>
    %c4 = arith.constant 4 : index
    %c0_17 = arith.constant 0 : index
    %c0_18 = arith.constant 0 : index
    %39 = vector.load %arg1[%c4, %c0_17, %c0_18] : memref<9x4x40xbf16, #tpu.memory_space<vmem>>, vector<1x4x40xbf16>
    %40 = vector.shape_cast %39 : vector<1x4x40xbf16> to vector<4x40xbf16>
    %cst_19 = arith.constant dense<0.000000e+00> : vector<16x40xf32>
    %41 = tpu.matmul %38, %40, %cst_19 {dimension_numbers = #tpu.dot_dimension_numbers<[1], [0], [0], [1], [0, 0, 1, 1], [], []>} : vector<16x4xbf16>, vector<4x40xbf16>, vector<16x40xf32> -> vector<16x40xf32>
    %42 = arith.addf %35, %41 : vector<16x40xf32>
    %43 = vector.extract_strided_slice %6 {offsets = [0, 5, 0], sizes = [2, 8, 4], strides = [1, 1, 1]} : vector<2x16x4xf32> to vector<2x8x4xf32>
    %44 = vector.shape_cast %43 : vector<2x8x4xf32> to vector<16x4xf32>
    %45 = arith.truncf %44 : vector<16x4xf32> to vector<16x4xbf16>
    %c5 = arith.constant 5 : index
    %c0_20 = arith.constant 0 : index
    %c0_21 = arith.constant 0 : index
    %46 = vector.load %arg1[%c5, %c0_20, %c0_21] : memref<9x4x40xbf16, #tpu.memory_space<vmem>>, vector<1x4x40xbf16>
    %47 = vector.shape_cast %46 : vector<1x4x40xbf16> to vector<4x40xbf16>
    %cst_22 = arith.constant dense<0.000000e+00> : vector<16x40xf32>
    %48 = tpu.matmul %45, %47, %cst_22 {dimension_numbers = #tpu.dot_dimension_numbers<[1], [0], [0], [1], [0, 0, 1, 1], [], []>} : vector<16x4xbf16>, vector<4x40xbf16>, vector<16x40xf32> -> vector<16x40xf32>
    %49 = arith.addf %42, %48 : vector<16x40xf32>
    %50 = vector.extract_strided_slice %6 {offsets = [0, 6, 0], sizes = [2, 8, 4], strides = [1, 1, 1]} : vector<2x16x4xf32> to vector<2x8x4xf32>
    %51 = vector.shape_cast %50 : vector<2x8x4xf32> to vector<16x4xf32>
    %52 = arith.truncf %51 : vector<16x4xf32> to vector<16x4xbf16>
    %c6 = arith.constant 6 : index
    %c0_23 = arith.constant 0 : index
    %c0_24 = arith.constant 0 : index
    %53 = vector.load %arg1[%c6, %c0_23, %c0_24] : memref<9x4x40xbf16, #tpu.memory_space<vmem>>, vector<1x4x40xbf16>
    %54 = vector.shape_cast %53 : vector<1x4x40xbf16> to vector<4x40xbf16>
    %cst_25 = arith.constant dense<0.000000e+00> : vector<16x40xf32>
    %55 = tpu.matmul %52, %54, %cst_25 {dimension_numbers = #tpu.dot_dimension_numbers<[1], [0], [0], [1], [0, 0, 1, 1], [], []>} : vector<16x4xbf16>, vector<4x40xbf16>, vector<16x40xf32> -> vector<16x40xf32>
    %56 = arith.addf %49, %55 : vector<16x40xf32>
    %57 = vector.extract_strided_slice %6 {offsets = [0, 7, 0], sizes = [2, 8, 4], strides = [1, 1, 1]} : vector<2x16x4xf32> to vector<2x8x4xf32>
    %58 = vector.shape_cast %57 : vector<2x8x4xf32> to vector<16x4xf32>
    %59 = arith.truncf %58 : vector<16x4xf32> to vector<16x4xbf16>
    %c7 = arith.constant 7 : index
    %c0_26 = arith.constant 0 : index
    %c0_27 = arith.constant 0 : index
    %60 = vector.load %arg1[%c7, %c0_26, %c0_27] : memref<9x4x40xbf16, #tpu.memory_space<vmem>>, vector<1x4x40xbf16>
    %61 = vector.shape_cast %60 : vector<1x4x40xbf16> to vector<4x40xbf16>
    %cst_28 = arith.constant dense<0.000000e+00> : vector<16x40xf32>
    %62 = tpu.matmul %59, %61, %cst_28 {dimension_numbers = #tpu.dot_dimension_numbers<[1], [0], [0], [1], [0, 0, 1, 1], [], []>} : vector<16x4xbf16>, vector<4x40xbf16>, vector<16x40xf32> -> vector<16x40xf32>
    %63 = arith.addf %56, %62 : vector<16x40xf32>
    %64 = vector.extract_strided_slice %6 {offsets = [0, 8, 0], sizes = [2, 8, 4], strides = [1, 1, 1]} : vector<2x16x4xf32> to vector<2x8x4xf32>
    %65 = vector.shape_cast %64 : vector<2x8x4xf32> to vector<16x4xf32>
    %66 = arith.truncf %65 : vector<16x4xf32> to vector<16x4xbf16>
    %c8 = arith.constant 8 : index
    %c0_29 = arith.constant 0 : index
    %c0_30 = arith.constant 0 : index
    %67 = vector.load %arg1[%c8, %c0_29, %c0_30] : memref<9x4x40xbf16, #tpu.memory_space<vmem>>, vector<1x4x40xbf16>
    %68 = vector.shape_cast %67 : vector<1x4x40xbf16> to vector<4x40xbf16>
    %cst_31 = arith.constant dense<0.000000e+00> : vector<16x40xf32>
    %69 = tpu.matmul %66, %68, %cst_31 {dimension_numbers = #tpu.dot_dimension_numbers<[1], [0], [0], [1], [0, 0, 1, 1], [], []>} : vector<16x4xbf16>, vector<4x40xbf16>, vector<16x40xf32> -> vector<16x40xf32>
    %70 = arith.addf %63, %69 : vector<16x40xf32>
    %c0_32 = arith.constant 0 : index
    %c0_33 = arith.constant 0 : index
    %71 = vector.load %arg2[%c0_32, %c0_33] : memref<1x40xf32, #tpu.memory_space<vmem>>, vector<1x40xf32>
    %72 = vector.broadcast %71 : vector<1x40xf32> to vector<16x40xf32>
    %73 = arith.addf %70, %72 : vector<16x40xf32>
    %74 = vector.extract_strided_slice %73 {offsets = [0, 0], sizes = [16, 32], strides = [1, 1]} : vector<16x40xf32> to vector<16x32xf32>
    %75 = vector.extract_strided_slice %73 {offsets = [0, 32], sizes = [16, 8], strides = [1, 1]} : vector<16x40xf32> to vector<16x8xf32>
    %cst_34 = arith.constant 0.000000e+00 : f32
    %76 = vector.broadcast %cst_34 : f32 to vector<16x32xf32>
    %77 = arith.cmpf ogt, %74, %76 : vector<16x32xf32>
    %cst_35 = arith.constant 2.000000e-01 : f32
    %78 = vector.broadcast %cst_35 : f32 to vector<16x32xf32>
    %79 = arith.mulf %78, %74 : vector<16x32xf32>
    %80 = arith.select %77, %74, %79 : vector<16x32xi1>, vector<16x32xf32>
    %c0_36 = arith.constant 0 : index
    %c0_37 = arith.constant 0 : index
    %81 = vector.load %arg3[%c0_36, %c0_37] : memref<5x32xf32, #tpu.memory_space<vmem>>, vector<1x32xf32>
    %c1_38 = arith.constant 1 : index
    %c0_39 = arith.constant 0 : index
    %82 = vector.load %arg3[%c1_38, %c0_39] : memref<5x32xf32, #tpu.memory_space<vmem>>, vector<1x32xf32>
    %cst_40 = arith.constant dense<0.000000e+00> : vector<32xf32>
    %83 = vector.multi_reduction <add>, %80, %cst_40 [0] : vector<16x32xf32> to vector<32xf32>
    %84 = vector.shape_cast %83 : vector<32xf32> to vector<1x32xf32>
    %cst_41 = arith.constant 6.250000e-02 : f32
    %85 = vector.broadcast %cst_41 : f32 to vector<1x32xf32>
    %86 = arith.mulf %84, %85 : vector<1x32xf32>
    %87 = arith.mulf %80, %80 : vector<16x32xf32>
    %cst_42 = arith.constant dense<0.000000e+00> : vector<32xf32>
    %88 = vector.multi_reduction <add>, %87, %cst_42 [0] : vector<16x32xf32> to vector<32xf32>
    %89 = vector.shape_cast %88 : vector<32xf32> to vector<1x32xf32>
    %cst_43 = arith.constant 6.250000e-02 : f32
    %90 = vector.broadcast %cst_43 : f32 to vector<1x32xf32>
    %91 = arith.mulf %89, %90 : vector<1x32xf32>
    %92 = arith.mulf %86, %86 : vector<1x32xf32>
    %93 = arith.subf %91, %92 : vector<1x32xf32>
    %cst_44 = arith.constant 0.000000e+00 : f32
    %94 = vector.broadcast %cst_44 : f32 to vector<1x32xf32>
    %95 = arith.maximumf %93, %94 : vector<1x32xf32>
    %cst_45 = arith.constant 9.99999974E-6 : f32
    %96 = vector.broadcast %cst_45 : f32 to vector<1x32xf32>
    %97 = arith.addf %95, %96 : vector<1x32xf32>
    %98 = math.rsqrt %97 : vector<1x32xf32>
    %99 = arith.mulf %98, %81 : vector<1x32xf32>
    %100 = arith.mulf %86, %99 : vector<1x32xf32>
    %101 = arith.subf %82, %100 : vector<1x32xf32>
    %102 = vector.broadcast %99 : vector<1x32xf32> to vector<16x32xf32>
    %103 = arith.mulf %80, %102 : vector<16x32xf32>
    %104 = vector.broadcast %101 : vector<1x32xf32> to vector<16x32xf32>
    %105 = arith.addf %103, %104 : vector<16x32xf32>
    %cst_46 = arith.constant 0.000000e+00 : f32
    %106 = vector.broadcast %cst_46 : f32 to vector<2x4x32xf32>
    %107 = vector.shape_cast %105 : vector<16x32xf32> to vector<2x8x32xf32>
    %108 = tpu.concatenate %106, %107, %106 in 1 : vector<2x4x32xf32>, vector<2x8x32xf32>, vector<2x4x32xf32> -> vector<2x16x32xf32>
    %cst_47 = arith.constant 0.000000e+00 : f32
    %109 = vector.broadcast %cst_47 : f32 to vector<16x8xf32>
    %cst_48 = arith.constant 0.000000e+00 : f32
    %110 = vector.broadcast %cst_48 : f32 to vector<16x8xf32>
    %cst_49 = arith.constant 0.000000e+00 : f32
    %111 = vector.broadcast %cst_49 : f32 to vector<16x8xf32>
    %cst_50 = arith.constant 0.000000e+00 : f32
    %112 = vector.broadcast %cst_50 : f32 to vector<16x8xf32>
    %113 = vector.extract_strided_slice %108 {offsets = [0, 0, 0], sizes = [2, 8, 32], strides = [1, 1, 1]} : vector<2x16x32xf32> to vector<2x8x32xf32>
    %114 = vector.shape_cast %113 : vector<2x8x32xf32> to vector<16x32xf32>
    %115 = vector.extract_strided_slice %114 {offsets = [0, 0], sizes = [16, 8], strides = [1, 1]} : vector<16x32xf32> to vector<16x8xf32>
    %116 = arith.truncf %115 : vector<16x8xf32> to vector<16x8xbf16>
    %c0_51 = arith.constant 0 : index
    %c0_52 = arith.constant 0 : index
    %c0_53 = arith.constant 0 : index
    %117 = vector.load %arg4[%c0_51, %c0_52, %c0_53] : memref<36x8x8xbf16, #tpu.memory_space<vmem>>, vector<1x8x8xbf16>
    %118 = vector.shape_cast %117 : vector<1x8x8xbf16> to vector<8x8xbf16>
    %cst_54 = arith.constant dense<0.000000e+00> : vector<16x8xf32>
    %119 = tpu.matmul %116, %118, %cst_54 {dimension_numbers = #tpu.dot_dimension_numbers<[1], [0], [0], [1], [0, 0, 1, 1], [], []>} : vector<16x8xbf16>, vector<8x8xbf16>, vector<16x8xf32> -> vector<16x8xf32>
    %120 = arith.addf %109, %119 : vector<16x8xf32>
    %121 = vector.extract_strided_slice %114 {offsets = [0, 8], sizes = [16, 8], strides = [1, 1]} : vector<16x32xf32> to vector<16x8xf32>
    %122 = arith.truncf %121 : vector<16x8xf32> to vector<16x8xbf16>
    %c1_55 = arith.constant 1 : index
    %c0_56 = arith.constant 0 : index
    %c0_57 = arith.constant 0 : index
    %123 = vector.load %arg4[%c1_55, %c0_56, %c0_57] : memref<36x8x8xbf16, #tpu.memory_space<vmem>>, vector<1x8x8xbf16>
    %124 = vector.shape_cast %123 : vector<1x8x8xbf16> to vector<8x8xbf16>
    %cst_58 = arith.constant dense<0.000000e+00> : vector<16x8xf32>
    %125 = tpu.matmul %122, %124, %cst_58 {dimension_numbers = #tpu.dot_dimension_numbers<[1], [0], [0], [1], [0, 0, 1, 1], [], []>} : vector<16x8xbf16>, vector<8x8xbf16>, vector<16x8xf32> -> vector<16x8xf32>
    %126 = arith.addf %110, %125 : vector<16x8xf32>
    %127 = vector.extract_strided_slice %114 {offsets = [0, 16], sizes = [16, 8], strides = [1, 1]} : vector<16x32xf32> to vector<16x8xf32>
    %128 = arith.truncf %127 : vector<16x8xf32> to vector<16x8xbf16>
    %c2_59 = arith.constant 2 : index
    %c0_60 = arith.constant 0 : index
    %c0_61 = arith.constant 0 : index
    %129 = vector.load %arg4[%c2_59, %c0_60, %c0_61] : memref<36x8x8xbf16, #tpu.memory_space<vmem>>, vector<1x8x8xbf16>
    %130 = vector.shape_cast %129 : vector<1x8x8xbf16> to vector<8x8xbf16>
    %cst_62 = arith.constant dense<0.000000e+00> : vector<16x8xf32>
    %131 = tpu.matmul %128, %130, %cst_62 {dimension_numbers = #tpu.dot_dimension_numbers<[1], [0], [0], [1], [0, 0, 1, 1], [], []>} : vector<16x8xbf16>, vector<8x8xbf16>, vector<16x8xf32> -> vector<16x8xf32>
    %132 = arith.addf %111, %131 : vector<16x8xf32>
    %133 = vector.extract_strided_slice %114 {offsets = [0, 24], sizes = [16, 8], strides = [1, 1]} : vector<16x32xf32> to vector<16x8xf32>
    %134 = arith.truncf %133 : vector<16x8xf32> to vector<16x8xbf16>
    %c3_63 = arith.constant 3 : index
    %c0_64 = arith.constant 0 : index
    %c0_65 = arith.constant 0 : index
    %135 = vector.load %arg4[%c3_63, %c0_64, %c0_65] : memref<36x8x8xbf16, #tpu.memory_space<vmem>>, vector<1x8x8xbf16>
    %136 = vector.shape_cast %135 : vector<1x8x8xbf16> to vector<8x8xbf16>
    %cst_66 = arith.constant dense<0.000000e+00> : vector<16x8xf32>
    %137 = tpu.matmul %134, %136, %cst_66 {dimension_numbers = #tpu.dot_dimension_numbers<[1], [0], [0], [1], [0, 0, 1, 1], [], []>} : vector<16x8xbf16>, vector<8x8xbf16>, vector<16x8xf32> -> vector<16x8xf32>
    %138 = arith.addf %112, %137 : vector<16x8xf32>
    %139 = vector.extract_strided_slice %108 {offsets = [0, 1, 0], sizes = [2, 8, 32], strides = [1, 1, 1]} : vector<2x16x32xf32> to vector<2x8x32xf32>
    %140 = vector.shape_cast %139 : vector<2x8x32xf32> to vector<16x32xf32>
    %141 = vector.extract_strided_slice %140 {offsets = [0, 0], sizes = [16, 8], strides = [1, 1]} : vector<16x32xf32> to vector<16x8xf32>
    %142 = arith.truncf %141 : vector<16x8xf32> to vector<16x8xbf16>
    %c4_67 = arith.constant 4 : index
    %c0_68 = arith.constant 0 : index
    %c0_69 = arith.constant 0 : index
    %143 = vector.load %arg4[%c4_67, %c0_68, %c0_69] : memref<36x8x8xbf16, #tpu.memory_space<vmem>>, vector<1x8x8xbf16>
    %144 = vector.shape_cast %143 : vector<1x8x8xbf16> to vector<8x8xbf16>
    %cst_70 = arith.constant dense<0.000000e+00> : vector<16x8xf32>
    %145 = tpu.matmul %142, %144, %cst_70 {dimension_numbers = #tpu.dot_dimension_numbers<[1], [0], [0], [1], [0, 0, 1, 1], [], []>} : vector<16x8xbf16>, vector<8x8xbf16>, vector<16x8xf32> -> vector<16x8xf32>
    %146 = arith.addf %120, %145 : vector<16x8xf32>
    %147 = vector.extract_strided_slice %140 {offsets = [0, 8], sizes = [16, 8], strides = [1, 1]} : vector<16x32xf32> to vector<16x8xf32>
    %148 = arith.truncf %147 : vector<16x8xf32> to vector<16x8xbf16>
    %c5_71 = arith.constant 5 : index
    %c0_72 = arith.constant 0 : index
    %c0_73 = arith.constant 0 : index
    %149 = vector.load %arg4[%c5_71, %c0_72, %c0_73] : memref<36x8x8xbf16, #tpu.memory_space<vmem>>, vector<1x8x8xbf16>
    %150 = vector.shape_cast %149 : vector<1x8x8xbf16> to vector<8x8xbf16>
    %cst_74 = arith.constant dense<0.000000e+00> : vector<16x8xf32>
    %151 = tpu.matmul %148, %150, %cst_74 {dimension_numbers = #tpu.dot_dimension_numbers<[1], [0], [0], [1], [0, 0, 1, 1], [], []>} : vector<16x8xbf16>, vector<8x8xbf16>, vector<16x8xf32> -> vector<16x8xf32>
    %152 = arith.addf %126, %151 : vector<16x8xf32>
    %153 = vector.extract_strided_slice %140 {offsets = [0, 16], sizes = [16, 8], strides = [1, 1]} : vector<16x32xf32> to vector<16x8xf32>
    %154 = arith.truncf %153 : vector<16x8xf32> to vector<16x8xbf16>
    %c6_75 = arith.constant 6 : index
    %c0_76 = arith.constant 0 : index
    %c0_77 = arith.constant 0 : index
    %155 = vector.load %arg4[%c6_75, %c0_76, %c0_77] : memref<36x8x8xbf16, #tpu.memory_space<vmem>>, vector<1x8x8xbf16>
    %156 = vector.shape_cast %155 : vector<1x8x8xbf16> to vector<8x8xbf16>
    %cst_78 = arith.constant dense<0.000000e+00> : vector<16x8xf32>
    %157 = tpu.matmul %154, %156, %cst_78 {dimension_numbers = #tpu.dot_dimension_numbers<[1], [0], [0], [1], [0, 0, 1, 1], [], []>} : vector<16x8xbf16>, vector<8x8xbf16>, vector<16x8xf32> -> vector<16x8xf32>
    %158 = arith.addf %132, %157 : vector<16x8xf32>
    %159 = vector.extract_strided_slice %140 {offsets = [0, 24], sizes = [16, 8], strides = [1, 1]} : vector<16x32xf32> to vector<16x8xf32>
    %160 = arith.truncf %159 : vector<16x8xf32> to vector<16x8xbf16>
    %c7_79 = arith.constant 7 : index
    %c0_80 = arith.constant 0 : index
    %c0_81 = arith.constant 0 : index
    %161 = vector.load %arg4[%c7_79, %c0_80, %c0_81] : memref<36x8x8xbf16, #tpu.memory_space<vmem>>, vector<1x8x8xbf16>
    %162 = vector.shape_cast %161 : vector<1x8x8xbf16> to vector<8x8xbf16>
    %cst_82 = arith.constant dense<0.000000e+00> : vector<16x8xf32>
    %163 = tpu.matmul %160, %162, %cst_82 {dimension_numbers = #tpu.dot_dimension_numbers<[1], [0], [0], [1], [0, 0, 1, 1], [], []>} : vector<16x8xbf16>, vector<8x8xbf16>, vector<16x8xf32> -> vector<16x8xf32>
    %164 = arith.addf %138, %163 : vector<16x8xf32>
    %165 = vector.extract_strided_slice %108 {offsets = [0, 2, 0], sizes = [2, 8, 32], strides = [1, 1, 1]} : vector<2x16x32xf32> to vector<2x8x32xf32>
    %166 = vector.shape_cast %165 : vector<2x8x32xf32> to vector<16x32xf32>
    %167 = vector.extract_strided_slice %166 {offsets = [0, 0], sizes = [16, 8], strides = [1, 1]} : vector<16x32xf32> to vector<16x8xf32>
    %168 = arith.truncf %167 : vector<16x8xf32> to vector<16x8xbf16>
    %c8_83 = arith.constant 8 : index
    %c0_84 = arith.constant 0 : index
    %c0_85 = arith.constant 0 : index
    %169 = vector.load %arg4[%c8_83, %c0_84, %c0_85] : memref<36x8x8xbf16, #tpu.memory_space<vmem>>, vector<1x8x8xbf16>
    %170 = vector.shape_cast %169 : vector<1x8x8xbf16> to vector<8x8xbf16>
    %cst_86 = arith.constant dense<0.000000e+00> : vector<16x8xf32>
    %171 = tpu.matmul %168, %170, %cst_86 {dimension_numbers = #tpu.dot_dimension_numbers<[1], [0], [0], [1], [0, 0, 1, 1], [], []>} : vector<16x8xbf16>, vector<8x8xbf16>, vector<16x8xf32> -> vector<16x8xf32>
    %172 = arith.addf %146, %171 : vector<16x8xf32>
    %173 = vector.extract_strided_slice %166 {offsets = [0, 8], sizes = [16, 8], strides = [1, 1]} : vector<16x32xf32> to vector<16x8xf32>
    %174 = arith.truncf %173 : vector<16x8xf32> to vector<16x8xbf16>
    %c9 = arith.constant 9 : index
    %c0_87 = arith.constant 0 : index
    %c0_88 = arith.constant 0 : index
    %175 = vector.load %arg4[%c9, %c0_87, %c0_88] : memref<36x8x8xbf16, #tpu.memory_space<vmem>>, vector<1x8x8xbf16>
    %176 = vector.shape_cast %175 : vector<1x8x8xbf16> to vector<8x8xbf16>
    %cst_89 = arith.constant dense<0.000000e+00> : vector<16x8xf32>
    %177 = tpu.matmul %174, %176, %cst_89 {dimension_numbers = #tpu.dot_dimension_numbers<[1], [0], [0], [1], [0, 0, 1, 1], [], []>} : vector<16x8xbf16>, vector<8x8xbf16>, vector<16x8xf32> -> vector<16x8xf32>
    %178 = arith.addf %152, %177 : vector<16x8xf32>
    %179 = vector.extract_strided_slice %166 {offsets = [0, 16], sizes = [16, 8], strides = [1, 1]} : vector<16x32xf32> to vector<16x8xf32>
    %180 = arith.truncf %179 : vector<16x8xf32> to vector<16x8xbf16>
    %c10 = arith.constant 10 : index
    %c0_90 = arith.constant 0 : index
    %c0_91 = arith.constant 0 : index
    %181 = vector.load %arg4[%c10, %c0_90, %c0_91] : memref<36x8x8xbf16, #tpu.memory_space<vmem>>, vector<1x8x8xbf16>
    %182 = vector.shape_cast %181 : vector<1x8x8xbf16> to vector<8x8xbf16>
    %cst_92 = arith.constant dense<0.000000e+00> : vector<16x8xf32>
    %183 = tpu.matmul %180, %182, %cst_92 {dimension_numbers = #tpu.dot_dimension_numbers<[1], [0], [0], [1], [0, 0, 1, 1], [], []>} : vector<16x8xbf16>, vector<8x8xbf16>, vector<16x8xf32> -> vector<16x8xf32>
    %184 = arith.addf %158, %183 : vector<16x8xf32>
    %185 = vector.extract_strided_slice %166 {offsets = [0, 24], sizes = [16, 8], strides = [1, 1]} : vector<16x32xf32> to vector<16x8xf32>
    %186 = arith.truncf %185 : vector<16x8xf32> to vector<16x8xbf16>
    %c11 = arith.constant 11 : index
    %c0_93 = arith.constant 0 : index
    %c0_94 = arith.constant 0 : index
    %187 = vector.load %arg4[%c11, %c0_93, %c0_94] : memref<36x8x8xbf16, #tpu.memory_space<vmem>>, vector<1x8x8xbf16>
    %188 = vector.shape_cast %187 : vector<1x8x8xbf16> to vector<8x8xbf16>
    %cst_95 = arith.constant dense<0.000000e+00> : vector<16x8xf32>
    %189 = tpu.matmul %186, %188, %cst_95 {dimension_numbers = #tpu.dot_dimension_numbers<[1], [0], [0], [1], [0, 0, 1, 1], [], []>} : vector<16x8xbf16>, vector<8x8xbf16>, vector<16x8xf32> -> vector<16x8xf32>
    %190 = arith.addf %164, %189 : vector<16x8xf32>
    %191 = vector.extract_strided_slice %108 {offsets = [0, 3, 0], sizes = [2, 8, 32], strides = [1, 1, 1]} : vector<2x16x32xf32> to vector<2x8x32xf32>
    %192 = vector.shape_cast %191 : vector<2x8x32xf32> to vector<16x32xf32>
    %193 = vector.extract_strided_slice %192 {offsets = [0, 0], sizes = [16, 8], strides = [1, 1]} : vector<16x32xf32> to vector<16x8xf32>
    %194 = arith.truncf %193 : vector<16x8xf32> to vector<16x8xbf16>
    %c12 = arith.constant 12 : index
    %c0_96 = arith.constant 0 : index
    %c0_97 = arith.constant 0 : index
    %195 = vector.load %arg4[%c12, %c0_96, %c0_97] : memref<36x8x8xbf16, #tpu.memory_space<vmem>>, vector<1x8x8xbf16>
    %196 = vector.shape_cast %195 : vector<1x8x8xbf16> to vector<8x8xbf16>
    %cst_98 = arith.constant dense<0.000000e+00> : vector<16x8xf32>
    %197 = tpu.matmul %194, %196, %cst_98 {dimension_numbers = #tpu.dot_dimension_numbers<[1], [0], [0], [1], [0, 0, 1, 1], [], []>} : vector<16x8xbf16>, vector<8x8xbf16>, vector<16x8xf32> -> vector<16x8xf32>
    %198 = arith.addf %172, %197 : vector<16x8xf32>
    %199 = vector.extract_strided_slice %192 {offsets = [0, 8], sizes = [16, 8], strides = [1, 1]} : vector<16x32xf32> to vector<16x8xf32>
    %200 = arith.truncf %199 : vector<16x8xf32> to vector<16x8xbf16>
    %c13 = arith.constant 13 : index
    %c0_99 = arith.constant 0 : index
    %c0_100 = arith.constant 0 : index
    %201 = vector.load %arg4[%c13, %c0_99, %c0_100] : memref<36x8x8xbf16, #tpu.memory_space<vmem>>, vector<1x8x8xbf16>
    %202 = vector.shape_cast %201 : vector<1x8x8xbf16> to vector<8x8xbf16>
    %cst_101 = arith.constant dense<0.000000e+00> : vector<16x8xf32>
    %203 = tpu.matmul %200, %202, %cst_101 {dimension_numbers = #tpu.dot_dimension_numbers<[1], [0], [0], [1], [0, 0, 1, 1], [], []>} : vector<16x8xbf16>, vector<8x8xbf16>, vector<16x8xf32> -> vector<16x8xf32>
    %204 = arith.addf %178, %203 : vector<16x8xf32>
    %205 = vector.extract_strided_slice %192 {offsets = [0, 16], sizes = [16, 8], strides = [1, 1]} : vector<16x32xf32> to vector<16x8xf32>
    %206 = arith.truncf %205 : vector<16x8xf32> to vector<16x8xbf16>
    %c14 = arith.constant 14 : index
    %c0_102 = arith.constant 0 : index
    %c0_103 = arith.constant 0 : index
    %207 = vector.load %arg4[%c14, %c0_102, %c0_103] : memref<36x8x8xbf16, #tpu.memory_space<vmem>>, vector<1x8x8xbf16>
    %208 = vector.shape_cast %207 : vector<1x8x8xbf16> to vector<8x8xbf16>
    %cst_104 = arith.constant dense<0.000000e+00> : vector<16x8xf32>
    %209 = tpu.matmul %206, %208, %cst_104 {dimension_numbers = #tpu.dot_dimension_numbers<[1], [0], [0], [1], [0, 0, 1, 1], [], []>} : vector<16x8xbf16>, vector<8x8xbf16>, vector<16x8xf32> -> vector<16x8xf32>
    %210 = arith.addf %184, %209 : vector<16x8xf32>
    %211 = vector.extract_strided_slice %192 {offsets = [0, 24], sizes = [16, 8], strides = [1, 1]} : vector<16x32xf32> to vector<16x8xf32>
    %212 = arith.truncf %211 : vector<16x8xf32> to vector<16x8xbf16>
    %c15 = arith.constant 15 : index
    %c0_105 = arith.constant 0 : index
    %c0_106 = arith.constant 0 : index
    %213 = vector.load %arg4[%c15, %c0_105, %c0_106] : memref<36x8x8xbf16, #tpu.memory_space<vmem>>, vector<1x8x8xbf16>
    %214 = vector.shape_cast %213 : vector<1x8x8xbf16> to vector<8x8xbf16>
    %cst_107 = arith.constant dense<0.000000e+00> : vector<16x8xf32>
    %215 = tpu.matmul %212, %214, %cst_107 {dimension_numbers = #tpu.dot_dimension_numbers<[1], [0], [0], [1], [0, 0, 1, 1], [], []>} : vector<16x8xbf16>, vector<8x8xbf16>, vector<16x8xf32> -> vector<16x8xf32>
    %216 = arith.addf %190, %215 : vector<16x8xf32>
    %217 = vector.extract_strided_slice %108 {offsets = [0, 4, 0], sizes = [2, 8, 32], strides = [1, 1, 1]} : vector<2x16x32xf32> to vector<2x8x32xf32>
    %218 = vector.shape_cast %217 : vector<2x8x32xf32> to vector<16x32xf32>
    %219 = vector.extract_strided_slice %218 {offsets = [0, 0], sizes = [16, 8], strides = [1, 1]} : vector<16x32xf32> to vector<16x8xf32>
    %220 = arith.truncf %219 : vector<16x8xf32> to vector<16x8xbf16>
    %c16 = arith.constant 16 : index
    %c0_108 = arith.constant 0 : index
    %c0_109 = arith.constant 0 : index
    %221 = vector.load %arg4[%c16, %c0_108, %c0_109] : memref<36x8x8xbf16, #tpu.memory_space<vmem>>, vector<1x8x8xbf16>
    %222 = vector.shape_cast %221 : vector<1x8x8xbf16> to vector<8x8xbf16>
    %cst_110 = arith.constant dense<0.000000e+00> : vector<16x8xf32>
    %223 = tpu.matmul %220, %222, %cst_110 {dimension_numbers = #tpu.dot_dimension_numbers<[1], [0], [0], [1], [0, 0, 1, 1], [], []>} : vector<16x8xbf16>, vector<8x8xbf16>, vector<16x8xf32> -> vector<16x8xf32>
    %224 = arith.addf %198, %223 : vector<16x8xf32>
    %225 = vector.extract_strided_slice %218 {offsets = [0, 8], sizes = [16, 8], strides = [1, 1]} : vector<16x32xf32> to vector<16x8xf32>
    %226 = arith.truncf %225 : vector<16x8xf32> to vector<16x8xbf16>
    %c17 = arith.constant 17 : index
    %c0_111 = arith.constant 0 : index
    %c0_112 = arith.constant 0 : index
    %227 = vector.load %arg4[%c17, %c0_111, %c0_112] : memref<36x8x8xbf16, #tpu.memory_space<vmem>>, vector<1x8x8xbf16>
    %228 = vector.shape_cast %227 : vector<1x8x8xbf16> to vector<8x8xbf16>
    %cst_113 = arith.constant dense<0.000000e+00> : vector<16x8xf32>
    %229 = tpu.matmul %226, %228, %cst_113 {dimension_numbers = #tpu.dot_dimension_numbers<[1], [0], [0], [1], [0, 0, 1, 1], [], []>} : vector<16x8xbf16>, vector<8x8xbf16>, vector<16x8xf32> -> vector<16x8xf32>
    %230 = arith.addf %204, %229 : vector<16x8xf32>
    %231 = vector.extract_strided_slice %218 {offsets = [0, 16], sizes = [16, 8], strides = [1, 1]} : vector<16x32xf32> to vector<16x8xf32>
    %232 = arith.truncf %231 : vector<16x8xf32> to vector<16x8xbf16>
    %c18 = arith.constant 18 : index
    %c0_114 = arith.constant 0 : index
    %c0_115 = arith.constant 0 : index
    %233 = vector.load %arg4[%c18, %c0_114, %c0_115] : memref<36x8x8xbf16, #tpu.memory_space<vmem>>, vector<1x8x8xbf16>
    %234 = vector.shape_cast %233 : vector<1x8x8xbf16> to vector<8x8xbf16>
    %cst_116 = arith.constant dense<0.000000e+00> : vector<16x8xf32>
    %235 = tpu.matmul %232, %234, %cst_116 {dimension_numbers = #tpu.dot_dimension_numbers<[1], [0], [0], [1], [0, 0, 1, 1], [], []>} : vector<16x8xbf16>, vector<8x8xbf16>, vector<16x8xf32> -> vector<16x8xf32>
    %236 = arith.addf %210, %235 : vector<16x8xf32>
    %237 = vector.extract_strided_slice %218 {offsets = [0, 24], sizes = [16, 8], strides = [1, 1]} : vector<16x32xf32> to vector<16x8xf32>
    %238 = arith.truncf %237 : vector<16x8xf32> to vector<16x8xbf16>
    %c19 = arith.constant 19 : index
    %c0_117 = arith.constant 0 : index
    %c0_118 = arith.constant 0 : index
    %239 = vector.load %arg4[%c19, %c0_117, %c0_118] : memref<36x8x8xbf16, #tpu.memory_space<vmem>>, vector<1x8x8xbf16>
    %240 = vector.shape_cast %239 : vector<1x8x8xbf16> to vector<8x8xbf16>
    %cst_119 = arith.constant dense<0.000000e+00> : vector<16x8xf32>
    %241 = tpu.matmul %238, %240, %cst_119 {dimension_numbers = #tpu.dot_dimension_numbers<[1], [0], [0], [1], [0, 0, 1, 1], [], []>} : vector<16x8xbf16>, vector<8x8xbf16>, vector<16x8xf32> -> vector<16x8xf32>
    %242 = arith.addf %216, %241 : vector<16x8xf32>
    %243 = vector.extract_strided_slice %108 {offsets = [0, 5, 0], sizes = [2, 8, 32], strides = [1, 1, 1]} : vector<2x16x32xf32> to vector<2x8x32xf32>
    %244 = vector.shape_cast %243 : vector<2x8x32xf32> to vector<16x32xf32>
    %245 = vector.extract_strided_slice %244 {offsets = [0, 0], sizes = [16, 8], strides = [1, 1]} : vector<16x32xf32> to vector<16x8xf32>
    %246 = arith.truncf %245 : vector<16x8xf32> to vector<16x8xbf16>
    %c20 = arith.constant 20 : index
    %c0_120 = arith.constant 0 : index
    %c0_121 = arith.constant 0 : index
    %247 = vector.load %arg4[%c20, %c0_120, %c0_121] : memref<36x8x8xbf16, #tpu.memory_space<vmem>>, vector<1x8x8xbf16>
    %248 = vector.shape_cast %247 : vector<1x8x8xbf16> to vector<8x8xbf16>
    %cst_122 = arith.constant dense<0.000000e+00> : vector<16x8xf32>
    %249 = tpu.matmul %246, %248, %cst_122 {dimension_numbers = #tpu.dot_dimension_numbers<[1], [0], [0], [1], [0, 0, 1, 1], [], []>} : vector<16x8xbf16>, vector<8x8xbf16>, vector<16x8xf32> -> vector<16x8xf32>
    %250 = arith.addf %224, %249 : vector<16x8xf32>
    %251 = vector.extract_strided_slice %244 {offsets = [0, 8], sizes = [16, 8], strides = [1, 1]} : vector<16x32xf32> to vector<16x8xf32>
    %252 = arith.truncf %251 : vector<16x8xf32> to vector<16x8xbf16>
    %c21 = arith.constant 21 : index
    %c0_123 = arith.constant 0 : index
    %c0_124 = arith.constant 0 : index
    %253 = vector.load %arg4[%c21, %c0_123, %c0_124] : memref<36x8x8xbf16, #tpu.memory_space<vmem>>, vector<1x8x8xbf16>
    %254 = vector.shape_cast %253 : vector<1x8x8xbf16> to vector<8x8xbf16>
    %cst_125 = arith.constant dense<0.000000e+00> : vector<16x8xf32>
    %255 = tpu.matmul %252, %254, %cst_125 {dimension_numbers = #tpu.dot_dimension_numbers<[1], [0], [0], [1], [0, 0, 1, 1], [], []>} : vector<16x8xbf16>, vector<8x8xbf16>, vector<16x8xf32> -> vector<16x8xf32>
    %256 = arith.addf %230, %255 : vector<16x8xf32>
    %257 = vector.extract_strided_slice %244 {offsets = [0, 16], sizes = [16, 8], strides = [1, 1]} : vector<16x32xf32> to vector<16x8xf32>
    %258 = arith.truncf %257 : vector<16x8xf32> to vector<16x8xbf16>
    %c22 = arith.constant 22 : index
    %c0_126 = arith.constant 0 : index
    %c0_127 = arith.constant 0 : index
    %259 = vector.load %arg4[%c22, %c0_126, %c0_127] : memref<36x8x8xbf16, #tpu.memory_space<vmem>>, vector<1x8x8xbf16>
    %260 = vector.shape_cast %259 : vector<1x8x8xbf16> to vector<8x8xbf16>
    %cst_128 = arith.constant dense<0.000000e+00> : vector<16x8xf32>
    %261 = tpu.matmul %258, %260, %cst_128 {dimension_numbers = #tpu.dot_dimension_numbers<[1], [0], [0], [1], [0, 0, 1, 1], [], []>} : vector<16x8xbf16>, vector<8x8xbf16>, vector<16x8xf32> -> vector<16x8xf32>
    %262 = arith.addf %236, %261 : vector<16x8xf32>
    %263 = vector.extract_strided_slice %244 {offsets = [0, 24], sizes = [16, 8], strides = [1, 1]} : vector<16x32xf32> to vector<16x8xf32>
    %264 = arith.truncf %263 : vector<16x8xf32> to vector<16x8xbf16>
    %c23 = arith.constant 23 : index
    %c0_129 = arith.constant 0 : index
    %c0_130 = arith.constant 0 : index
    %265 = vector.load %arg4[%c23, %c0_129, %c0_130] : memref<36x8x8xbf16, #tpu.memory_space<vmem>>, vector<1x8x8xbf16>
    %266 = vector.shape_cast %265 : vector<1x8x8xbf16> to vector<8x8xbf16>
    %cst_131 = arith.constant dense<0.000000e+00> : vector<16x8xf32>
    %267 = tpu.matmul %264, %266, %cst_131 {dimension_numbers = #tpu.dot_dimension_numbers<[1], [0], [0], [1], [0, 0, 1, 1], [], []>} : vector<16x8xbf16>, vector<8x8xbf16>, vector<16x8xf32> -> vector<16x8xf32>
    %268 = arith.addf %242, %267 : vector<16x8xf32>
    %269 = vector.extract_strided_slice %108 {offsets = [0, 6, 0], sizes = [2, 8, 32], strides = [1, 1, 1]} : vector<2x16x32xf32> to vector<2x8x32xf32>
    %270 = vector.shape_cast %269 : vector<2x8x32xf32> to vector<16x32xf32>
    %271 = vector.extract_strided_slice %270 {offsets = [0, 0], sizes = [16, 8], strides = [1, 1]} : vector<16x32xf32> to vector<16x8xf32>
    %272 = arith.truncf %271 : vector<16x8xf32> to vector<16x8xbf16>
    %c24 = arith.constant 24 : index
    %c0_132 = arith.constant 0 : index
    %c0_133 = arith.constant 0 : index
    %273 = vector.load %arg4[%c24, %c0_132, %c0_133] : memref<36x8x8xbf16, #tpu.memory_space<vmem>>, vector<1x8x8xbf16>
    %274 = vector.shape_cast %273 : vector<1x8x8xbf16> to vector<8x8xbf16>
    %cst_134 = arith.constant dense<0.000000e+00> : vector<16x8xf32>
    %275 = tpu.matmul %272, %274, %cst_134 {dimension_numbers = #tpu.dot_dimension_numbers<[1], [0], [0], [1], [0, 0, 1, 1], [], []>} : vector<16x8xbf16>, vector<8x8xbf16>, vector<16x8xf32> -> vector<16x8xf32>
    %276 = arith.addf %250, %275 : vector<16x8xf32>
    %277 = vector.extract_strided_slice %270 {offsets = [0, 8], sizes = [16, 8], strides = [1, 1]} : vector<16x32xf32> to vector<16x8xf32>
    %278 = arith.truncf %277 : vector<16x8xf32> to vector<16x8xbf16>
    %c25 = arith.constant 25 : index
    %c0_135 = arith.constant 0 : index
    %c0_136 = arith.constant 0 : index
    %279 = vector.load %arg4[%c25, %c0_135, %c0_136] : memref<36x8x8xbf16, #tpu.memory_space<vmem>>, vector<1x8x8xbf16>
    %280 = vector.shape_cast %279 : vector<1x8x8xbf16> to vector<8x8xbf16>
    %cst_137 = arith.constant dense<0.000000e+00> : vector<16x8xf32>
    %281 = tpu.matmul %278, %280, %cst_137 {dimension_numbers = #tpu.dot_dimension_numbers<[1], [0], [0], [1], [0, 0, 1, 1], [], []>} : vector<16x8xbf16>, vector<8x8xbf16>, vector<16x8xf32> -> vector<16x8xf32>
    %282 = arith.addf %256, %281 : vector<16x8xf32>
    %283 = vector.extract_strided_slice %270 {offsets = [0, 16], sizes = [16, 8], strides = [1, 1]} : vector<16x32xf32> to vector<16x8xf32>
    %284 = arith.truncf %283 : vector<16x8xf32> to vector<16x8xbf16>
    %c26 = arith.constant 26 : index
    %c0_138 = arith.constant 0 : index
    %c0_139 = arith.constant 0 : index
    %285 = vector.load %arg4[%c26, %c0_138, %c0_139] : memref<36x8x8xbf16, #tpu.memory_space<vmem>>, vector<1x8x8xbf16>
    %286 = vector.shape_cast %285 : vector<1x8x8xbf16> to vector<8x8xbf16>
    %cst_140 = arith.constant dense<0.000000e+00> : vector<16x8xf32>
    %287 = tpu.matmul %284, %286, %cst_140 {dimension_numbers = #tpu.dot_dimension_numbers<[1], [0], [0], [1], [0, 0, 1, 1], [], []>} : vector<16x8xbf16>, vector<8x8xbf16>, vector<16x8xf32> -> vector<16x8xf32>
    %288 = arith.addf %262, %287 : vector<16x8xf32>
    %289 = vector.extract_strided_slice %270 {offsets = [0, 24], sizes = [16, 8], strides = [1, 1]} : vector<16x32xf32> to vector<16x8xf32>
    %290 = arith.truncf %289 : vector<16x8xf32> to vector<16x8xbf16>
    %c27 = arith.constant 27 : index
    %c0_141 = arith.constant 0 : index
    %c0_142 = arith.constant 0 : index
    %291 = vector.load %arg4[%c27, %c0_141, %c0_142] : memref<36x8x8xbf16, #tpu.memory_space<vmem>>, vector<1x8x8xbf16>
    %292 = vector.shape_cast %291 : vector<1x8x8xbf16> to vector<8x8xbf16>
    %cst_143 = arith.constant dense<0.000000e+00> : vector<16x8xf32>
    %293 = tpu.matmul %290, %292, %cst_143 {dimension_numbers = #tpu.dot_dimension_numbers<[1], [0], [0], [1], [0, 0, 1, 1], [], []>} : vector<16x8xbf16>, vector<8x8xbf16>, vector<16x8xf32> -> vector<16x8xf32>
    %294 = arith.addf %268, %293 : vector<16x8xf32>
    %295 = vector.extract_strided_slice %108 {offsets = [0, 7, 0], sizes = [2, 8, 32], strides = [1, 1, 1]} : vector<2x16x32xf32> to vector<2x8x32xf32>
    %296 = vector.shape_cast %295 : vector<2x8x32xf32> to vector<16x32xf32>
    %297 = vector.extract_strided_slice %296 {offsets = [0, 0], sizes = [16, 8], strides = [1, 1]} : vector<16x32xf32> to vector<16x8xf32>
    %298 = arith.truncf %297 : vector<16x8xf32> to vector<16x8xbf16>
    %c28 = arith.constant 28 : index
    %c0_144 = arith.constant 0 : index
    %c0_145 = arith.constant 0 : index
    %299 = vector.load %arg4[%c28, %c0_144, %c0_145] : memref<36x8x8xbf16, #tpu.memory_space<vmem>>, vector<1x8x8xbf16>
    %300 = vector.shape_cast %299 : vector<1x8x8xbf16> to vector<8x8xbf16>
    %cst_146 = arith.constant dense<0.000000e+00> : vector<16x8xf32>
    %301 = tpu.matmul %298, %300, %cst_146 {dimension_numbers = #tpu.dot_dimension_numbers<[1], [0], [0], [1], [0, 0, 1, 1], [], []>} : vector<16x8xbf16>, vector<8x8xbf16>, vector<16x8xf32> -> vector<16x8xf32>
    %302 = arith.addf %276, %301 : vector<16x8xf32>
    %303 = vector.extract_strided_slice %296 {offsets = [0, 8], sizes = [16, 8], strides = [1, 1]} : vector<16x32xf32> to vector<16x8xf32>
    %304 = arith.truncf %303 : vector<16x8xf32> to vector<16x8xbf16>
    %c29 = arith.constant 29 : index
    %c0_147 = arith.constant 0 : index
    %c0_148 = arith.constant 0 : index
    %305 = vector.load %arg4[%c29, %c0_147, %c0_148] : memref<36x8x8xbf16, #tpu.memory_space<vmem>>, vector<1x8x8xbf16>
    %306 = vector.shape_cast %305 : vector<1x8x8xbf16> to vector<8x8xbf16>
    %cst_149 = arith.constant dense<0.000000e+00> : vector<16x8xf32>
    %307 = tpu.matmul %304, %306, %cst_149 {dimension_numbers = #tpu.dot_dimension_numbers<[1], [0], [0], [1], [0, 0, 1, 1], [], []>} : vector<16x8xbf16>, vector<8x8xbf16>, vector<16x8xf32> -> vector<16x8xf32>
    %308 = arith.addf %282, %307 : vector<16x8xf32>
    %309 = vector.extract_strided_slice %296 {offsets = [0, 16], sizes = [16, 8], strides = [1, 1]} : vector<16x32xf32> to vector<16x8xf32>
    %310 = arith.truncf %309 : vector<16x8xf32> to vector<16x8xbf16>
    %c30 = arith.constant 30 : index
    %c0_150 = arith.constant 0 : index
    %c0_151 = arith.constant 0 : index
    %311 = vector.load %arg4[%c30, %c0_150, %c0_151] : memref<36x8x8xbf16, #tpu.memory_space<vmem>>, vector<1x8x8xbf16>
    %312 = vector.shape_cast %311 : vector<1x8x8xbf16> to vector<8x8xbf16>
    %cst_152 = arith.constant dense<0.000000e+00> : vector<16x8xf32>
    %313 = tpu.matmul %310, %312, %cst_152 {dimension_numbers = #tpu.dot_dimension_numbers<[1], [0], [0], [1], [0, 0, 1, 1], [], []>} : vector<16x8xbf16>, vector<8x8xbf16>, vector<16x8xf32> -> vector<16x8xf32>
    %314 = arith.addf %288, %313 : vector<16x8xf32>
    %315 = vector.extract_strided_slice %296 {offsets = [0, 24], sizes = [16, 8], strides = [1, 1]} : vector<16x32xf32> to vector<16x8xf32>
    %316 = arith.truncf %315 : vector<16x8xf32> to vector<16x8xbf16>
    %c31 = arith.constant 31 : index
    %c0_153 = arith.constant 0 : index
    %c0_154 = arith.constant 0 : index
    %317 = vector.load %arg4[%c31, %c0_153, %c0_154] : memref<36x8x8xbf16, #tpu.memory_space<vmem>>, vector<1x8x8xbf16>
    %318 = vector.shape_cast %317 : vector<1x8x8xbf16> to vector<8x8xbf16>
    %cst_155 = arith.constant dense<0.000000e+00> : vector<16x8xf32>
    %319 = tpu.matmul %316, %318, %cst_155 {dimension_numbers = #tpu.dot_dimension_numbers<[1], [0], [0], [1], [0, 0, 1, 1], [], []>} : vector<16x8xbf16>, vector<8x8xbf16>, vector<16x8xf32> -> vector<16x8xf32>
    %320 = arith.addf %294, %319 : vector<16x8xf32>
    %321 = vector.extract_strided_slice %108 {offsets = [0, 8, 0], sizes = [2, 8, 32], strides = [1, 1, 1]} : vector<2x16x32xf32> to vector<2x8x32xf32>
    %322 = vector.shape_cast %321 : vector<2x8x32xf32> to vector<16x32xf32>
    %323 = vector.extract_strided_slice %322 {offsets = [0, 0], sizes = [16, 8], strides = [1, 1]} : vector<16x32xf32> to vector<16x8xf32>
    %324 = arith.truncf %323 : vector<16x8xf32> to vector<16x8xbf16>
    %c32 = arith.constant 32 : index
    %c0_156 = arith.constant 0 : index
    %c0_157 = arith.constant 0 : index
    %325 = vector.load %arg4[%c32, %c0_156, %c0_157] : memref<36x8x8xbf16, #tpu.memory_space<vmem>>, vector<1x8x8xbf16>
    %326 = vector.shape_cast %325 : vector<1x8x8xbf16> to vector<8x8xbf16>
    %cst_158 = arith.constant dense<0.000000e+00> : vector<16x8xf32>
    %327 = tpu.matmul %324, %326, %cst_158 {dimension_numbers = #tpu.dot_dimension_numbers<[1], [0], [0], [1], [0, 0, 1, 1], [], []>} : vector<16x8xbf16>, vector<8x8xbf16>, vector<16x8xf32> -> vector<16x8xf32>
    %328 = arith.addf %302, %327 : vector<16x8xf32>
    %329 = vector.extract_strided_slice %322 {offsets = [0, 8], sizes = [16, 8], strides = [1, 1]} : vector<16x32xf32> to vector<16x8xf32>
    %330 = arith.truncf %329 : vector<16x8xf32> to vector<16x8xbf16>
    %c33 = arith.constant 33 : index
    %c0_159 = arith.constant 0 : index
    %c0_160 = arith.constant 0 : index
    %331 = vector.load %arg4[%c33, %c0_159, %c0_160] : memref<36x8x8xbf16, #tpu.memory_space<vmem>>, vector<1x8x8xbf16>
    %332 = vector.shape_cast %331 : vector<1x8x8xbf16> to vector<8x8xbf16>
    %cst_161 = arith.constant dense<0.000000e+00> : vector<16x8xf32>
    %333 = tpu.matmul %330, %332, %cst_161 {dimension_numbers = #tpu.dot_dimension_numbers<[1], [0], [0], [1], [0, 0, 1, 1], [], []>} : vector<16x8xbf16>, vector<8x8xbf16>, vector<16x8xf32> -> vector<16x8xf32>
    %334 = arith.addf %308, %333 : vector<16x8xf32>
    %335 = vector.extract_strided_slice %322 {offsets = [0, 16], sizes = [16, 8], strides = [1, 1]} : vector<16x32xf32> to vector<16x8xf32>
    %336 = arith.truncf %335 : vector<16x8xf32> to vector<16x8xbf16>
    %c34 = arith.constant 34 : index
    %c0_162 = arith.constant 0 : index
    %c0_163 = arith.constant 0 : index
    %337 = vector.load %arg4[%c34, %c0_162, %c0_163] : memref<36x8x8xbf16, #tpu.memory_space<vmem>>, vector<1x8x8xbf16>
    %338 = vector.shape_cast %337 : vector<1x8x8xbf16> to vector<8x8xbf16>
    %cst_164 = arith.constant dense<0.000000e+00> : vector<16x8xf32>
    %339 = tpu.matmul %336, %338, %cst_164 {dimension_numbers = #tpu.dot_dimension_numbers<[1], [0], [0], [1], [0, 0, 1, 1], [], []>} : vector<16x8xbf16>, vector<8x8xbf16>, vector<16x8xf32> -> vector<16x8xf32>
    %340 = arith.addf %314, %339 : vector<16x8xf32>
    %341 = vector.extract_strided_slice %322 {offsets = [0, 24], sizes = [16, 8], strides = [1, 1]} : vector<16x32xf32> to vector<16x8xf32>
    %342 = arith.truncf %341 : vector<16x8xf32> to vector<16x8xbf16>
    %c35 = arith.constant 35 : index
    %c0_165 = arith.constant 0 : index
    %c0_166 = arith.constant 0 : index
    %343 = vector.load %arg4[%c35, %c0_165, %c0_166] : memref<36x8x8xbf16, #tpu.memory_space<vmem>>, vector<1x8x8xbf16>
    %344 = vector.shape_cast %343 : vector<1x8x8xbf16> to vector<8x8xbf16>
    %cst_167 = arith.constant dense<0.000000e+00> : vector<16x8xf32>
    %345 = tpu.matmul %342, %344, %cst_167 {dimension_numbers = #tpu.dot_dimension_numbers<[1], [0], [0], [1], [0, 0, 1, 1], [], []>} : vector<16x8xbf16>, vector<8x8xbf16>, vector<16x8xf32> -> vector<16x8xf32>
    %346 = arith.addf %320, %345 : vector<16x8xf32>
    %347 = tpu.concatenate %328, %334, %340, %346 in 1 : vector<16x8xf32>, vector<16x8xf32>, vector<16x8xf32>, vector<16x8xf32> -> vector<16x32xf32>
    %c2_168 = arith.constant 2 : index
    %c0_169 = arith.constant 0 : index
    %348 = vector.load %arg3[%c2_168, %c0_169] : memref<5x32xf32, #tpu.memory_space<vmem>>, vector<1x32xf32>
    %349 = vector.broadcast %348 : vector<1x32xf32> to vector<16x32xf32>
    %350 = arith.addf %347, %349 : vector<16x32xf32>
    %c3_170 = arith.constant 3 : index
    %c0_171 = arith.constant 0 : index
    %351 = vector.load %arg3[%c3_170, %c0_171] : memref<5x32xf32, #tpu.memory_space<vmem>>, vector<1x32xf32>
    %c4_172 = arith.constant 4 : index
    %c0_173 = arith.constant 0 : index
    %352 = vector.load %arg3[%c4_172, %c0_173] : memref<5x32xf32, #tpu.memory_space<vmem>>, vector<1x32xf32>
    %cst_174 = arith.constant dense<0.000000e+00> : vector<32xf32>
    %353 = vector.multi_reduction <add>, %350, %cst_174 [0] : vector<16x32xf32> to vector<32xf32>
    %354 = vector.shape_cast %353 : vector<32xf32> to vector<1x32xf32>
    %cst_175 = arith.constant 6.250000e-02 : f32
    %355 = vector.broadcast %cst_175 : f32 to vector<1x32xf32>
    %356 = arith.mulf %354, %355 : vector<1x32xf32>
    %357 = arith.mulf %350, %350 : vector<16x32xf32>
    %cst_176 = arith.constant dense<0.000000e+00> : vector<32xf32>
    %358 = vector.multi_reduction <add>, %357, %cst_176 [0] : vector<16x32xf32> to vector<32xf32>
    %359 = vector.shape_cast %358 : vector<32xf32> to vector<1x32xf32>
    %cst_177 = arith.constant 6.250000e-02 : f32
    %360 = vector.broadcast %cst_177 : f32 to vector<1x32xf32>
    %361 = arith.mulf %359, %360 : vector<1x32xf32>
    %362 = arith.mulf %356, %356 : vector<1x32xf32>
    %363 = arith.subf %361, %362 : vector<1x32xf32>
    %cst_178 = arith.constant 0.000000e+00 : f32
    %364 = vector.broadcast %cst_178 : f32 to vector<1x32xf32>
    %365 = arith.maximumf %363, %364 : vector<1x32xf32>
    %cst_179 = arith.constant 9.99999974E-6 : f32
    %366 = vector.broadcast %cst_179 : f32 to vector<1x32xf32>
    %367 = arith.addf %365, %366 : vector<1x32xf32>
    %368 = math.rsqrt %367 : vector<1x32xf32>
    %369 = arith.mulf %368, %351 : vector<1x32xf32>
    %370 = arith.mulf %356, %369 : vector<1x32xf32>
    %371 = arith.subf %352, %370 : vector<1x32xf32>
    %372 = vector.broadcast %369 : vector<1x32xf32> to vector<16x32xf32>
    %373 = arith.mulf %350, %372 : vector<16x32xf32>
    %374 = vector.broadcast %371 : vector<1x32xf32> to vector<16x32xf32>
    %375 = arith.addf %373, %374 : vector<16x32xf32>
    %cst_180 = arith.constant 0.000000e+00 : f32
    %376 = vector.broadcast %cst_180 : f32 to vector<16x32xf32>
    %377 = arith.cmpf ogt, %375, %376 : vector<16x32xf32>
    %cst_181 = arith.constant 2.000000e-01 : f32
    %378 = vector.broadcast %cst_181 : f32 to vector<16x32xf32>
    %379 = arith.mulf %378, %375 : vector<16x32xf32>
    %380 = arith.select %377, %375, %379 : vector<16x32xi1>, vector<16x32xf32>
    %c3_182 = arith.constant 3 : index
    %c0_183 = arith.constant 0 : index
    %381 = vector.load %arg3[%c3_182, %c0_183] : memref<5x32xf32, #tpu.memory_space<vmem>>, vector<1x32xf32>
    %c4_184 = arith.constant 4 : index
    %c0_185 = arith.constant 0 : index
    %382 = vector.load %arg3[%c4_184, %c0_185] : memref<5x32xf32, #tpu.memory_space<vmem>>, vector<1x32xf32>
    %cst_186 = arith.constant dense<0.000000e+00> : vector<32xf32>
    %383 = vector.multi_reduction <add>, %380, %cst_186 [0] : vector<16x32xf32> to vector<32xf32>
    %384 = vector.shape_cast %383 : vector<32xf32> to vector<1x32xf32>
    %cst_187 = arith.constant 6.250000e-02 : f32
    %385 = vector.broadcast %cst_187 : f32 to vector<1x32xf32>
    %386 = arith.mulf %384, %385 : vector<1x32xf32>
    %387 = arith.mulf %380, %380 : vector<16x32xf32>
    %cst_188 = arith.constant dense<0.000000e+00> : vector<32xf32>
    %388 = vector.multi_reduction <add>, %387, %cst_188 [0] : vector<16x32xf32> to vector<32xf32>
    %389 = vector.shape_cast %388 : vector<32xf32> to vector<1x32xf32>
    %cst_189 = arith.constant 6.250000e-02 : f32
    %390 = vector.broadcast %cst_189 : f32 to vector<1x32xf32>
    %391 = arith.mulf %389, %390 : vector<1x32xf32>
    %392 = arith.mulf %386, %386 : vector<1x32xf32>
    %393 = arith.subf %391, %392 : vector<1x32xf32>
    %cst_190 = arith.constant 0.000000e+00 : f32
    %394 = vector.broadcast %cst_190 : f32 to vector<1x32xf32>
    %395 = arith.maximumf %393, %394 : vector<1x32xf32>
    %cst_191 = arith.constant 9.99999974E-6 : f32
    %396 = vector.broadcast %cst_191 : f32 to vector<1x32xf32>
    %397 = arith.addf %395, %396 : vector<1x32xf32>
    %398 = math.rsqrt %397 : vector<1x32xf32>
    %399 = arith.mulf %398, %381 : vector<1x32xf32>
    %400 = arith.mulf %386, %399 : vector<1x32xf32>
    %401 = arith.subf %382, %400 : vector<1x32xf32>
    %402 = vector.broadcast %399 : vector<1x32xf32> to vector<16x32xf32>
    %403 = arith.mulf %380, %402 : vector<16x32xf32>
    %404 = vector.broadcast %401 : vector<1x32xf32> to vector<16x32xf32>
    %405 = arith.addf %403, %404 : vector<16x32xf32>
    %406 = arith.truncf %405 : vector<16x32xf32> to vector<16x32xbf16>
    %c0_192 = arith.constant 0 : index
    %c0_193 = arith.constant 0 : index
    %407 = vector.load %arg5[%c0_192, %c0_193] : memref<32x256xbf16, #tpu.memory_space<vmem>>, vector<32x256xbf16>
    %cst_194 = arith.constant dense<0.000000e+00> : vector<16x256xf32>
    %408 = tpu.matmul %406, %407, %cst_194 {dimension_numbers = #tpu.dot_dimension_numbers<[1], [0], [0], [1], [0, 0, 1, 1], [], []>} : vector<16x32xbf16>, vector<32x256xbf16>, vector<16x256xf32> -> vector<16x256xf32>
    %c0_195 = arith.constant 0 : index
    %c0_196 = arith.constant 0 : index
    %409 = vector.load %arg8[%c0_195, %c0_196] : memref<2x256xf32, #tpu.memory_space<vmem>>, vector<1x256xf32>
    %410 = vector.broadcast %409 : vector<1x256xf32> to vector<16x256xf32>
    %411 = arith.addf %408, %410 : vector<16x256xf32>
    %cst_197 = arith.constant 0.000000e+00 : f32
    %412 = vector.broadcast %cst_197 : f32 to vector<16x256xf32>
    %413 = arith.maximumf %411, %412 : vector<16x256xf32>
    %414 = arith.truncf %413 : vector<16x256xf32> to vector<16x256xbf16>
    %c0_198 = arith.constant 0 : index
    %c0_199 = arith.constant 0 : index
    %415 = vector.load %arg6[%c0_198, %c0_199] : memref<256x256xbf16, #tpu.memory_space<vmem>>, vector<256x256xbf16>
    %cst_200 = arith.constant dense<0.000000e+00> : vector<16x256xf32>
    %416 = tpu.matmul %414, %415, %cst_200 {dimension_numbers = #tpu.dot_dimension_numbers<[1], [0], [0], [1], [0, 0, 1, 1], [], []>} : vector<16x256xbf16>, vector<256x256xbf16>, vector<16x256xf32> -> vector<16x256xf32>
    %c1_201 = arith.constant 1 : index
    %c0_202 = arith.constant 0 : index
    %417 = vector.load %arg8[%c1_201, %c0_202] : memref<2x256xf32, #tpu.memory_space<vmem>>, vector<1x256xf32>
    %418 = vector.broadcast %417 : vector<1x256xf32> to vector<16x256xf32>
    %419 = arith.addf %416, %418 : vector<16x256xf32>
    %cst_203 = arith.constant 0.000000e+00 : f32
    %420 = vector.broadcast %cst_203 : f32 to vector<16x256xf32>
    %421 = arith.maximumf %419, %420 : vector<16x256xf32>
    %422 = arith.truncf %421 : vector<16x256xf32> to vector<16x256xbf16>
    %c0_204 = arith.constant 0 : index
    %c0_205 = arith.constant 0 : index
    %423 = vector.load %arg7[%c0_204, %c0_205] : memref<256x8xbf16, #tpu.memory_space<vmem>>, vector<256x8xbf16>
    %cst_206 = arith.constant dense<0.000000e+00> : vector<16x8xf32>
    %424 = tpu.matmul %422, %423, %cst_206 {dimension_numbers = #tpu.dot_dimension_numbers<[1], [0], [0], [1], [0, 0, 1, 1], [], []>} : vector<16x256xbf16>, vector<256x8xbf16>, vector<16x8xf32> -> vector<16x8xf32>
    %c0_207 = arith.constant 0 : index
    %c0_208 = arith.constant 0 : index
    %425 = vector.load %arg9[%c0_207, %c0_208] : memref<3x8xf32, #tpu.memory_space<vmem>>, vector<1x8xf32>
    %426 = vector.broadcast %425 : vector<1x8xf32> to vector<16x8xf32>
    %427 = arith.addf %424, %426 : vector<16x8xf32>
    %428 = arith.addf %427, %75 : vector<16x8xf32>
    %cst_209 = arith.constant dense<0.000000e+00> : vector<16xf32>
    %429 = vector.multi_reduction <add>, %428, %cst_209 [1] : vector<16x8xf32> to vector<16xf32>
    %430 = vector.shape_cast %429 : vector<16xf32> to vector<16x1xf32>
    %cst_210 = arith.constant 8.000000e+00 : f32
    %431 = vector.broadcast %cst_210 : f32 to vector<16x1xf32>
    %432 = arith.divf %430, %431 : vector<16x1xf32>
    %433 = vector.broadcast %432 : vector<16x1xf32> to vector<16x8xf32>
    %434 = arith.subf %428, %433 : vector<16x8xf32>
    %435 = arith.mulf %434, %434 : vector<16x8xf32>
    %cst_211 = arith.constant dense<0.000000e+00> : vector<16xf32>
    %436 = vector.multi_reduction <add>, %435, %cst_211 [1] : vector<16x8xf32> to vector<16xf32>
    %437 = vector.shape_cast %436 : vector<16xf32> to vector<16x1xf32>
    %cst_212 = arith.constant 8.000000e+00 : f32
    %438 = vector.broadcast %cst_212 : f32 to vector<16x1xf32>
    %439 = arith.divf %437, %438 : vector<16x1xf32>
    %440 = vector.broadcast %432 : vector<16x1xf32> to vector<16x8xf32>
    %441 = arith.subf %428, %440 : vector<16x8xf32>
    %cst_213 = arith.constant 9.99999974E-6 : f32
    %442 = vector.broadcast %cst_213 : f32 to vector<16x1xf32>
    %443 = arith.addf %439, %442 : vector<16x1xf32>
    %444 = math.rsqrt %443 : vector<16x1xf32>
    %445 = vector.broadcast %444 : vector<16x1xf32> to vector<16x8xf32>
    %446 = arith.mulf %441, %445 : vector<16x8xf32>
    %c1_214 = arith.constant 1 : index
    %c0_215 = arith.constant 0 : index
    %447 = vector.load %arg9[%c1_214, %c0_215] : memref<3x8xf32, #tpu.memory_space<vmem>>, vector<1x8xf32>
    %448 = vector.broadcast %447 : vector<1x8xf32> to vector<16x8xf32>
    %449 = arith.mulf %446, %448 : vector<16x8xf32>
    %c2_216 = arith.constant 2 : index
    %c0_217 = arith.constant 0 : index
    %450 = vector.load %arg9[%c2_216, %c0_217] : memref<3x8xf32, #tpu.memory_space<vmem>>, vector<1x8xf32>
    %451 = vector.broadcast %450 : vector<1x8xf32> to vector<16x8xf32>
    %452 = arith.addf %449, %451 : vector<16x8xf32>
    %453 = vector.shape_cast %452 : vector<16x8xf32> to vector<2x8x8xf32>
    %454 = tpu.transpose %453, [0, 2, 1] : vector<2x8x8xf32> -> vector<2x8x8xf32>
    %c0_218 = arith.constant 0 : index
    %c0_219 = arith.constant 0 : index
    %c0_220 = arith.constant 0 : index
    %455 = vector.load %arg10[%c0_218, %c0_219, %c0_220] : memref<2x8x8xf32, #tpu.memory_space<vmem>>, vector<2x8x8xf32>
    tpu.vector_store %arg10[%c0_218, %c0_219, %c0_220], %454 {strides = array<i32>} : memref<2x8x8xf32, #tpu.memory_space<vmem>>, vector<2x8x8xf32>,
    return
  }
}

</mosaic_0001>

<llo_original>
// kernel: unet_block_forward.1
$region0: #{unet_block_forward.1}
  #allocation0 [shape = 'u32[]', space=smem, size = 0x4, offset = 0x4, fixed_abs, tag = 'smem constant byte address 0x4 - core index']
  #allocation1 [shape = 'u32[72,128]{1,0:T(1,128)}', space=vmem, size = 0x9000, scoped, tag = 'internal scratch']
  %s0 = inlined_call_operand.vmem [shape: f32[2,4,16], index: 0, kind: input, shape index: {}]
  %s1 = inlined_call_operand.vmem [shape: bf16[9,4,40], index: 1, kind: input, shape index: {}]
  %s2 = inlined_call_operand.hbm [shape: f32[1,40], index: 2, kind: input, shape index: {}]
  %s3 = inlined_call_operand.hbm [shape: f32[5,32], index: 3, kind: input, shape index: {}]
  %s4 = inlined_call_operand.vmem [shape: bf16[36,8,8], index: 4, kind: input, shape index: {}]
  %s5 = inlined_call_operand.vmem [shape: bf16[32,256], index: 5, kind: input, shape index: {}]
  %s6 = inlined_call_operand.vmem [shape: bf16[256,256], index: 6, kind: input, shape index: {}]
  %s7 = inlined_call_operand.vmem [shape: bf16[256,8], index: 7, kind: input, shape index: {}]
  %s8 = inlined_call_operand.hbm [shape: f32[2,256], index: 8, kind: input, shape index: {}]
  %s9 = inlined_call_operand.hbm [shape: f32[3,8], index: 9, kind: input, shape index: {}]
  %s10 = inlined_call_operand.hbm [shape: f32[2,8,8], index: 10, kind: output, shape index: {}]
  %s11 = sld [smem:[#allocation0]]
  $region66: #{unet_block_forward.1} parent=0
    _
  %s13 = ssub.s32 1, %s11
  %s14 = scalar_select 0, %s13, %s11
  $region1: #{unet_block_forward.1} parent=0
    #allocation2 [shape = 'u8[512]{0}', space=vmem, size = 0x400, scoped, tag = 'input window, operand 2, single buffered']
    #allocation3 [shape = 's32[1]{0}', space=sflag, size = 0x4, scoped, tag = 'scoped memory for unet_block_forward.1']
    #allocation4 [shape = 's32[1]{0}', space=sflag, size = 0x4, scoped, tag = 'scoped memory for unet_block_forward.1']
    #allocation5 [shape = 'u8[4096]{0}', space=vmem, size = 0x1000, scoped, tag = 'input window, operand 3, single buffered']
    #allocation6 [shape = 's32[1]{0}', space=sflag, size = 0x4, scoped, tag = 'scoped memory for unet_block_forward.1']
    #allocation7 [shape = 'u8[2048]{0}', space=vmem, size = 0x800, scoped, tag = 'input window, operand 8, single buffered']
    #allocation8 [shape = 'u8[2048]{0}', space=vmem, size = 0x800, scoped, tag = 'input window, operand 9, single buffered']
    #allocation9 [shape = 's32[1]{0}', space=sflag, size = 0x4, scoped, tag = 'scoped memory for unet_block_forward.1']
    #allocation10 [shape = 'u8[8192]{0}', space=vmem, size = 0x2000, scoped, tag = 'output window, operand 0, single buffered']
    %15 = vsyncpa [#allocation3], 0
    %16 = vsyncpa [#allocation6], 0
    %17 = vsyncpa [#allocation9], 0
    %18 = vsyncpa [#allocation4], 0
    // Predicated region
    $region2: #{unet_block_forward.1} parent=1 // pred_check
      _
    $region3: #{unet_block_forward.1} parent=1 // pred_check_branch
      %20 = sbr.rel (0) target = $region5
    $region4: #{unet_block_forward.1} parent=1 // pred_region
      _
    $region5: #{unet_block_forward.1} parent=1 // pred_fallthru
      _
    // Predicated region
    $region6: #{unet_block_forward.1} parent=1 // pred_check
      _
    $region7: #{unet_block_forward.1} parent=1 // pred_check_branch
      %22 = sbr.rel (0) target = $region9
    $region8: #{unet_block_forward.1} parent=1 // pred_region
      _
    $region9: #{unet_block_forward.1} parent=1 // pred_fallthru
      _
    // Predicated region
    $region10: #{unet_block_forward.1} parent=1 // pred_check
      _
    $region11: #{unet_block_forward.1} parent=1 // pred_check_branch
      %24 = sbr.rel (0) target = $region13
    $region12: #{unet_block_forward.1} parent=1 // pred_region
      %26 = vsyncadd [#allocation3], 0
      %s28 = sshll.u32 %s2, 4
      %s29 = int_to_ptr.hbm [resolvable:$true] %s28
      %s30 = sshll.u32 [#allocation2], 4
      %s31 = int_to_ptr.vmem [resolvable:$true] %s30
      %33 = dma.hbm_to_vmem [thread:$0]  %s29, 16, %s31, [#allocation3]
    $region13: #{unet_block_forward.1} parent=1 // pred_fallthru
      _
    // Predicated region
    $region14: #{unet_block_forward.1} parent=1 // pred_check
      _
    $region15: #{unet_block_forward.1} parent=1 // pred_check_branch
      %35 = sbr.rel (0) target = $region17
    $region16: #{unet_block_forward.1} parent=1 // pred_region
      %37 = vsyncadd [#allocation6], 0
      %s39 = sshll.u32 %s3, 4
      %s40 = int_to_ptr.hbm [resolvable:$true] %s39
      %s41 = sshll.u32 [#allocation5], 4
      %s42 = int_to_ptr.vmem [resolvable:$true] %s41
      %44 = dma.hbm_to_vmem [thread:$0]  %s40, 128, %s42, [#allocation6]
    $region17: #{unet_block_forward.1} parent=1 // pred_fallthru
      _
    // Predicated region
    $region18: #{unet_block_forward.1} parent=1 // pred_check
      _
    $region19: #{unet_block_forward.1} parent=1 // pred_check_branch
      %46 = sbr.rel (0) target = $region21
    $region20: #{unet_block_forward.1} parent=1 // pred_region
      _
    $region21: #{unet_block_forward.1} parent=1 // pred_fallthru
      _
    // Predicated region
    $region22: #{unet_block_forward.1} parent=1 // pred_check
      _
    $region23: #{unet_block_forward.1} parent=1 // pred_check_branch
      %48 = sbr.rel (0) target = $region25
    $region24: #{unet_block_forward.1} parent=1 // pred_region
      _
    $region25: #{unet_block_forward.1} parent=1 // pred_fallthru
      _
    // Predicated region
    $region26: #{unet_block_forward.1} parent=1 // pred_check
      _
    $region27: #{unet_block_forward.1} parent=1 // pred_check_branch
      %50 = sbr.rel (0) target = $region29
    $region28: #{unet_block_forward.1} parent=1 // pred_region
      _
    $region29: #{unet_block_forward.1} parent=1 // pred_fallthru
      _
    // Predicated region
    $region30: #{unet_block_forward.1} parent=1 // pred_check
      _
    $region31: #{unet_block_forward.1} parent=1 // pred_check_branch
      %52 = sbr.rel (0) target = $region33
    $region32: #{unet_block_forward.1} parent=1 // pred_region
      _
    $region33: #{unet_block_forward.1} parent=1 // pred_fallthru
      _
    // Predicated region
    $region34: #{unet_block_forward.1} parent=1 // pred_check
      _
    $region35: #{unet_block_forward.1} parent=1 // pred_check_branch
      %54 = sbr.rel (0) target = $region37
    $region36: #{unet_block_forward.1} parent=1 // pred_region
      %56 = vsyncadd [#allocation6], 0
      %s58 = sshll.u32 %s8, 4
      %s59 = int_to_ptr.hbm [resolvable:$true] %s58
      %s60 = sshll.u32 [#allocation7], 4
      %s61 = int_to_ptr.vmem [resolvable:$true] %s60
      %63 = dma.hbm_to_vmem [thread:$0]  %s59, 64, %s61, [#allocation6]
    $region37: #{unet_block_forward.1} parent=1 // pred_fallthru
      _
    // Predicated region
    $region38: #{unet_block_forward.1} parent=1 // pred_check
      _
    $region39: #{unet_block_forward.1} parent=1 // pred_check_branch
      %65 = sbr.rel (0) target = $region41
    $region40: #{unet_block_forward.1} parent=1 // pred_region
      %67 = vsyncadd [#allocation9], 0
      %s69 = sshll.u32 %s9, 4
      %s70 = int_to_ptr.hbm [resolvable:$true] %s69
      %s71 = sshll.u32 [#allocation8], 4
      %s72 = int_to_ptr.vmem [resolvable:$true] %s71
      %74 = dma.hbm_to_vmem [thread:$0]  %s70, 64, %s72, [#allocation9]
    $region41: #{unet_block_forward.1} parent=1 // pred_fallthru
      _
    // Predicated region
    $region42: #{unet_block_forward.1} parent=1 // pred_check
      _
    $region43: #{unet_block_forward.1} parent=1 // pred_check_branch
      %76 = sbr.rel (0) target = $region45
    $region44: #{unet_block_forward.1} parent=1 // pred_region
      %78 = dma.done [#allocation3], 16
    $region45: #{unet_block_forward.1} parent=1 // pred_fallthru
      _
    // Predicated region
    $region46: #{unet_block_forward.1} parent=1 // pred_check
      _
    $region47: #{unet_block_forward.1} parent=1 // pred_check_branch
      %80 = sbr.rel (0) target = $region49
    $region48: #{unet_block_forward.1} parent=1 // pred_region
      %82 = dma.done [#allocation6], 128
    $region49: #{unet_block_forward.1} parent=1 // pred_fallthru
      _
    // Predicated region
    $region50: #{unet_block_forward.1} parent=1 // pred_check
      _
    $region51: #{unet_block_forward.1} parent=1 // pred_check_branch
      %84 = sbr.rel (0) target = $region53
    $region52: #{unet_block_forward.1} parent=1 // pred_region
      %86 = dma.done [#allocation6], 64
    $region53: #{unet_block_forward.1} parent=1 // pred_fallthru
      _
    // Predicated region
    $region54: #{unet_block_forward.1} parent=1 // pred_check
      _
    $region55: #{unet_block_forward.1} parent=1 // pred_check_branch
      %88 = sbr.rel (0) target = $region57
    $region56: #{unet_block_forward.1} parent=1 // pred_region
      %90 = dma.done [#allocation9], 64
    $region57: #{unet_block_forward.1} parent=1 // pred_fallthru
      _
    %v92 = vld [vmem:[%s0] sm:$0xf]
    %v93 = vld [vmem:[%s0 + $0x4] sm:$0xf]
    %94 = vxpose.xlu0.b32.start [1/16] %v92, 128
    %95 = vxpose.xlu0.b32.cont [2/16] 0.0, 128
    %96 = vxpose.xlu0.b32.cont [3/16] 0.0, 128
    %97 = vxpose.xlu0.b32.cont [4/16] 0.0, 128
    %98 = vxpose.xlu0.b32.cont [5/16] 0.0, 128
    %99 = vxpose.xlu0.b32.cont [6/16] 0.0, 128
    %100 = vxpose.xlu0.b32.cont [7/16] 0.0, 128
    %101 = vxpose.xlu0.b32.cont [8/16] 0.0, 128
    %102 = vxpose.xlu0.b32.cont [9/16] 0.0, 128
    %103 = vxpose.xlu0.b32.cont [10/16] 0.0, 128
    %104 = vxpose.xlu0.b32.cont [11/16] 0.0, 128
    %105 = vxpose.xlu0.b32.cont [12/16] 0.0, 128
    %106 = vxpose.xlu0.b32.cont [13/16] 0.0, 128
    %107 = vxpose.xlu0.b32.cont [14/16] 0.0, 128
    %108 = vxpose.xlu0.b32.cont [15/16] 0.0, 128
    %109 = vxpose.xlu0.b32.end [16/16] 0.0, 128
    %v110 = vpop.trf.xlu0
    %v111 = vpop.trf.xlu0
    %v112 = vpop.trf.xlu0
    %v113 = vpop.trf.xlu0
    %v114 = vpop.trf.xlu0
    %v115 = vpop.trf.xlu0
    %v116 = vpop.trf.xlu0
    %v117 = vpop.trf.xlu0
    %v118 = vpop.trf.xlu0
    %v119 = vpop.trf.xlu0
    %v120 = vpop.trf.xlu0
    %v121 = vpop.trf.xlu0
    %v122 = vpop.trf.xlu0
    %v123 = vpop.trf.xlu0
    %v124 = vpop.trf.xlu0
    %v125 = vpop.trf.xlu0
    %126 = vxpose.xlu0.b32.start [1/16] %v93, 128
    %127 = vxpose.xlu0.b32.cont [2/16] 0.0, 128
    %128 = vxpose.xlu0.b32.cont [3/16] 0.0, 128
    %129 = vxpose.xlu0.b32.cont [4/16] 0.0, 128
    %130 = vxpose.xlu0.b32.cont [5/16] 0.0, 128
    %131 = vxpose.xlu0.b32.cont [6/16] 0.0, 128
    %132 = vxpose.xlu0.b32.cont [7/16] 0.0, 128
    %133 = vxpose.xlu0.b32.cont [8/16] 0.0, 128
    %134 = vxpose.xlu0.b32.cont [9/16] 0.0, 128
    %135 = vxpose.xlu0.b32.cont [10/16] 0.0, 128
    %136 = vxpose.xlu0.b32.cont [11/16] 0.0, 128
    %137 = vxpose.xlu0.b32.cont [12/16] 0.0, 128
    %138 = vxpose.xlu0.b32.cont [13/16] 0.0, 128
    %139 = vxpose.xlu0.b32.cont [14/16] 0.0, 128
    %140 = vxpose.xlu0.b32.cont [15/16] 0.0, 128
    %141 = vxpose.xlu0.b32.end [16/16] 0.0, 128
    %v142 = vpop.trf.xlu0
    %v143 = vpop.trf.xlu0
    %v144 = vpop.trf.xlu0
    %v145 = vpop.trf.xlu0
    %v146 = vpop.trf.xlu0
    %v147 = vpop.trf.xlu0
    %v148 = vpop.trf.xlu0
    %v149 = vpop.trf.xlu0
    %v150 = vpop.trf.xlu0
    %v151 = vpop.trf.xlu0
    %v152 = vpop.trf.xlu0
    %v153 = vpop.trf.xlu0
    %v154 = vpop.trf.xlu0
    %v155 = vpop.trf.xlu0
    %v156 = vpop.trf.xlu0
    %v157 = vpop.trf.xlu0
    %v162 = vrot.slane %v110, 2
    %v163 = vrot.slane %v110, 4
    %v164 = vrot.slane %v110, 6
    %v165 = vrot.slane %v111, 2
    %v166 = vrot.slane %v111, 4
    %v167 = vrot.slane %v111, 6
    %v168 = vrot.slane %v142, 2
    %v169 = vrot.slane %v142, 4
    %v170 = vrot.slane %v142, 6
    %v171 = vrot.slane %v143, 2
    %v172 = vrot.slane %v143, 4
    %v173 = vrot.slane %v143, 6
    %vm186 = vcmask 25600
    %v187 = vsel %vm186, %v110, -inf
    %v188 = vrot.slane %v187, 4
    %v189 = vmax.f32 %v187, %v188
    %v190 = vrot.slane %v189, 2
    %v191 = vmax.f32 %v189, %v190
    %v192 = vrot.slane %v191, 1
    %v193 = vmax.f32 %v191, %v192
    %v194 = vsel %vm186, %v162, -inf
    %v195 = vrot.slane %v194, 4
    %v196 = vmax.f32 %v194, %v195
    %v197 = vrot.slane %v196, 2
    %v198 = vmax.f32 %v196, %v197
    %v199 = vrot.slane %v198, 1
    %v200 = vmax.f32 %v198, %v199
    %v201 = vsel %vm186, %v163, -inf
    %v202 = vrot.slane %v201, 4
    %v203 = vmax.f32 %v201, %v202
    %v204 = vrot.slane %v203, 2
    %v205 = vmax.f32 %v203, %v204
    %v206 = vrot.slane %v205, 1
    %v207 = vmax.f32 %v205, %v206
    %v208 = vsel %vm186, %v164, -inf
    %v209 = vrot.slane %v208, 4
    %v210 = vmax.f32 %v208, %v209
    %v211 = vrot.slane %v210, 2
    %v212 = vmax.f32 %v210, %v211
    %v213 = vrot.slane %v212, 1
    %v214 = vmax.f32 %v212, %v213
    %v215 = vsel %vm186, %v111, -inf
    %v216 = vrot.slane %v215, 4
    %v217 = vmax.f32 %v215, %v216
    %v218 = vrot.slane %v217, 2
    %v219 = vmax.f32 %v217, %v218
    %v220 = vrot.slane %v219, 1
    %v221 = vmax.f32 %v219, %v220
    %v222 = vsel %vm186, %v165, -inf
    %v223 = vrot.slane %v222, 4
    %v224 = vmax.f32 %v222, %v223
    %v225 = vrot.slane %v224, 2
    %v226 = vmax.f32 %v224, %v225
    %v227 = vrot.slane %v226, 1
    %v228 = vmax.f32 %v226, %v227
    %v229 = vsel %vm186, %v166, -inf
    %v230 = vrot.slane %v229, 4
    %v231 = vmax.f32 %v229, %v230
    %v232 = vrot.slane %v231, 2
    %v233 = vmax.f32 %v231, %v232
    %v234 = vrot.slane %v233, 1
    %v235 = vmax.f32 %v233, %v234
    %v236 = vsel %vm186, %v167, -inf
    %v237 = vrot.slane %v236, 4
    %v238 = vmax.f32 %v236, %v237
    %v239 = vrot.slane %v238, 2
    %v240 = vmax.f32 %v238, %v239
    %v241 = vrot.slane %v240, 1
    %v242 = vmax.f32 %v240, %v241
    %v243 = vsel %vm186, %v142, -inf
    %v244 = vrot.slane %v243, 4
    %v245 = vmax.f32 %v243, %v244
    %v246 = vrot.slane %v245, 2
    %v247 = vmax.f32 %v245, %v246
    %v248 = vrot.slane %v247, 1
    %v249 = vmax.f32 %v247, %v248
    %v250 = vsel %vm186, %v168, -inf
    %v251 = vrot.slane %v250, 4
    %v252 = vmax.f32 %v250, %v251
    %v253 = vrot.slane %v252, 2
    %v254 = vmax.f32 %v252, %v253
    %v255 = vrot.slane %v254, 1
    %v256 = vmax.f32 %v254, %v255
    %v257 = vsel %vm186, %v169, -inf
    %v258 = vrot.slane %v257, 4
    %v259 = vmax.f32 %v257, %v258
    %v260 = vrot.slane %v259, 2
    %v261 = vmax.f32 %v259, %v260
    %v262 = vrot.slane %v261, 1
    %v263 = vmax.f32 %v261, %v262
    %v264 = vsel %vm186, %v170, -inf
    %v265 = vrot.slane %v264, 4
    %v266 = vmax.f32 %v264, %v265
    %v267 = vrot.slane %v266, 2
    %v268 = vmax.f32 %v266, %v267
    %v269 = vrot.slane %v268, 1
    %v270 = vmax.f32 %v268, %v269
    %v271 = vsel %vm186, %v143, -inf
    %v272 = vrot.slane %v271, 4
    %v273 = vmax.f32 %v271, %v272
    %v274 = vrot.slane %v273, 2
    %v275 = vmax.f32 %v273, %v274
    %v276 = vrot.slane %v275, 1
    %v277 = vmax.f32 %v275, %v276
    %v278 = vsel %vm186, %v171, -inf
    %v279 = vrot.slane %v278, 4
    %v280 = vmax.f32 %v278, %v279
    %v281 = vrot.slane %v280, 2
    %v282 = vmax.f32 %v280, %v281
    %v283 = vrot.slane %v282, 1
    %v284 = vmax.f32 %v282, %v283
    %v285 = vsel %vm186, %v172, -inf
    %v286 = vrot.slane %v285, 4
    %v287 = vmax.f32 %v285, %v286
    %v288 = vrot.slane %v287, 2
    %v289 = vmax.f32 %v287, %v288
    %v290 = vrot.slane %v289, 1
    %v291 = vmax.f32 %v289, %v290
    %v292 = vsel %vm186, %v173, -inf
    %v293 = vrot.slane %v292, 4
    %v294 = vmax.f32 %v292, %v293
    %v295 = vrot.slane %v294, 2
    %v296 = vmax.f32 %v294, %v295
    %v297 = vrot.slane %v296, 1
    %v298 = vmax.f32 %v296, %v297
    %vm315 = vcmask 1045509
    %v316 = vsel %vm315, %v200, %v193
    %vm317 = vcmask 1046534
    %v318 = vsel %vm317, %v207, %v316
    %vm319 = vcmask 1047559
    %v320 = vsel %vm319, %v214, %v318
    %vm321 = vcmask 1041409
    %v322 = vsel %vm321, %v228, %v221
    %vm323 = vcmask 1042434
    %v324 = vsel %vm323, %v235, %v322
    %vm325 = vcmask 1043459
    %v326 = vsel %vm325, %v242, %v324
    %v327 = vsel %vm315, %v256, %v249
    %v328 = vsel %vm317, %v263, %v327
    %v329 = vsel %vm319, %v270, %v328
    %v330 = vsel %vm321, %v284, %v277
    %v331 = vsel %vm323, %v291, %v330
    %v332 = vsel %vm325, %v298, %v331
    %vm337 = vcmask 1043456
    %v338 = vsel %vm337, 0.0, %v320
    %v339 = vsel %vm337, 0.0, %v329
    %v340 = vsel %vm337, %v326, 0.0
    %v341 = vsel %vm337, %v332, 0.0
    %v342 = vpack.c.bf16 %v339, %v338
    %v343 = vld [vmem:[%s1] sm:$0x3]
    %vm348 = vcmask 1046528
    %v349 = vrot.slane %v338, 1
    %v350 = vrot.slane %v340, 1
    %v351 = vsel %vm348, %v349, %v350
    %v352 = vrot.slane %v339, 1
    %v353 = vrot.slane %v341, 1
    %v354 = vsel %vm348, %v352, %v353
    %v357 = vpack.c.bf16 %v354, %v351
    %s358 = scalar_lea.vmem %s1, 2
    %v359 = vld [vmem:[%s358] sm:$0x3]
    %vm360 = vcmask 31744
    %v362 = vsel %vm360, %v357, 0
    %vm364 = vcmask 1041408
    %v366 = vsel %vm364, %v359, 0
    %368 = vmatpush.bf16.msra.mxu0 0
    %369 = vmatpush.bf16.msra.mxu0 0
    %370 = vmatpush.bf16.msra.mxu0 0
    %371 = vmatpush.bf16.msra.mxu0 0
    %372 = vmatpush.bf16.msra.mxu0 0
    %373 = vmatpush.bf16.msra.mxu0 0
    %374 = vmatpush.bf16.msra.mxu0 0
    %375 = vmatpush.bf16.msra.mxu0 %v366
    %376 = vmatmul.bf16.gmra.mxu0 %v362
    %v377 = vpop.f32.mrf.mxu0
    %v378 = vadd.f32 0.0, %v377
    %v379 = vpop.f32.mrf.mxu0
    %v380 = vadd.f32 0.0, %v379
    %381 = vdwg.mxu0
    %v383 = vsel %vm360, %v342, 0
    %v386 = vsel %vm364, %v343, 0
    %388 = vmatpush.bf16.msra.mxu0 0
    %389 = vmatpush.bf16.msra.mxu0 0
    %390 = vmatpush.bf16.msra.mxu0 0
    %391 = vmatpush.bf16.msra.mxu0 0
    %392 = vmatpush.bf16.msra.mxu0 0
    %393 = vmatpush.bf16.msra.mxu0 0
    %394 = vmatpush.bf16.msra.mxu0 0
    %395 = vmatpush.bf16.msra.mxu0 %v386
    %396 = vmatmul.bf16.gmra.mxu0 %v383
    %v397 = vpop.f32.mrf.mxu0
    %v398 = vadd.f32 %v378, %v397
    %v399 = vpop.f32.mrf.mxu0
    %v400 = vadd.f32 %v380, %v399
    %401 = vdwg.mxu0
    %vm402 = vcmask 1045504
    %v403 = vrot.slane %v338, 2
    %v404 = vrot.slane %v340, 2
    %v405 = vsel %vm402, %v403, %v404
    %v406 = vrot.slane %v339, 2
    %v407 = vrot.slane %v341, 2
    %v408 = vsel %vm402, %v406, %v407
    %v411 = vpack.c.bf16 %v408, %v405
    %s412 = scalar_lea.vmem %s1, 4
    %v413 = vld [vmem:[%s412] sm:$0x3]
    %v415 = vsel %vm360, %v411, 0
    %v418 = vsel %vm364, %v413, 0
    %420 = vmatpush.bf16.msra.mxu0 0
    %421 = vmatpush.bf16.msra.mxu0 0
    %422 = vmatpush.bf16.msra.mxu0 0
    %423 = vmatpush.bf16.msra.mxu0 0
    %424 = vmatpush.bf16.msra.mxu0 0
    %425 = vmatpush.bf16.msra.mxu0 0
    %426 = vmatpush.bf16.msra.mxu0 0
    %427 = vmatpush.bf16.msra.mxu0 %v418
    %428 = vmatmul.bf16.gmra.mxu0 %v415
    %v429 = vpop.f32.mrf.mxu0
    %v430 = vadd.f32 0.0, %v429
    %v431 = vpop.f32.mrf.mxu0
    %v432 = vadd.f32 0.0, %v431
    %433 = vdwg.mxu0
    %v434 = vadd.f32 %v398, %v430
    %v435 = vadd.f32 %v400, %v432
    %vm436 = vcmask 1044480
    %v437 = vrot.slane %v338, 3
    %v438 = vrot.slane %v340, 3
    %v439 = vsel %vm436, %v437, %v438
    %v440 = vrot.slane %v339, 3
    %v441 = vrot.slane %v341, 3
    %v442 = vsel %vm436, %v440, %v441
    %v445 = vpack.c.bf16 %v442, %v439
    %s446 = scalar_lea.vmem %s1, 6
    %v447 = vld [vmem:[%s446] sm:$0x3]
    %v449 = vsel %vm360, %v445, 0
    %v452 = vsel %vm364, %v447, 0
    %454 = vmatpush.bf16.msra.mxu0 0
    %455 = vmatpush.bf16.msra.mxu0 0
    %456 = vmatpush.bf16.msra.mxu0 0
    %457 = vmatpush.bf16.msra.mxu0 0
    %458 = vmatpush.bf16.msra.mxu0 0
    %459 = vmatpush.bf16.msra.mxu0 0
    %460 = vmatpush.bf16.msra.mxu0 0
    %461 = vmatpush.bf16.msra.mxu0 %v452
    %462 = vmatmul.bf16.gmra.mxu0 %v449
    %v463 = vpop.f32.mrf.mxu0
    %v464 = vadd.f32 0.0, %v463
    %v465 = vpop.f32.mrf.mxu0
    %v466 = vadd.f32 0.0, %v465
    %467 = vdwg.mxu0
    %v468 = vadd.f32 %v434, %v464
    %v469 = vadd.f32 %v435, %v466
    %v470 = vrot.slane %v338, 4
    %v471 = vrot.slane %v340, 4
    %v472 = vsel %vm337, %v470, %v471
    %v473 = vrot.slane %v339, 4
    %v474 = vrot.slane %v341, 4
    %v475 = vsel %vm337, %v473, %v474
    %v478 = vpack.c.bf16 %v475, %v472
    %s479 = scalar_lea.vmem %s1, 8
    %v480 = vld [vmem:[%s479] sm:$0x3]
    %v482 = vsel %vm360, %v478, 0
    %v485 = vsel %vm364, %v480, 0
    %487 = vmatpush.bf16.msra.mxu0 0
    %488 = vmatpush.bf16.msra.mxu0 0
    %489 = vmatpush.bf16.msra.mxu0 0
    %490 = vmatpush.bf16.msra.mxu0 0
    %491 = vmatpush.bf16.msra.mxu0 0
    %492 = vmatpush.bf16.msra.mxu0 0
    %493 = vmatpush.bf16.msra.mxu0 0
    %494 = vmatpush.bf16.msra.mxu0 %v485
    %495 = vmatmul.bf16.gmra.mxu0 %v482
    %v496 = vpop.f32.mrf.mxu0
    %v497 = vadd.f32 0.0, %v496
    %v498 = vpop.f32.mrf.mxu0
    %v499 = vadd.f32 0.0, %v498
    %500 = vdwg.mxu0
    %v501 = vadd.f32 %v468, %v497
    %v502 = vadd.f32 %v469, %v499
    %vm503 = vcmask 1042432
    %v504 = vrot.slane %v338, 5
    %v505 = vrot.slane %v340, 5
    %v506 = vsel %vm503, %v504, %v505
    %v507 = vrot.slane %v339, 5
    %v508 = vrot.slane %v341, 5
    %v509 = vsel %vm503, %v507, %v508
    %v512 = vpack.c.bf16 %v509, %v506
    %s513 = scalar_lea.vmem %s1, 10
    %v514 = vld [vmem:[%s513] sm:$0x3]
    %v516 = vsel %vm360, %v512, 0
    %v519 = vsel %vm364, %v514, 0
    %521 = vmatpush.bf16.msra.mxu0 0
    %522 = vmatpush.bf16.msra.mxu0 0
    %523 = vmatpush.bf16.msra.mxu0 0
    %524 = vmatpush.bf16.msra.mxu0 0
    %525 = vmatpush.bf16.msra.mxu0 0
    %526 = vmatpush.bf16.msra.mxu0 0
    %527 = vmatpush.bf16.msra.mxu0 0
    %528 = vmatpush.bf16.msra.mxu0 %v519
    %529 = vmatmul.bf16.gmra.mxu0 %v516
    %v530 = vpop.f32.mrf.mxu0
    %v531 = vadd.f32 0.0, %v530
    %v532 = vpop.f32.mrf.mxu0
    %v533 = vadd.f32 0.0, %v532
    %534 = vdwg.mxu0
    %v535 = vadd.f32 %v501, %v531
    %v536 = vadd.f32 %v502, %v533
    %v537 = vrot.slane %v338, 6
    %v538 = vrot.slane %v340, 6
    %v539 = vsel %vm364, %v537, %v538
    %v540 = vrot.slane %v339, 6
    %v541 = vrot.slane %v341, 6
    %v542 = vsel %vm364, %v540, %v541
    %v545 = vpack.c.bf16 %v542, %v539
    %s546 = scalar_lea.vmem %s1, 12
    %v547 = vld [vmem:[%s546] sm:$0x3]
    %v549 = vsel %vm360, %v545, 0
    %v552 = vsel %vm364, %v547, 0
    %554 = vmatpush.bf16.msra.mxu0 0
    %555 = vmatpush.bf16.msra.mxu0 0
    %556 = vmatpush.bf16.msra.mxu0 0
    %557 = vmatpush.bf16.msra.mxu0 0
    %558 = vmatpush.bf16.msra.mxu0 0
    %559 = vmatpush.bf16.msra.mxu0 0
    %560 = vmatpush.bf16.msra.mxu0 0
    %561 = vmatpush.bf16.msra.mxu0 %v552
    %562 = vmatmul.bf16.gmra.mxu0 %v549
    %v563 = vpop.f32.mrf.mxu0
    %v564 = vadd.f32 0.0, %v563
    %v565 = vpop.f32.mrf.mxu0
    %v566 = vadd.f32 0.0, %v565
    %567 = vdwg.mxu0
    %v568 = vadd.f32 %v535, %v564
    %v569 = vadd.f32 %v536, %v566
    %vm570 = vcmask 1040384
    %v571 = vrot.slane %v338, 7
    %v572 = vrot.slane %v340, 7
    %v573 = vsel %vm570, %v571, %v572
    %v574 = vrot.slane %v339, 7
    %v575 = vrot.slane %v341, 7
    %v576 = vsel %vm570, %v574, %v575
    %v579 = vpack.c.bf16 %v576, %v573
    %s580 = scalar_lea.vmem %s1, 14
    %v581 = vld [vmem:[%s580] sm:$0x3]
    %v583 = vsel %vm360, %v579, 0
    %v586 = vsel %vm364, %v581, 0
    %588 = vmatpush.bf16.msra.mxu0 0
    %589 = vmatpush.bf16.msra.mxu0 0
    %590 = vmatpush.bf16.msra.mxu0 0
    %591 = vmatpush.bf16.msra.mxu0 0
    %592 = vmatpush.bf16.msra.mxu0 0
    %593 = vmatpush.bf16.msra.mxu0 0
    %594 = vmatpush.bf16.msra.mxu0 0
    %595 = vmatpush.bf16.msra.mxu0 %v586
    %596 = vmatmul.bf16.gmra.mxu0 %v583
    %v597 = vpop.f32.mrf.mxu0
    %v598 = vadd.f32 0.0, %v597
    %v599 = vpop.f32.mrf.mxu0
    %v600 = vadd.f32 0.0, %v599
    %601 = vdwg.mxu0
    %v602 = vadd.f32 %v568, %v598
    %v603 = vadd.f32 %v569, %v600
    %v604 = vpack.c.bf16 %v341, %v340
    %s605 = scalar_lea.vmem %s1, 16
    %v606 = vld [vmem:[%s605] sm:$0x3]
    %v608 = vsel %vm360, %v604, 0
    %v611 = vsel %vm364, %v606, 0
    %613 = vmatpush.bf16.msra.mxu0 0
    %614 = vmatpush.bf16.msra.mxu0 0
    %615 = vmatpush.bf16.msra.mxu0 0
    %616 = vmatpush.bf16.msra.mxu0 0
    %617 = vmatpush.bf16.msra.mxu0 0
    %618 = vmatpush.bf16.msra.mxu0 0
    %619 = vmatpush.bf16.msra.mxu0 0
    %620 = vmatpush.bf16.msra.mxu0 %v611
    %621 = vmatmul.bf16.gmra.mxu0 %v608
    %v622 = vpop.f32.mrf.mxu0
    %v623 = vadd.f32 0.0, %v622
    %v624 = vpop.f32.mrf.mxu0
    %v625 = vadd.f32 0.0, %v624
    %626 = vdwg.mxu0
    %v627 = vadd.f32 %v602, %v623
    %v628 = vadd.f32 %v603, %v625
    %v629 = vld [vmem:[#allocation2] sm:$0x1]
    %v631 = vperm.slane %v629, 0
    %v633 = vadd.f32 %v627, %v631
    %v634 = vadd.f32 %v628, %v631
    %vm635 = vcmp.gt.f32.partialorder %v633, 0.0
    %vm636 = vcmp.gt.f32.partialorder %v634, 0.0
    %v637 = vmul.f32 %v633, 0.2
    %v638 = vmul.f32 %v634, 0.2
    %v639 = vsel %vm635, %v633, %v637
    %v640 = vsel %vm636, %v634, %v638
    %v641 = vld [vmem:[#allocation5] sm:$0x1]
    %v642 = vld [vmem:[#allocation5 + $0x1] sm:$0x1]
    %vm643 = vcmask 261120
    %v644 = vsel %vm643, %v639, 0.0
    %v645 = vsel %vm643, %v640, 0.0
    %v646 = vadd.f32 %v644, %v645
    %v647 = vrot.slane %v646, 4
    %v648 = vadd.f32 %v646, %v647
    %v649 = vrot.slane %v648, 2
    %v650 = vadd.f32 %v648, %v649
    %v651 = vrot.slane %v650, 1
    %v652 = vadd.f32 %v650, %v651
    %v653 = vmul.f32 %v652, 0.0625
    %v654 = vmul.f32 %v639, %v639
    %v655 = vmul.f32 %v640, %v640
    %v656 = vsel %vm643, %v654, 0.0
    %v657 = vsel %vm643, %v655, 0.0
    %v658 = vadd.f32 %v656, %v657
    %v659 = vrot.slane %v658, 4
    %v660 = vadd.f32 %v658, %v659
    %v661 = vrot.slane %v660, 2
    %v662 = vadd.f32 %v660, %v661
    %v663 = vrot.slane %v662, 1
    %v664 = vadd.f32 %v662, %v663
    %v665 = vmul.f32 %v664, 0.0625
    %v666 = vmul.f32 %v653, %v653
    %v667 = vsub.f32 %v665, %v666
    %v668 = vmax.f32 %v667, 0.0
    %v669 = vadd.f32 %v668, 1e-05
    %v670 = vrsqrt.pop %v669
    %v671 = vmul.f32 %v670, %v669
    %v672 = vmul.f32 %v671, %v670
    %v673 = vmul.f32 0.5, %v672
    %v674 = vsub.f32 1.5, %v673
    %v675 = vmul.f32 %v670, %v674
    %vm676 = vweird.f32 %v669
    %vm677 = vweird.f32 %v670
    %vm678 = vmor %vm676, %vm677
    %v679 = vsel %vm678, %v670, %v675
    %v680 = vmul.f32 %v679, %v641
    %v681 = vmul.f32 %v653, %v680
    %v682 = vsub.f32 %v642, %v681
    %v683 = vperm.slane %v680, 0
    %v684 = vmul.f32 %v639, %v683
    %v685 = vmul.f32 %v640, %v683
    %v686 = vperm.slane %v682, 0
    %v687 = vadd.f32 %v684, %v686
    %v688 = vadd.f32 %v685, %v686
    %v691 = vrot.slane %v687, 4
    %v692 = vrot.slane %v688, 4
    %v695 = vsel %vm337, 0.0, %v691
    %v696 = vsel %vm337, 0.0, %v692
    %v697 = vsel %vm337, %v691, 0.0
    %v698 = vsel %vm337, %v692, 0.0
    %v699 = vpack.c.bf16 %v696, %v695
    %v700 = vld [vmem:[%s4] sm:$0xf]
    %s701 = scalar_lea.vmem %s4, 4
    %v702 = vld [vmem:[%s701] sm:$0xf]
    %s703 = scalar_lea.vmem %s4, 8
    %v704 = vld [vmem:[%s703] sm:$0xf]
    %s705 = scalar_lea.vmem %s4, 12
    %v706 = vld [vmem:[%s705] sm:$0xf]
    %v711 = vrot.slane %v695, 1
    %v712 = vrot.slane %v697, 1
    %v713 = vsel %vm348, %v711, %v712
    %v714 = vrot.slane %v696, 1
    %v715 = vrot.slane %v698, 1
    %v716 = vsel %vm348, %v714, %v715
    %v719 = vpack.c.bf16 %v716, %v713
    %s720 = scalar_lea.vmem %s4, 16
    %v721 = vld [vmem:[%s720] sm:$0xf]
    %vm722 = vcmask 64512
    %v724 = vsel %vm722, %v719, 0
    %v727 = vsel %vm337, %v721, 0
    %729 = vmatpush.bf16.msra.mxu0 0
    %730 = vmatpush.bf16.msra.mxu0 0
    %731 = vmatpush.bf16.msra.mxu0 0
    %732 = vmatpush.bf16.msra.mxu0 0
    %733 = vmatpush.bf16.msra.mxu0 0
    %734 = vmatpush.bf16.msra.mxu0 0
    %735 = vmatpush.bf16.msra.mxu0 0
    %736 = vmatpush.bf16.msra.mxu0 %v727
    %737 = vmatmul.bf16.gmra.mxu0 %v724
    %v738 = vpop.f32.mrf.mxu0
    %v739 = vadd.f32 0.0, %v738
    %v740 = vpop.f32.mrf.mxu0
    %v741 = vadd.f32 0.0, %v740
    %742 = vdwg.mxu0
    %v744 = vsel %vm722, %v699, 0
    %v747 = vsel %vm337, %v700, 0
    %749 = vmatpush.bf16.msra.mxu0 0
    %750 = vmatpush.bf16.msra.mxu0 0
    %751 = vmatpush.bf16.msra.mxu0 0
    %752 = vmatpush.bf16.msra.mxu0 0
    %753 = vmatpush.bf16.msra.mxu0 0
    %754 = vmatpush.bf16.msra.mxu0 0
    %755 = vmatpush.bf16.msra.mxu0 0
    %756 = vmatpush.bf16.msra.mxu0 %v747
    %757 = vmatmul.bf16.gmra.mxu0 %v744
    %v758 = vpop.f32.mrf.mxu0
    %v759 = vadd.f32 %v739, %v758
    %v760 = vpop.f32.mrf.mxu0
    %v761 = vadd.f32 %v741, %v760
    %762 = vdwg.mxu0
    %s763 = scalar_lea.vmem %s4, 20
    %v764 = vld [vmem:[%s763] sm:$0xf]
    %766 = vrot.lane.b32.xlu0 %v719, 120
    %v767 = vpop.permute.xlu0 %766
    %v769 = vsel %vm722, %v767, 0
    %v772 = vsel %vm337, %v764, 0
    %774 = vmatpush.bf16.msra.mxu0 0
    %775 = vmatpush.bf16.msra.mxu0 0
    %776 = vmatpush.bf16.msra.mxu0 0
    %777 = vmatpush.bf16.msra.mxu0 0
    %778 = vmatpush.bf16.msra.mxu0 0
    %779 = vmatpush.bf16.msra.mxu0 0
    %780 = vmatpush.bf16.msra.mxu0 0
    %781 = vmatpush.bf16.msra.mxu0 %v772
    %782 = vmatmul.bf16.gmra.mxu0 %v769
    %v783 = vpop.f32.mrf.mxu0
    %v784 = vadd.f32 0.0, %v783
    %v785 = vpop.f32.mrf.mxu0
    %v786 = vadd.f32 0.0, %v785
    %787 = vdwg.mxu0
    %789 = vrot.lane.b32.xlu0 %v699, 120
    %v790 = vpop.permute.xlu0 %789
    %v792 = vsel %vm722, %v790, 0
    %v795 = vsel %vm337, %v702, 0
    %797 = vmatpush.bf16.msra.mxu0 0
    %798 = vmatpush.bf16.msra.mxu0 0
    %799 = vmatpush.bf16.msra.mxu0 0
    %800 = vmatpush.bf16.msra.mxu0 0
    %801 = vmatpush.bf16.msra.mxu0 0
    %802 = vmatpush.bf16.msra.mxu0 0
    %803 = vmatpush.bf16.msra.mxu0 0
    %804 = vmatpush.bf16.msra.mxu0 %v795
    %805 = vmatmul.bf16.gmra.mxu0 %v792
    %v806 = vpop.f32.mrf.mxu0
    %v807 = vadd.f32 %v784, %v806
    %v808 = vpop.f32.mrf.mxu0
    %v809 = vadd.f32 %v786, %v808
    %810 = vdwg.mxu0
    %s811 = scalar_lea.vmem %s4, 24
    %v812 = vld [vmem:[%s811] sm:$0xf]
    %813 = vrot.lane.b32.xlu0 %v719, 112
    %v814 = vpop.permute.xlu0 %813
    %v816 = vsel %vm722, %v814, 0
    %v819 = vsel %vm337, %v812, 0
    %821 = vmatpush.bf16.msra.mxu0 0
    %822 = vmatpush.bf16.msra.mxu0 0
    %823 = vmatpush.bf16.msra.mxu0 0
    %824 = vmatpush.bf16.msra.mxu0 0
    %825 = vmatpush.bf16.msra.mxu0 0
    %826 = vmatpush.bf16.msra.mxu0 0
    %827 = vmatpush.bf16.msra.mxu0 0
    %828 = vmatpush.bf16.msra.mxu0 %v819
    %829 = vmatmul.bf16.gmra.mxu0 %v816
    %v830 = vpop.f32.mrf.mxu0
    %v831 = vadd.f32 0.0, %v830
    %v832 = vpop.f32.mrf.mxu0
    %v833 = vadd.f32 0.0, %v832
    %834 = vdwg.mxu0
    %835 = vrot.lane.b32.xlu0 %v699, 112
    %v836 = vpop.permute.xlu0 %835
    %v838 = vsel %vm722, %v836, 0
    %v841 = vsel %vm337, %v704, 0
    %843 = vmatpush.bf16.msra.mxu0 0
    %844 = vmatpush.bf16.msra.mxu0 0
    %845 = vmatpush.bf16.msra.mxu0 0
    %846 = vmatpush.bf16.msra.mxu0 0
    %847 = vmatpush.bf16.msra.mxu0 0
    %848 = vmatpush.bf16.msra.mxu0 0
    %849 = vmatpush.bf16.msra.mxu0 0
    %850 = vmatpush.bf16.msra.mxu0 %v841
    %851 = vmatmul.bf16.gmra.mxu0 %v838
    %v852 = vpop.f32.mrf.mxu0
    %v853 = vadd.f32 %v831, %v852
    %v854 = vpop.f32.mrf.mxu0
    %v855 = vadd.f32 %v833, %v854
    %856 = vdwg.mxu0
    %s857 = scalar_lea.vmem %s4, 28
    %v858 = vld [vmem:[%s857] sm:$0xf]
    %859 = vrot.lane.b32.xlu0 %v719, 104
    %v860 = vpop.permute.xlu0 %859
    %v862 = vsel %vm722, %v860, 0
    %v865 = vsel %vm337, %v858, 0
    %867 = vmatpush.bf16.msra.mxu0 0
    %868 = vmatpush.bf16.msra.mxu0 0
    %869 = vmatpush.bf16.msra.mxu0 0
    %870 = vmatpush.bf16.msra.mxu0 0
    %871 = vmatpush.bf16.msra.mxu0 0
    %872 = vmatpush.bf16.msra.mxu0 0
    %873 = vmatpush.bf16.msra.mxu0 0
    %874 = vmatpush.bf16.msra.mxu0 %v865
    %875 = vmatmul.bf16.gmra.mxu0 %v862
    %v876 = vpop.f32.mrf.mxu0
    %v877 = vadd.f32 0.0, %v876
    %v878 = vpop.f32.mrf.mxu0
    %v879 = vadd.f32 0.0, %v878
    %880 = vdwg.mxu0
    %881 = vrot.lane.b32.xlu0 %v699, 104
    %v882 = vpop.permute.xlu0 %881
    %v884 = vsel %vm722, %v882, 0
    %v887 = vsel %vm337, %v706, 0
    %889 = vmatpush.bf16.msra.mxu0 0
    %890 = vmatpush.bf16.msra.mxu0 0
    %891 = vmatpush.bf16.msra.mxu0 0
    %892 = vmatpush.bf16.msra.mxu0 0
    %893 = vmatpush.bf16.msra.mxu0 0
    %894 = vmatpush.bf16.msra.mxu0 0
    %895 = vmatpush.bf16.msra.mxu0 0
    %896 = vmatpush.bf16.msra.mxu0 %v887
    %897 = vmatmul.bf16.gmra.mxu0 %v884
    %v898 = vpop.f32.mrf.mxu0
    %v899 = vadd.f32 %v877, %v898
    %v900 = vpop.f32.mrf.mxu0
    %v901 = vadd.f32 %v879, %v900
    %902 = vdwg.mxu0
    %v903 = vrot.slane %v695, 2
    %v904 = vrot.slane %v697, 2
    %v905 = vsel %vm402, %v903, %v904
    %v906 = vrot.slane %v696, 2
    %v907 = vrot.slane %v698, 2
    %v908 = vsel %vm402, %v906, %v907
    %v911 = vpack.c.bf16 %v908, %v905
    %s912 = scalar_lea.vmem %s4, 32
    %v913 = vld [vmem:[%s912] sm:$0xf]
    %v915 = vsel %vm722, %v911, 0
    %v918 = vsel %vm337, %v913, 0
    %920 = vmatpush.bf16.msra.mxu0 0
    %921 = vmatpush.bf16.msra.mxu0 0
    %922 = vmatpush.bf16.msra.mxu0 0
    %923 = vmatpush.bf16.msra.mxu0 0
    %924 = vmatpush.bf16.msra.mxu0 0
    %925 = vmatpush.bf16.msra.mxu0 0
    %926 = vmatpush.bf16.msra.mxu0 0
    %927 = vmatpush.bf16.msra.mxu0 %v918
    %928 = vmatmul.bf16.gmra.mxu0 %v915
    %v929 = vpop.f32.mrf.mxu0
    %v930 = vadd.f32 0.0, %v929
    %v931 = vpop.f32.mrf.mxu0
    %v932 = vadd.f32 0.0, %v931
    %933 = vdwg.mxu0
    %v934 = vadd.f32 %v759, %v930
    %v935 = vadd.f32 %v761, %v932
    %s936 = scalar_lea.vmem %s4, 36
    %v937 = vld [vmem:[%s936] sm:$0xf]
    %939 = vrot.lane.b32.xlu0 %v911, 120
    %v940 = vpop.permute.xlu0 %939
    %v942 = vsel %vm722, %v940, 0
    %v945 = vsel %vm337, %v937, 0
    %947 = vmatpush.bf16.msra.mxu0 0
    %948 = vmatpush.bf16.msra.mxu0 0
    %949 = vmatpush.bf16.msra.mxu0 0
    %950 = vmatpush.bf16.msra.mxu0 0
    %951 = vmatpush.bf16.msra.mxu0 0
    %952 = vmatpush.bf16.msra.mxu0 0
    %953 = vmatpush.bf16.msra.mxu0 0
    %954 = vmatpush.bf16.msra.mxu0 %v945
    %955 = vmatmul.bf16.gmra.mxu0 %v942
    %v956 = vpop.f32.mrf.mxu0
    %v957 = vadd.f32 0.0, %v956
    %v958 = vpop.f32.mrf.mxu0
    %v959 = vadd.f32 0.0, %v958
    %960 = vdwg.mxu0
    %v961 = vadd.f32 %v807, %v957
    %v962 = vadd.f32 %v809, %v959
    %s963 = scalar_lea.vmem %s4, 40
    %v964 = vld [vmem:[%s963] sm:$0xf]
    %965 = vrot.lane.b32.xlu0 %v911, 112
    %v966 = vpop.permute.xlu0 %965
    %v968 = vsel %vm722, %v966, 0
    %v971 = vsel %vm337, %v964, 0
    %973 = vmatpush.bf16.msra.mxu0 0
    %974 = vmatpush.bf16.msra.mxu0 0
    %975 = vmatpush.bf16.msra.mxu0 0
    %976 = vmatpush.bf16.msra.mxu0 0
    %977 = vmatpush.bf16.msra.mxu0 0
    %978 = vmatpush.bf16.msra.mxu0 0
    %979 = vmatpush.bf16.msra.mxu0 0
    %980 = vmatpush.bf16.msra.mxu0 %v971
    %981 = vmatmul.bf16.gmra.mxu0 %v968
    %v982 = vpop.f32.mrf.mxu0
    %v983 = vadd.f32 0.0, %v982
    %v984 = vpop.f32.mrf.mxu0
    %v985 = vadd.f32 0.0, %v984
    %986 = vdwg.mxu0
    %v987 = vadd.f32 %v853, %v983
    %v988 = vadd.f32 %v855, %v985
    %s989 = scalar_lea.vmem %s4, 44
    %v990 = vld [vmem:[%s989] sm:$0xf]
    %991 = vrot.lane.b32.xlu0 %v911, 104
    %v992 = vpop.permute.xlu0 %991
    %v994 = vsel %vm722, %v992, 0
    %v997 = vsel %vm337, %v990, 0
    %999 = vmatpush.bf16.msra.mxu0 0
    %1000 = vmatpush.bf16.msra.mxu0 0
    %1001 = vmatpush.bf16.msra.mxu0 0
    %1002 = vmatpush.bf16.msra.mxu0 0
    %1003 = vmatpush.bf16.msra.mxu0 0
    %1004 = vmatpush.bf16.msra.mxu0 0
    %1005 = vmatpush.bf16.msra.mxu0 0
    %1006 = vmatpush.bf16.msra.mxu0 %v997
    %1007 = vmatmul.bf16.gmra.mxu0 %v994
    %v1008 = vpop.f32.mrf.mxu0
    %v1009 = vadd.f32 0.0, %v1008
    %v1010 = vpop.f32.mrf.mxu0
    %v1011 = vadd.f32 0.0, %v1010
    %1012 = vdwg.mxu0
    %v1013 = vadd.f32 %v899, %v1009
    %v1014 = vadd.f32 %v901, %v1011
    %v1015 = vrot.slane %v695, 3
    %v1016 = vrot.slane %v697, 3
    %v1017 = vsel %vm436, %v1015, %v1016
    %v1018 = vrot.slane %v696, 3
    %v1019 = vrot.slane %v698, 3
    %v1020 = vsel %vm436, %v1018, %v1019
    %v1023 = vpack.c.bf16 %v1020, %v1017
    %s1024 = scalar_lea.vmem %s4, 48
    %v1025 = vld [vmem:[%s1024] sm:$0xf]
    %v1027 = vsel %vm722, %v1023, 0
    %v1030 = vsel %vm337, %v1025, 0
    %1032 = vmatpush.bf16.msra.mxu0 0
    %1033 = vmatpush.bf16.msra.mxu0 0
    %1034 = vmatpush.bf16.msra.mxu0 0
    %1035 = vmatpush.bf16.msra.mxu0 0
    %1036 = vmatpush.bf16.msra.mxu0 0
    %1037 = vmatpush.bf16.msra.mxu0 0
    %1038 = vmatpush.bf16.msra.mxu0 0
    %1039 = vmatpush.bf16.msra.mxu0 %v1030
    %1040 = vmatmul.bf16.gmra.mxu0 %v1027
    %v1041 = vpop.f32.mrf.mxu0
    %v1042 = vadd.f32 0.0, %v1041
    %v1043 = vpop.f32.mrf.mxu0
    %v1044 = vadd.f32 0.0, %v1043
    %1045 = vdwg.mxu0
    %v1046 = vadd.f32 %v934, %v1042
    %v1047 = vadd.f32 %v935, %v1044
    %s1048 = scalar_lea.vmem %s4, 52
    %v1049 = vld [vmem:[%s1048] sm:$0xf]
    %1051 = vrot.lane.b32.xlu0 %v1023, 120
    %v1052 = vpop.permute.xlu0 %1051
    %v1054 = vsel %vm722, %v1052, 0
    %v1057 = vsel %vm337, %v1049, 0
    %1059 = vmatpush.bf16.msra.mxu0 0
    %1060 = vmatpush.bf16.msra.mxu0 0
    %1061 = vmatpush.bf16.msra.mxu0 0
    %1062 = vmatpush.bf16.msra.mxu0 0
    %1063 = vmatpush.bf16.msra.mxu0 0
    %1064 = vmatpush.bf16.msra.mxu0 0
    %1065 = vmatpush.bf16.msra.mxu0 0
    %1066 = vmatpush.bf16.msra.mxu0 %v1057
    %1067 = vmatmul.bf16.gmra.mxu0 %v1054
    %v1068 = vpop.f32.mrf.mxu0
    %v1069 = vadd.f32 0.0, %v1068
    %v1070 = vpop.f32.mrf.mxu0
    %v1071 = vadd.f32 0.0, %v1070
    %1072 = vdwg.mxu0
    %v1073 = vadd.f32 %v961, %v1069
    %v1074 = vadd.f32 %v962, %v1071
    %s1075 = scalar_lea.vmem %s4, 56
    %v1076 = vld [vmem:[%s1075] sm:$0xf]
    %1077 = vrot.lane.b32.xlu0 %v1023, 112
    %v1078 = vpop.permute.xlu0 %1077
    %v1080 = vsel %vm722, %v1078, 0
    %v1083 = vsel %vm337, %v1076, 0
    %1085 = vmatpush.bf16.msra.mxu0 0
    %1086 = vmatpush.bf16.msra.mxu0 0
    %1087 = vmatpush.bf16.msra.mxu0 0
    %1088 = vmatpush.bf16.msra.mxu0 0
    %1089 = vmatpush.bf16.msra.mxu0 0
    %1090 = vmatpush.bf16.msra.mxu0 0
    %1091 = vmatpush.bf16.msra.mxu0 0
    %1092 = vmatpush.bf16.msra.mxu0 %v1083
    %1093 = vmatmul.bf16.gmra.mxu0 %v1080
    %v1094 = vpop.f32.mrf.mxu0
    %v1095 = vadd.f32 0.0, %v1094
    %v1096 = vpop.f32.mrf.mxu0
    %v1097 = vadd.f32 0.0, %v1096
    %1098 = vdwg.mxu0
    %v1099 = vadd.f32 %v987, %v1095
    %v1100 = vadd.f32 %v988, %v1097
    %s1101 = scalar_lea.vmem %s4, 60
    %v1102 = vld [vmem:[%s1101] sm:$0xf]
    %1103 = vrot.lane.b32.xlu0 %v1023, 104
    %v1104 = vpop.permute.xlu0 %1103
    %v1106 = vsel %vm722, %v1104, 0
    %v1109 = vsel %vm337, %v1102, 0
    %1111 = vmatpush.bf16.msra.mxu0 0
    %1112 = vmatpush.bf16.msra.mxu0 0
    %1113 = vmatpush.bf16.msra.mxu0 0
    %1114 = vmatpush.bf16.msra.mxu0 0
    %1115 = vmatpush.bf16.msra.mxu0 0
    %1116 = vmatpush.bf16.msra.mxu0 0
    %1117 = vmatpush.bf16.msra.mxu0 0
    %1118 = vmatpush.bf16.msra.mxu0 %v1109
    %1119 = vmatmul.bf16.gmra.mxu0 %v1106
    %v1120 = vpop.f32.mrf.mxu0
    %v1121 = vadd.f32 0.0, %v1120
    %v1122 = vpop.f32.mrf.mxu0
    %v1123 = vadd.f32 0.0, %v1122
    %1124 = vdwg.mxu0
    %v1125 = vadd.f32 %v1013, %v1121
    %v1126 = vadd.f32 %v1014, %v1123
    %v1127 = vrot.slane %v695, 4
    %v1128 = vrot.slane %v697, 4
    %v1129 = vsel %vm337, %v1127, %v1128
    %v1130 = vrot.slane %v696, 4
    %v1131 = vrot.slane %v698, 4
    %v1132 = vsel %vm337, %v1130, %v1131
    %v1135 = vpack.c.bf16 %v1132, %v1129
    %s1136 = scalar_lea.vmem %s4, 64
    %v1137 = vld [vmem:[%s1136] sm:$0xf]
    %v1139 = vsel %vm722, %v1135, 0
    %v1142 = vsel %vm337, %v1137, 0
    %1144 = vmatpush.bf16.msra.mxu0 0
    %1145 = vmatpush.bf16.msra.mxu0 0
    %1146 = vmatpush.bf16.msra.mxu0 0
    %1147 = vmatpush.bf16.msra.mxu0 0
    %1148 = vmatpush.bf16.msra.mxu0 0
    %1149 = vmatpush.bf16.msra.mxu0 0
    %1150 = vmatpush.bf16.msra.mxu0 0
    %1151 = vmatpush.bf16.msra.mxu0 %v1142
    %1152 = vmatmul.bf16.gmra.mxu0 %v1139
    %v1153 = vpop.f32.mrf.mxu0
    %v1154 = vadd.f32 0.0, %v1153
    %v1155 = vpop.f32.mrf.mxu0
    %v1156 = vadd.f32 0.0, %v1155
    %1157 = vdwg.mxu0
    %v1158 = vadd.f32 %v1046, %v1154
    %v1159 = vadd.f32 %v1047, %v1156
    %s1160 = scalar_lea.vmem %s4, 68
    %v1161 = vld [vmem:[%s1160] sm:$0xf]
    %1163 = vrot.lane.b32.xlu0 %v1135, 120
    %v1164 = vpop.permute.xlu0 %1163
    %v1166 = vsel %vm722, %v1164, 0
    %v1169 = vsel %vm337, %v1161, 0
    %1171 = vmatpush.bf16.msra.mxu0 0
    %1172 = vmatpush.bf16.msra.mxu0 0
    %1173 = vmatpush.bf16.msra.mxu0 0
    %1174 = vmatpush.bf16.msra.mxu0 0
    %1175 = vmatpush.bf16.msra.mxu0 0
    %1176 = vmatpush.bf16.msra.mxu0 0
    %1177 = vmatpush.bf16.msra.mxu0 0
    %1178 = vmatpush.bf16.msra.mxu0 %v1169
    %1179 = vmatmul.bf16.gmra.mxu0 %v1166
    %v1180 = vpop.f32.mrf.mxu0
    %v1181 = vadd.f32 0.0, %v1180
    %v1182 = vpop.f32.mrf.mxu0
    %v1183 = vadd.f32 0.0, %v1182
    %1184 = vdwg.mxu0
    %v1185 = vadd.f32 %v1073, %v1181
    %v1186 = vadd.f32 %v1074, %v1183
    %s1187 = scalar_lea.vmem %s4, 72
    %v1188 = vld [vmem:[%s1187] sm:$0xf]
    %1189 = vrot.lane.b32.xlu0 %v1135, 112
    %v1190 = vpop.permute.xlu0 %1189
    %v1192 = vsel %vm722, %v1190, 0
    %v1195 = vsel %vm337, %v1188, 0
    %1197 = vmatpush.bf16.msra.mxu0 0
    %1198 = vmatpush.bf16.msra.mxu0 0
    %1199 = vmatpush.bf16.msra.mxu0 0
    %1200 = vmatpush.bf16.msra.mxu0 0
    %1201 = vmatpush.bf16.msra.mxu0 0
    %1202 = vmatpush.bf16.msra.mxu0 0
    %1203 = vmatpush.bf16.msra.mxu0 0
    %1204 = vmatpush.bf16.msra.mxu0 %v1195
    %1205 = vmatmul.bf16.gmra.mxu0 %v1192
    %v1206 = vpop.f32.mrf.mxu0
    %v1207 = vadd.f32 0.0, %v1206
    %v1208 = vpop.f32.mrf.mxu0
    %v1209 = vadd.f32 0.0, %v1208
    %1210 = vdwg.mxu0
    %v1211 = vadd.f32 %v1099, %v1207
    %v1212 = vadd.f32 %v1100, %v1209
    %s1213 = scalar_lea.vmem %s4, 76
    %v1214 = vld [vmem:[%s1213] sm:$0xf]
    %1215 = vrot.lane.b32.xlu0 %v1135, 104
    %v1216 = vpop.permute.xlu0 %1215
    %v1218 = vsel %vm722, %v1216, 0
    %v1221 = vsel %vm337, %v1214, 0
    %1223 = vmatpush.bf16.msra.mxu0 0
    %1224 = vmatpush.bf16.msra.mxu0 0
    %1225 = vmatpush.bf16.msra.mxu0 0
    %1226 = vmatpush.bf16.msra.mxu0 0
    %1227 = vmatpush.bf16.msra.mxu0 0
    %1228 = vmatpush.bf16.msra.mxu0 0
    %1229 = vmatpush.bf16.msra.mxu0 0
    %1230 = vmatpush.bf16.msra.mxu0 %v1221
    %1231 = vmatmul.bf16.gmra.mxu0 %v1218
    %v1232 = vpop.f32.mrf.mxu0
    %v1233 = vadd.f32 0.0, %v1232
    %v1234 = vpop.f32.mrf.mxu0
    %v1235 = vadd.f32 0.0, %v1234
    %1236 = vdwg.mxu0
    %v1237 = vadd.f32 %v1125, %v1233
    %v1238 = vadd.f32 %v1126, %v1235
    %v1239 = vrot.slane %v695, 5
    %v1240 = vrot.slane %v697, 5
    %v1241 = vsel %vm503, %v1239, %v1240
    %v1242 = vrot.slane %v696, 5
    %v1243 = vrot.slane %v698, 5
    %v1244 = vsel %vm503, %v1242, %v1243
    %v1247 = vpack.c.bf16 %v1244, %v1241
    %s1248 = scalar_lea.vmem %s4, 80
    %v1249 = vld [vmem:[%s1248] sm:$0xf]
    %v1251 = vsel %vm722, %v1247, 0
    %v1254 = vsel %vm337, %v1249, 0
    %1256 = vmatpush.bf16.msra.mxu0 0
    %1257 = vmatpush.bf16.msra.mxu0 0
    %1258 = vmatpush.bf16.msra.mxu0 0
    %1259 = vmatpush.bf16.msra.mxu0 0
    %1260 = vmatpush.bf16.msra.mxu0 0
    %1261 = vmatpush.bf16.msra.mxu0 0
    %1262 = vmatpush.bf16.msra.mxu0 0
    %1263 = vmatpush.bf16.msra.mxu0 %v1254
    %1264 = vmatmul.bf16.gmra.mxu0 %v1251
    %v1265 = vpop.f32.mrf.mxu0
    %v1266 = vadd.f32 0.0, %v1265
    %v1267 = vpop.f32.mrf.mxu0
    %v1268 = vadd.f32 0.0, %v1267
    %1269 = vdwg.mxu0
    %v1270 = vadd.f32 %v1158, %v1266
    %v1271 = vadd.f32 %v1159, %v1268
    %s1272 = scalar_lea.vmem %s4, 84
    %v1273 = vld [vmem:[%s1272] sm:$0xf]
    %1275 = vrot.lane.b32.xlu0 %v1247, 120
    %v1276 = vpop.permute.xlu0 %1275
    %v1278 = vsel %vm722, %v1276, 0
    %v1281 = vsel %vm337, %v1273, 0
    %1283 = vmatpush.bf16.msra.mxu0 0
    %1284 = vmatpush.bf16.msra.mxu0 0
    %1285 = vmatpush.bf16.msra.mxu0 0
    %1286 = vmatpush.bf16.msra.mxu0 0
    %1287 = vmatpush.bf16.msra.mxu0 0
    %1288 = vmatpush.bf16.msra.mxu0 0
    %1289 = vmatpush.bf16.msra.mxu0 0
    %1290 = vmatpush.bf16.msra.mxu0 %v1281
    %1291 = vmatmul.bf16.gmra.mxu0 %v1278
    %v1292 = vpop.f32.mrf.mxu0
    %v1293 = vadd.f32 0.0, %v1292
    %v1294 = vpop.f32.mrf.mxu0
    %v1295 = vadd.f32 0.0, %v1294
    %1296 = vdwg.mxu0
    %v1297 = vadd.f32 %v1185, %v1293
    %v1298 = vadd.f32 %v1186, %v1295
    %s1299 = scalar_lea.vmem %s4, 88
    %v1300 = vld [vmem:[%s1299] sm:$0xf]
    %1301 = vrot.lane.b32.xlu0 %v1247, 112
    %v1302 = vpop.permute.xlu0 %1301
    %v1304 = vsel %vm722, %v1302, 0
    %v1307 = vsel %vm337, %v1300, 0
    %1309 = vmatpush.bf16.msra.mxu0 0
    %1310 = vmatpush.bf16.msra.mxu0 0
    %1311 = vmatpush.bf16.msra.mxu0 0
    %1312 = vmatpush.bf16.msra.mxu0 0
    %1313 = vmatpush.bf16.msra.mxu0 0
    %1314 = vmatpush.bf16.msra.mxu0 0
    %1315 = vmatpush.bf16.msra.mxu0 0
    %1316 = vmatpush.bf16.msra.mxu0 %v1307
    %1317 = vmatmul.bf16.gmra.mxu0 %v1304
    %v1318 = vpop.f32.mrf.mxu0
    %v1319 = vadd.f32 0.0, %v1318
    %v1320 = vpop.f32.mrf.mxu0
    %v1321 = vadd.f32 0.0, %v1320
    %1322 = vdwg.mxu0
    %v1323 = vadd.f32 %v1211, %v1319
    %v1324 = vadd.f32 %v1212, %v1321
    %s1325 = scalar_lea.vmem %s4, 92
    %v1326 = vld [vmem:[%s1325] sm:$0xf]
    %1327 = vrot.lane.b32.xlu0 %v1247, 104
    %v1328 = vpop.permute.xlu0 %1327
    %v1330 = vsel %vm722, %v1328, 0
    %v1333 = vsel %vm337, %v1326, 0
    %1335 = vmatpush.bf16.msra.mxu0 0
    %1336 = vmatpush.bf16.msra.mxu0 0
    %1337 = vmatpush.bf16.msra.mxu0 0
    %1338 = vmatpush.bf16.msra.mxu0 0
    %1339 = vmatpush.bf16.msra.mxu0 0
    %1340 = vmatpush.bf16.msra.mxu0 0
    %1341 = vmatpush.bf16.msra.mxu0 0
    %1342 = vmatpush.bf16.msra.mxu0 %v1333
    %1343 = vmatmul.bf16.gmra.mxu0 %v1330
    %v1344 = vpop.f32.mrf.mxu0
    %v1345 = vadd.f32 0.0, %v1344
    %v1346 = vpop.f32.mrf.mxu0
    %v1347 = vadd.f32 0.0, %v1346
    %1348 = vdwg.mxu0
    %v1349 = vadd.f32 %v1237, %v1345
    %v1350 = vadd.f32 %v1238, %v1347
    %v1351 = vrot.slane %v695, 6
    %v1352 = vrot.slane %v697, 6
    %v1353 = vsel %vm364, %v1351, %v1352
    %v1354 = vrot.slane %v696, 6
    %v1355 = vrot.slane %v698, 6
    %v1356 = vsel %vm364, %v1354, %v1355
    %v1359 = vpack.c.bf16 %v1356, %v1353
    %s1360 = scalar_lea.vmem %s4, 96
    %v1361 = vld [vmem:[%s1360] sm:$0xf]
    %v1363 = vsel %vm722, %v1359, 0
    %v1366 = vsel %vm337, %v1361, 0
    %1368 = vmatpush.bf16.msra.mxu0 0
    %1369 = vmatpush.bf16.msra.mxu0 0
    %1370 = vmatpush.bf16.msra.mxu0 0
    %1371 = vmatpush.bf16.msra.mxu0 0
    %1372 = vmatpush.bf16.msra.mxu0 0
    %1373 = vmatpush.bf16.msra.mxu0 0
    %1374 = vmatpush.bf16.msra.mxu0 0
    %1375 = vmatpush.bf16.msra.mxu0 %v1366
    %1376 = vmatmul.bf16.gmra.mxu0 %v1363
    %v1377 = vpop.f32.mrf.mxu0
    %v1378 = vadd.f32 0.0, %v1377
    %v1379 = vpop.f32.mrf.mxu0
    %v1380 = vadd.f32 0.0, %v1379
    %1381 = vdwg.mxu0
    %v1382 = vadd.f32 %v1270, %v1378
    %v1383 = vadd.f32 %v1271, %v1380
    %s1384 = scalar_lea.vmem %s4, 100
    %v1385 = vld [vmem:[%s1384] sm:$0xf]
    %1387 = vrot.lane.b32.xlu0 %v1359, 120
    %v1388 = vpop.permute.xlu0 %1387
    %v1390 = vsel %vm722, %v1388, 0
    %v1393 = vsel %vm337, %v1385, 0
    %1395 = vmatpush.bf16.msra.mxu0 0
    %1396 = vmatpush.bf16.msra.mxu0 0
    %1397 = vmatpush.bf16.msra.mxu0 0
    %1398 = vmatpush.bf16.msra.mxu0 0
    %1399 = vmatpush.bf16.msra.mxu0 0
    %1400 = vmatpush.bf16.msra.mxu0 0
    %1401 = vmatpush.bf16.msra.mxu0 0
    %1402 = vmatpush.bf16.msra.mxu0 %v1393
    %1403 = vmatmul.bf16.gmra.mxu0 %v1390
    %v1404 = vpop.f32.mrf.mxu0
    %v1405 = vadd.f32 0.0, %v1404
    %v1406 = vpop.f32.mrf.mxu0
    %v1407 = vadd.f32 0.0, %v1406
    %1408 = vdwg.mxu0
    %v1409 = vadd.f32 %v1297, %v1405
    %v1410 = vadd.f32 %v1298, %v1407
    %s1411 = scalar_lea.vmem %s4, 104
    %v1412 = vld [vmem:[%s1411] sm:$0xf]
    %1413 = vrot.lane.b32.xlu0 %v1359, 112
    %v1414 = vpop.permute.xlu0 %1413
    %v1416 = vsel %vm722, %v1414, 0
    %v1419 = vsel %vm337, %v1412, 0
    %1421 = vmatpush.bf16.msra.mxu0 0
    %1422 = vmatpush.bf16.msra.mxu0 0
    %1423 = vmatpush.bf16.msra.mxu0 0
    %1424 = vmatpush.bf16.msra.mxu0 0
    %1425 = vmatpush.bf16.msra.mxu0 0
    %1426 = vmatpush.bf16.msra.mxu0 0
    %1427 = vmatpush.bf16.msra.mxu0 0
    %1428 = vmatpush.bf16.msra.mxu0 %v1419
    %1429 = vmatmul.bf16.gmra.mxu0 %v1416
    %v1430 = vpop.f32.mrf.mxu0
    %v1431 = vadd.f32 0.0, %v1430
    %v1432 = vpop.f32.mrf.mxu0
    %v1433 = vadd.f32 0.0, %v1432
    %1434 = vdwg.mxu0
    %v1435 = vadd.f32 %v1323, %v1431
    %v1436 = vadd.f32 %v1324, %v1433
    %s1437 = scalar_lea.vmem %s4, 108
    %v1438 = vld [vmem:[%s1437] sm:$0xf]
    %1439 = vrot.lane.b32.xlu0 %v1359, 104
    %v1440 = vpop.permute.xlu0 %1439
    %v1442 = vsel %vm722, %v1440, 0
    %v1445 = vsel %vm337, %v1438, 0
    %1447 = vmatpush.bf16.msra.mxu0 0
    %1448 = vmatpush.bf16.msra.mxu0 0
    %1449 = vmatpush.bf16.msra.mxu0 0
    %1450 = vmatpush.bf16.msra.mxu0 0
    %1451 = vmatpush.bf16.msra.mxu0 0
    %1452 = vmatpush.bf16.msra.mxu0 0
    %1453 = vmatpush.bf16.msra.mxu0 0
    %1454 = vmatpush.bf16.msra.mxu0 %v1445
    %1455 = vmatmul.bf16.gmra.mxu0 %v1442
    %v1456 = vpop.f32.mrf.mxu0
    %v1457 = vadd.f32 0.0, %v1456
    %v1458 = vpop.f32.mrf.mxu0
    %v1459 = vadd.f32 0.0, %v1458
    %1460 = vdwg.mxu0
    %v1461 = vadd.f32 %v1349, %v1457
    %v1462 = vadd.f32 %v1350, %v1459
    %v1463 = vrot.slane %v695, 7
    %v1464 = vrot.slane %v697, 7
    %v1465 = vsel %vm570, %v1463, %v1464
    %v1466 = vrot.slane %v696, 7
    %v1467 = vrot.slane %v698, 7
    %v1468 = vsel %vm570, %v1466, %v1467
    %v1471 = vpack.c.bf16 %v1468, %v1465
    %s1472 = scalar_lea.vmem %s4, 112
    %v1473 = vld [vmem:[%s1472] sm:$0xf]
    %v1475 = vsel %vm722, %v1471, 0
    %v1478 = vsel %vm337, %v1473, 0
    %1480 = vmatpush.bf16.msra.mxu0 0
    %1481 = vmatpush.bf16.msra.mxu0 0
    %1482 = vmatpush.bf16.msra.mxu0 0
    %1483 = vmatpush.bf16.msra.mxu0 0
    %1484 = vmatpush.bf16.msra.mxu0 0
    %1485 = vmatpush.bf16.msra.mxu0 0
    %1486 = vmatpush.bf16.msra.mxu0 0
    %1487 = vmatpush.bf16.msra.mxu0 %v1478
    %1488 = vmatmul.bf16.gmra.mxu0 %v1475
    %v1489 = vpop.f32.mrf.mxu0
    %v1490 = vadd.f32 0.0, %v1489
    %v1491 = vpop.f32.mrf.mxu0
    %v1492 = vadd.f32 0.0, %v1491
    %1493 = vdwg.mxu0
    %v1494 = vadd.f32 %v1382, %v1490
    %v1495 = vadd.f32 %v1383, %v1492
    %s1496 = scalar_lea.vmem %s4, 116
    %v1497 = vld [vmem:[%s1496] sm:$0xf]
    %1499 = vrot.lane.b32.xlu0 %v1471, 120
    %v1500 = vpop.permute.xlu0 %1499
    %v1502 = vsel %vm722, %v1500, 0
    %v1505 = vsel %vm337, %v1497, 0
    %1507 = vmatpush.bf16.msra.mxu0 0
    %1508 = vmatpush.bf16.msra.mxu0 0
    %1509 = vmatpush.bf16.msra.mxu0 0
    %1510 = vmatpush.bf16.msra.mxu0 0
    %1511 = vmatpush.bf16.msra.mxu0 0
    %1512 = vmatpush.bf16.msra.mxu0 0
    %1513 = vmatpush.bf16.msra.mxu0 0
    %1514 = vmatpush.bf16.msra.mxu0 %v1505
    %1515 = vmatmul.bf16.gmra.mxu0 %v1502
    %v1516 = vpop.f32.mrf.mxu0
    %v1517 = vadd.f32 0.0, %v1516
    %v1518 = vpop.f32.mrf.mxu0
    %v1519 = vadd.f32 0.0, %v1518
    %1520 = vdwg.mxu0
    %v1521 = vadd.f32 %v1409, %v1517
    %v1522 = vadd.f32 %v1410, %v1519
    %s1523 = scalar_lea.vmem %s4, 120
    %v1524 = vld [vmem:[%s1523] sm:$0xf]
    %1525 = vrot.lane.b32.xlu0 %v1471, 112
    %v1526 = vpop.permute.xlu0 %1525
    %v1528 = vsel %vm722, %v1526, 0
    %v1531 = vsel %vm337, %v1524, 0
    %1533 = vmatpush.bf16.msra.mxu0 0
    %1534 = vmatpush.bf16.msra.mxu0 0
    %1535 = vmatpush.bf16.msra.mxu0 0
    %1536 = vmatpush.bf16.msra.mxu0 0
    %1537 = vmatpush.bf16.msra.mxu0 0
    %1538 = vmatpush.bf16.msra.mxu0 0
    %1539 = vmatpush.bf16.msra.mxu0 0
    %1540 = vmatpush.bf16.msra.mxu0 %v1531
    %1541 = vmatmul.bf16.gmra.mxu0 %v1528
    %v1542 = vpop.f32.mrf.mxu0
    %v1543 = vadd.f32 0.0, %v1542
    %v1544 = vpop.f32.mrf.mxu0
    %v1545 = vadd.f32 0.0, %v1544
    %1546 = vdwg.mxu0
    %v1547 = vadd.f32 %v1435, %v1543
    %v1548 = vadd.f32 %v1436, %v1545
    %s1549 = scalar_lea.vmem %s4, 124
    %v1550 = vld [vmem:[%s1549] sm:$0xf]
    %1551 = vrot.lane.b32.xlu0 %v1471, 104
    %v1552 = vpop.permute.xlu0 %1551
    %v1554 = vsel %vm722, %v1552, 0
    %v1557 = vsel %vm337, %v1550, 0
    %1559 = vmatpush.bf16.msra.mxu0 0
    %1560 = vmatpush.bf16.msra.mxu0 0
    %1561 = vmatpush.bf16.msra.mxu0 0
    %1562 = vmatpush.bf16.msra.mxu0 0
    %1563 = vmatpush.bf16.msra.mxu0 0
    %1564 = vmatpush.bf16.msra.mxu0 0
    %1565 = vmatpush.bf16.msra.mxu0 0
    %1566 = vmatpush.bf16.msra.mxu0 %v1557
    %1567 = vmatmul.bf16.gmra.mxu0 %v1554
    %v1568 = vpop.f32.mrf.mxu0
    %v1569 = vadd.f32 0.0, %v1568
    %v1570 = vpop.f32.mrf.mxu0
    %v1571 = vadd.f32 0.0, %v1570
    %1572 = vdwg.mxu0
    %v1573 = vadd.f32 %v1461, %v1569
    %v1574 = vadd.f32 %v1462, %v1571
    %v1575 = vpack.c.bf16 %v698, %v697
    %s1576 = scalar_lea.vmem %s4, 128
    %v1577 = vld [vmem:[%s1576] sm:$0xf]
    %v1579 = vsel %vm722, %v1575, 0
    %v1582 = vsel %vm337, %v1577, 0
    %1584 = vmatpush.bf16.msra.mxu0 0
    %1585 = vmatpush.bf16.msra.mxu0 0
    %1586 = vmatpush.bf16.msra.mxu0 0
    %1587 = vmatpush.bf16.msra.mxu0 0
    %1588 = vmatpush.bf16.msra.mxu0 0
    %1589 = vmatpush.bf16.msra.mxu0 0
    %1590 = vmatpush.bf16.msra.mxu0 0
    %1591 = vmatpush.bf16.msra.mxu0 %v1582
    %1592 = vmatmul.bf16.gmra.mxu0 %v1579
    %v1593 = vpop.f32.mrf.mxu0
    %v1594 = vadd.f32 0.0, %v1593
    %v1595 = vpop.f32.mrf.mxu0
    %v1596 = vadd.f32 0.0, %v1595
    %1597 = vdwg.mxu0
    %v1598 = vadd.f32 %v1494, %v1594
    %v1599 = vadd.f32 %v1495, %v1596
    %s1600 = scalar_lea.vmem %s4, 132
    %v1601 = vld [vmem:[%s1600] sm:$0xf]
    %1603 = vrot.lane.b32.xlu0 %v1575, 120
    %v1604 = vpop.permute.xlu0 %1603
    %v1606 = vsel %vm722, %v1604, 0
    %v1609 = vsel %vm337, %v1601, 0
    %1611 = vmatpush.bf16.msra.mxu0 0
    %1612 = vmatpush.bf16.msra.mxu0 0
    %1613 = vmatpush.bf16.msra.mxu0 0
    %1614 = vmatpush.bf16.msra.mxu0 0
    %1615 = vmatpush.bf16.msra.mxu0 0
    %1616 = vmatpush.bf16.msra.mxu0 0
    %1617 = vmatpush.bf16.msra.mxu0 0
    %1618 = vmatpush.bf16.msra.mxu0 %v1609
    %1619 = vmatmul.bf16.gmra.mxu0 %v1606
    %v1620 = vpop.f32.mrf.mxu0
    %v1621 = vadd.f32 0.0, %v1620
    %v1622 = vpop.f32.mrf.mxu0
    %v1623 = vadd.f32 0.0, %v1622
    %1624 = vdwg.mxu0
    %v1625 = vadd.f32 %v1521, %v1621
    %v1626 = vadd.f32 %v1522, %v1623
    %s1627 = scalar_lea.vmem %s4, 136
    %v1628 = vld [vmem:[%s1627] sm:$0xf]
    %1629 = vrot.lane.b32.xlu0 %v1575, 112
    %v1630 = vpop.permute.xlu0 %1629
    %v1632 = vsel %vm722, %v1630, 0
    %v1635 = vsel %vm337, %v1628, 0
    %1637 = vmatpush.bf16.msra.mxu0 0
    %1638 = vmatpush.bf16.msra.mxu0 0
    %1639 = vmatpush.bf16.msra.mxu0 0
    %1640 = vmatpush.bf16.msra.mxu0 0
    %1641 = vmatpush.bf16.msra.mxu0 0
    %1642 = vmatpush.bf16.msra.mxu0 0
    %1643 = vmatpush.bf16.msra.mxu0 0
    %1644 = vmatpush.bf16.msra.mxu0 %v1635
    %1645 = vmatmul.bf16.gmra.mxu0 %v1632
    %v1646 = vpop.f32.mrf.mxu0
    %v1647 = vadd.f32 0.0, %v1646
    %v1648 = vpop.f32.mrf.mxu0
    %v1649 = vadd.f32 0.0, %v1648
    %1650 = vdwg.mxu0
    %v1651 = vadd.f32 %v1547, %v1647
    %v1652 = vadd.f32 %v1548, %v1649
    %s1653 = scalar_lea.vmem %s4, 140
    %v1654 = vld [vmem:[%s1653] sm:$0xf]
    %1655 = vrot.lane.b32.xlu0 %v1575, 104
    %v1656 = vpop.permute.xlu0 %1655
    %v1658 = vsel %vm722, %v1656, 0
    %v1661 = vsel %vm337, %v1654, 0
    %1663 = vmatpush.bf16.msra.mxu0 0
    %1664 = vmatpush.bf16.msra.mxu0 0
    %1665 = vmatpush.bf16.msra.mxu0 0
    %1666 = vmatpush.bf16.msra.mxu0 0
    %1667 = vmatpush.bf16.msra.mxu0 0
    %1668 = vmatpush.bf16.msra.mxu0 0
    %1669 = vmatpush.bf16.msra.mxu0 0
    %1670 = vmatpush.bf16.msra.mxu0 %v1661
    %1671 = vmatmul.bf16.gmra.mxu0 %v1658
    %v1672 = vpop.f32.mrf.mxu0
    %v1673 = vadd.f32 0.0, %v1672
    %v1674 = vpop.f32.mrf.mxu0
    %v1675 = vadd.f32 0.0, %v1674
    %1676 = vdwg.mxu0
    %v1677 = vadd.f32 %v1573, %v1673
    %v1678 = vadd.f32 %v1574, %v1675
    %1681 = vrot.lane.b32.xlu0 %v1625, 8
    %v1682 = vpop.permute.xlu0 %1681
    %1683 = vrot.lane.b32.xlu0 %v1626, 8
    %v1684 = vpop.permute.xlu0 %1683
    %1689 = vrot.lane.b32.xlu0 %v1651, 16
    %v1690 = vpop.permute.xlu0 %1689
    %1691 = vrot.lane.b32.xlu0 %v1652, 16
    %v1692 = vpop.permute.xlu0 %1691
    %1697 = vrot.lane.b32.xlu0 %v1677, 24
    %v1698 = vpop.permute.xlu0 %1697
    %1699 = vrot.lane.b32.xlu0 %v1678, 24
    %v1700 = vpop.permute.xlu0 %1699
    %v1703 = vsel %vm722, %v1598, %v1682
    %v1704 = vsel %vm722, %v1599, %v1684
    %vm1705 = vcmask 130048
    %v1706 = vsel %vm1705, %v1703, %v1690
    %v1707 = vsel %vm1705, %v1704, %v1692
    %vm1708 = vcmask 195584
    %v1709 = vsel %vm1708, %v1706, %v1698
    %v1710 = vsel %vm1708, %v1707, %v1700
    %v1711 = vld [vmem:[#allocation5 + $0x2] sm:$0x1]
    %v1712 = vperm.slane %v1711, 0
    %v1713 = vadd.f32 %v1709, %v1712
    %v1714 = vadd.f32 %v1710, %v1712
    %v1715 = vld [vmem:[#allocation5 + $0x3] sm:$0x1]
    %v1716 = vld [vmem:[#allocation5 + $0x4] sm:$0x1]
    %v1717 = vsel %vm643, %v1713, 0.0
    %v1718 = vsel %vm643, %v1714, 0.0
    %v1719 = vadd.f32 %v1717, %v1718
    %v1720 = vrot.slane %v1719, 4
    %v1721 = vadd.f32 %v1719, %v1720
    %v1722 = vrot.slane %v1721, 2
    %v1723 = vadd.f32 %v1721, %v1722
    %v1724 = vrot.slane %v1723, 1
    %v1725 = vadd.f32 %v1723, %v1724
    %v1726 = vmul.f32 %v1725, 0.0625
    %v1727 = vmul.f32 %v1713, %v1713
    %v1728 = vmul.f32 %v1714, %v1714
    %v1729 = vsel %vm643, %v1727, 0.0
    %v1730 = vsel %vm643, %v1728, 0.0
    %v1731 = vadd.f32 %v1729, %v1730
    %v1732 = vrot.slane %v1731, 4
    %v1733 = vadd.f32 %v1731, %v1732
    %v1734 = vrot.slane %v1733, 2
    %v1735 = vadd.f32 %v1733, %v1734
    %v1736 = vrot.slane %v1735, 1
    %v1737 = vadd.f32 %v1735, %v1736
    %v1738 = vmul.f32 %v1737, 0.0625
    %v1739 = vmul.f32 %v1726, %v1726
    %v1740 = vsub.f32 %v1738, %v1739
    %v1741 = vmax.f32 %v1740, 0.0
    %v1742 = vadd.f32 %v1741, 1e-05
    %v1743 = vrsqrt.pop %v1742
    %v1744 = vmul.f32 %v1743, %v1742
    %v1745 = vmul.f32 %v1744, %v1743
    %v1746 = vmul.f32 0.5, %v1745
    %v1747 = vsub.f32 1.5, %v1746
    %v1748 = vmul.f32 %v1743, %v1747
    %vm1749 = vweird.f32 %v1742
    %vm1750 = vweird.f32 %v1743
    %vm1751 = vmor %vm1749, %vm1750
    %v1752 = vsel %vm1751, %v1743, %v1748
    %v1753 = vmul.f32 %v1752, %v1715
    %v1754 = vmul.f32 %v1726, %v1753
    %v1755 = vsub.f32 %v1716, %v1754
    %v1756 = vperm.slane %v1753, 0
    %v1757 = vmul.f32 %v1713, %v1756
    %v1758 = vmul.f32 %v1714, %v1756
    %v1759 = vperm.slane %v1755, 0
    %v1760 = vadd.f32 %v1757, %v1759
    %v1761 = vadd.f32 %v1758, %v1759
    %vm1762 = vcmp.gt.f32.partialorder %v1760, 0.0
    %vm1763 = vcmp.gt.f32.partialorder %v1761, 0.0
    %v1764 = vmul.f32 %v1760, 0.2
    %v1765 = vmul.f32 %v1761, 0.2
    %v1766 = vsel %vm1762, %v1760, %v1764
    %v1767 = vsel %vm1763, %v1761, %v1765
    %v1768 = vsel %vm643, %v1766, 0.0
    %v1769 = vsel %vm643, %v1767, 0.0
    %v1770 = vadd.f32 %v1768, %v1769
    %v1771 = vrot.slane %v1770, 4
    %v1772 = vadd.f32 %v1770, %v1771
    %v1773 = vrot.slane %v1772, 2
    %v1774 = vadd.f32 %v1772, %v1773
    %v1775 = vrot.slane %v1774, 1
    %v1776 = vadd.f32 %v1774, %v1775
    %v1777 = vmul.f32 %v1776, 0.0625
    %v1778 = vmul.f32 %v1766, %v1766
    %v1779 = vmul.f32 %v1767, %v1767
    %v1780 = vsel %vm643, %v1778, 0.0
    %v1781 = vsel %vm643, %v1779, 0.0
    %v1782 = vadd.f32 %v1780, %v1781
    %v1783 = vrot.slane %v1782, 4
    %v1784 = vadd.f32 %v1782, %v1783
    %v1785 = vrot.slane %v1784, 2
    %v1786 = vadd.f32 %v1784, %v1785
    %v1787 = vrot.slane %v1786, 1
    %v1788 = vadd.f32 %v1786, %v1787
    %v1789 = vmul.f32 %v1788, 0.0625
    %v1790 = vmul.f32 %v1777, %v1777
    %v1791 = vsub.f32 %v1789, %v1790
    %v1792 = vmax.f32 %v1791, 0.0
    %v1793 = vadd.f32 %v1792, 1e-05
    %v1794 = vrsqrt.pop %v1793
    %v1795 = vmul.f32 %v1794, %v1793
    %v1796 = vmul.f32 %v1795, %v1794
    %v1797 = vmul.f32 0.5, %v1796
    %v1798 = vsub.f32 1.5, %v1797
    %v1799 = vmul.f32 %v1794, %v1798
    %vm1800 = vweird.f32 %v1793
    %vm1801 = vweird.f32 %v1794
    %vm1802 = vmor %vm1800, %vm1801
    %v1803 = vsel %vm1802, %v1794, %v1799
    %v1804 = vmul.f32 %v1803, %v1715
    %v1805 = vmul.f32 %v1777, %v1804
    %v1806 = vsub.f32 %v1716, %v1805
    %v1807 = vperm.slane %v1804, 0
    %v1808 = vmul.f32 %v1766, %v1807
    %v1809 = vmul.f32 %v1767, %v1807
    %v1810 = vperm.slane %v1806, 0
    %v1811 = vadd.f32 %v1808, %v1810
    %v1812 = vadd.f32 %v1809, %v1810
    %v1813 = vpack.c.bf16 %v1812, %v1811
    %v1814 = vld [vmem:[%s5] sm:$0xff]
    %v1815 = vld [vmem:[%s5 + $0x8] sm:$0xff]
    %v1816 = vld [vmem:[%s5 + $0x10] sm:$0xff]
    %v1817 = vld [vmem:[%s5 + $0x18] sm:$0xff]
    %v1818 = vld [vmem:[#allocation7] ss:$2 sm:$0x3]
    %v1820 = vperm.slane %v1818, 0
    %v1821 = vperm.slane %v1818, 1
    %v1828 = vunpack.c.l.b16 %v1814
    %v1829 = vunpack.c.h.b16 %v1814
    %v1830 = vunpack.c.l.b16 %v1815
    %v1831 = vunpack.c.h.b16 %v1815
    %v1832 = vunpack.c.l.b16 %v1816
    %v1833 = vunpack.c.h.b16 %v1816
    %v1834 = vunpack.c.l.b16 %v1817
    %v1835 = vunpack.c.h.b16 %v1817
    %v1836 = vpack.c.b16 %v1830, %v1828
    %v1837 = vpack.c.b16 %v1831, %v1829
    %v1838 = vpack.c.b16 %v1834, %v1832
    %v1839 = vpack.c.b16 %v1835, %v1833
    %v1845 = vsel %vm643, %v1813, 0
    %1847 = vmatpush.bf16.msra.mxu0 0
    %1848 = vmatpush.bf16.msra.mxu0 0
    %1849 = vmatpush.bf16.msra.mxu0 0
    %1850 = vmatpush.bf16.msra.mxu0 0
    %1851 = vmatpush.bf16.msra.mxu0 0
    %1852 = vmatpush.bf16.msra.mxu0 0
    %1853 = vmatpush.bf16.msra.mxu0 %v1838
    %1854 = vmatpush.bf16.msra.mxu0 %v1836
    %1855 = vmatmul.bf16.gmra.mxu0 %v1845
    %v1856 = vpop.f32.mrf.mxu0
    %v1857 = vadd.f32 %v1820, %v1856
    %v1858 = vpop.f32.mrf.mxu0
    %v1859 = vadd.f32 %v1820, %v1858
    %1860 = vdwg.mxu0
    %1861 = vmatpush.bf16.msra.mxu0 0
    %1862 = vmatpush.bf16.msra.mxu0 0
    %1863 = vmatpush.bf16.msra.mxu0 0
    %1864 = vmatpush.bf16.msra.mxu0 0
    %1865 = vmatpush.bf16.msra.mxu0 0
    %1866 = vmatpush.bf16.msra.mxu0 0
    %1867 = vmatpush.bf16.msra.mxu0 %v1839
    %1868 = vmatpush.bf16.msra.mxu0 %v1837
    %1869 = vmatmul.bf16.gmra.mxu0 %v1845
    %v1870 = vpop.f32.mrf.mxu0
    %v1871 = vadd.f32 %v1821, %v1870
    %v1872 = vpop.f32.mrf.mxu0
    %v1873 = vadd.f32 %v1821, %v1872
    %1874 = vdwg.mxu0
    %v1875 = vmax.f32 %v1857, 0.0
    %v1876 = vmax.f32 %v1871, 0.0
    %v1877 = vmax.f32 %v1859, 0.0
    %v1878 = vmax.f32 %v1873, 0.0
    %v1879 = vpack.c.bf16 %v1877, %v1875
    %v1880 = vpack.c.bf16 %v1878, %v1876
    %v1881 = vld [vmem:[%s6] sm:$0xff]
    %v1882 = vld [vmem:[%s6 + $0x8] sm:$0xff]
    %v1883 = vld [vmem:[%s6 + $0x10] sm:$0xff]
    %v1884 = vld [vmem:[%s6 + $0x18] sm:$0xff]
    %v1885 = vld [vmem:[%s6 + $0x20] sm:$0xff]
    %v1886 = vld [vmem:[%s6 + $0x28] sm:$0xff]
    %v1887 = vld [vmem:[%s6 + $0x30] sm:$0xff]
    %v1888 = vld [vmem:[%s6 + $0x38] sm:$0xff]
    %v1889 = vld [vmem:[%s6 + $0x40] sm:$0xff]
    %v1890 = vld [vmem:[%s6 + $0x48] sm:$0xff]
    %v1891 = vld [vmem:[%s6 + $0x50] sm:$0xff]
    %v1892 = vld [vmem:[%s6 + $0x58] sm:$0xff]
    %v1893 = vld [vmem:[%s6 + $0x60] sm:$0xff]
    %v1894 = vld [vmem:[%s6 + $0x68] sm:$0xff]
    %v1895 = vld [vmem:[%s6 + $0x70] sm:$0xff]
    %v1896 = vld [vmem:[%s6 + $0x78] sm:$0xff]
    %v1897 = vld [vmem:[%s6 + $0x80] sm:$0xff]
    %v1898 = vld [vmem:[%s6 + $0x88] sm:$0xff]
    %v1899 = vld [vmem:[%s6 + $0x90] sm:$0xff]
    %v1900 = vld [vmem:[%s6 + $0x98] sm:$0xff]
    %v1901 = vld [vmem:[%s6 + $0xa0] sm:$0xff]
    %v1902 = vld [vmem:[%s6 + $0xa8] sm:$0xff]
    %v1903 = vld [vmem:[%s6 + $0xb0] sm:$0xff]
    %v1904 = vld [vmem:[%s6 + $0xb8] sm:$0xff]
    %v1905 = vld [vmem:[%s6 + $0xc0] sm:$0xff]
    %v1906 = vld [vmem:[%s6 + $0xc8] sm:$0xff]
    %v1907 = vld [vmem:[%s6 + $0xd0] sm:$0xff]
    %v1908 = vld [vmem:[%s6 + $0xd8] sm:$0xff]
    %v1909 = vld [vmem:[%s6 + $0xe0] sm:$0xff]
    %v1910 = vld [vmem:[%s6 + $0xe8] sm:$0xff]
    %v1911 = vld [vmem:[%s6 + $0xf0] sm:$0xff]
    %v1912 = vld [vmem:[%s6 + $0xf8] sm:$0xff]
    %s1913 = scalar_lea.vmem [#allocation7], 1
    %v1914 = vld [vmem:[%s1913] ss:$2 sm:$0x3]
    %v1916 = vperm.slane %v1914, 0
    %v1917 = vperm.slane %v1914, 1
    %v1952 = vunpack.c.l.b16 %v1881
    %v1953 = vunpack.c.h.b16 %v1881
    %v1954 = vunpack.c.l.b16 %v1882
    %v1955 = vunpack.c.h.b16 %v1882
    %v1956 = vunpack.c.l.b16 %v1883
    %v1957 = vunpack.c.h.b16 %v1883
    %v1958 = vunpack.c.l.b16 %v1884
    %v1959 = vunpack.c.h.b16 %v1884
    %v1960 = vunpack.c.l.b16 %v1885
    %v1961 = vunpack.c.h.b16 %v1885
    %v1962 = vunpack.c.l.b16 %v1886
    %v1963 = vunpack.c.h.b16 %v1886
    %v1964 = vunpack.c.l.b16 %v1887
    %v1965 = vunpack.c.h.b16 %v1887
    %v1966 = vunpack.c.l.b16 %v1888
    %v1967 = vunpack.c.h.b16 %v1888
    %v1968 = vunpack.c.l.b16 %v1889
    %v1969 = vunpack.c.h.b16 %v1889
    %v1970 = vunpack.c.l.b16 %v1890
    %v1971 = vunpack.c.h.b16 %v1890
    %v1972 = vunpack.c.l.b16 %v1891
    %v1973 = vunpack.c.h.b16 %v1891
    %v1974 = vunpack.c.l.b16 %v1892
    %v1975 = vunpack.c.h.b16 %v1892
    %v1976 = vunpack.c.l.b16 %v1893
    %v1977 = vunpack.c.h.b16 %v1893
    %v1978 = vunpack.c.l.b16 %v1894
    %v1979 = vunpack.c.h.b16 %v1894
    %v1980 = vunpack.c.l.b16 %v1895
    %v1981 = vunpack.c.h.b16 %v1895
    %v1982 = vunpack.c.l.b16 %v1896
    %v1983 = vunpack.c.h.b16 %v1896
    %v1984 = vunpack.c.l.b16 %v1897
    %v1985 = vunpack.c.h.b16 %v1897
    %v1986 = vunpack.c.l.b16 %v1898
    %v1987 = vunpack.c.h.b16 %v1898
    %v1988 = vunpack.c.l.b16 %v1899
    %v1989 = vunpack.c.h.b16 %v1899
    %v1990 = vunpack.c.l.b16 %v1900
    %v1991 = vunpack.c.h.b16 %v1900
    %v1992 = vunpack.c.l.b16 %v1901
    %v1993 = vunpack.c.h.b16 %v1901
    %v1994 = vunpack.c.l.b16 %v1902
    %v1995 = vunpack.c.h.b16 %v1902
    %v1996 = vunpack.c.l.b16 %v1903
    %v1997 = vunpack.c.h.b16 %v1903
    %v1998 = vunpack.c.l.b16 %v1904
    %v1999 = vunpack.c.h.b16 %v1904
    %v2000 = vunpack.c.l.b16 %v1905
    %v2001 = vunpack.c.h.b16 %v1905
    %v2002 = vunpack.c.l.b16 %v1906
    %v2003 = vunpack.c.h.b16 %v1906
    %v2004 = vunpack.c.l.b16 %v1907
    %v2005 = vunpack.c.h.b16 %v1907
    %v2006 = vunpack.c.l.b16 %v1908
    %v2007 = vunpack.c.h.b16 %v1908
    %v2008 = vunpack.c.l.b16 %v1909
    %v2009 = vunpack.c.h.b16 %v1909
    %v2010 = vunpack.c.l.b16 %v1910
    %v2011 = vunpack.c.h.b16 %v1910
    %v2012 = vunpack.c.l.b16 %v1911
    %v2013 = vunpack.c.h.b16 %v1911
    %v2014 = vunpack.c.l.b16 %v1912
    %v2015 = vunpack.c.h.b16 %v1912
    %v2016 = vpack.c.b16 %v1954, %v1952
    %v2017 = vpack.c.b16 %v1955, %v1953
    %v2018 = vpack.c.b16 %v1958, %v1956
    %v2019 = vpack.c.b16 %v1959, %v1957
    %v2020 = vpack.c.b16 %v1962, %v1960
    %v2021 = vpack.c.b16 %v1963, %v1961
    %v2022 = vpack.c.b16 %v1966, %v1964
    %v2023 = vpack.c.b16 %v1967, %v1965
    %v2024 = vpack.c.b16 %v1970, %v1968
    %v2025 = vpack.c.b16 %v1971, %v1969
    %v2026 = vpack.c.b16 %v1974, %v1972
    %v2027 = vpack.c.b16 %v1975, %v1973
    %v2028 = vpack.c.b16 %v1978, %v1976
    %v2029 = vpack.c.b16 %v1979, %v1977
    %v2030 = vpack.c.b16 %v1982, %v1980
    %v2031 = vpack.c.b16 %v1983, %v1981
    %v2032 = vpack.c.b16 %v1986, %v1984
    %v2033 = vpack.c.b16 %v1987, %v1985
    %v2034 = vpack.c.b16 %v1990, %v1988
    %v2035 = vpack.c.b16 %v1991, %v1989
    %v2036 = vpack.c.b16 %v1994, %v1992
    %v2037 = vpack.c.b16 %v1995, %v1993
    %v2038 = vpack.c.b16 %v1998, %v1996
    %v2039 = vpack.c.b16 %v1999, %v1997
    %v2040 = vpack.c.b16 %v2002, %v2000
    %v2041 = vpack.c.b16 %v2003, %v2001
    %v2042 = vpack.c.b16 %v2006, %v2004
    %v2043 = vpack.c.b16 %v2007, %v2005
    %v2044 = vpack.c.b16 %v2010, %v2008
    %v2045 = vpack.c.b16 %v2011, %v2009
    %v2046 = vpack.c.b16 %v2014, %v2012
    %v2047 = vpack.c.b16 %v2015, %v2013
    %2080 = vmatpush.bf16.msra.mxu0 %v2030
    %2081 = vmatpush.bf16.msra.mxu0 %v2028
    %2082 = vmatpush.bf16.msra.mxu0 %v2026
    %2083 = vmatpush.bf16.msra.mxu0 %v2024
    %2084 = vmatpush.bf16.msra.mxu0 %v2022
    %2085 = vmatpush.bf16.msra.mxu0 %v2020
    %2086 = vmatpush.bf16.msra.mxu0 %v2018
    %2087 = vmatpush.bf16.msra.mxu0 %v2016
    %2088 = vmatmul.bf16.gmra.mxu0 %v1879
    %v2089 = vpop.f32.mrf.mxu0
    %v2090 = vadd.f32 %v1916, %v2089
    %v2091 = vpop.f32.mrf.mxu0
    %v2092 = vadd.f32 %v1916, %v2091
    %2093 = vdwg.mxu0
    %2094 = vmatpush.bf16.msra.mxu0 %v2046
    %2095 = vmatpush.bf16.msra.mxu0 %v2044
    %2096 = vmatpush.bf16.msra.mxu0 %v2042
    %2097 = vmatpush.bf16.msra.mxu0 %v2040
    %2098 = vmatpush.bf16.msra.mxu0 %v2038
    %2099 = vmatpush.bf16.msra.mxu0 %v2036
    %2100 = vmatpush.bf16.msra.mxu0 %v2034
    %2101 = vmatpush.bf16.msra.mxu0 %v2032
    %2102 = vmatmul.bf16.gmra.mxu0 %v1880
    %v2103 = vpop.f32.mrf.mxu0
    %v2104 = vadd.f32 %v2090, %v2103
    %v2105 = vpop.f32.mrf.mxu0
    %v2106 = vadd.f32 %v2092, %v2105
    %2107 = vdwg.mxu0
    %2108 = vmatpush.bf16.msra.mxu0 %v2031
    %2109 = vmatpush.bf16.msra.mxu0 %v2029
    %2110 = vmatpush.bf16.msra.mxu0 %v2027
    %2111 = vmatpush.bf16.msra.mxu0 %v2025
    %2112 = vmatpush.bf16.msra.mxu0 %v2023
    %2113 = vmatpush.bf16.msra.mxu0 %v2021
    %2114 = vmatpush.bf16.msra.mxu0 %v2019
    %2115 = vmatpush.bf16.msra.mxu0 %v2017
    %2116 = vmatmul.bf16.gmra.mxu0 %v1879
    %v2117 = vpop.f32.mrf.mxu0
    %v2118 = vadd.f32 %v1917, %v2117
    %v2119 = vpop.f32.mrf.mxu0
    %v2120 = vadd.f32 %v1917, %v2119
    %2121 = vdwg.mxu0
    %2122 = vmatpush.bf16.msra.mxu0 %v2047
    %2123 = vmatpush.bf16.msra.mxu0 %v2045
    %2124 = vmatpush.bf16.msra.mxu0 %v2043
    %2125 = vmatpush.bf16.msra.mxu0 %v2041
    %2126 = vmatpush.bf16.msra.mxu0 %v2039
    %2127 = vmatpush.bf16.msra.mxu0 %v2037
    %2128 = vmatpush.bf16.msra.mxu0 %v2035
    %2129 = vmatpush.bf16.msra.mxu0 %v2033
    %2130 = vmatmul.bf16.gmra.mxu0 %v1880
    %v2131 = vpop.f32.mrf.mxu0
    %v2132 = vadd.f32 %v2118, %v2131
    %v2133 = vpop.f32.mrf.mxu0
    %v2134 = vadd.f32 %v2120, %v2133
    %2135 = vdwg.mxu0
    %v2136 = vmax.f32 %v2104, 0.0
    %v2137 = vmax.f32 %v2132, 0.0
    %v2138 = vmax.f32 %v2106, 0.0
    %v2139 = vmax.f32 %v2134, 0.0
    %v2140 = vpack.c.bf16 %v2138, %v2136
    %v2141 = vpack.c.bf16 %v2139, %v2137
    %v2142 = vld [vmem:[%s7] sm:$0xf]
    %v2143 = vld [vmem:[%s7 + $0x4] sm:$0xf]
    %v2144 = vld [vmem:[%s7 + $0x8] sm:$0xf]
    %v2145 = vld [vmem:[%s7 + $0xc] sm:$0xf]
    %v2146 = vld [vmem:[%s7 + $0x10] sm:$0xf]
    %v2147 = vld [vmem:[%s7 + $0x14] sm:$0xf]
    %v2148 = vld [vmem:[%s7 + $0x18] sm:$0xf]
    %v2149 = vld [vmem:[%s7 + $0x1c] sm:$0xf]
    %v2150 = vld [vmem:[%s7 + $0x20] sm:$0xf]
    %v2151 = vld [vmem:[%s7 + $0x24] sm:$0xf]
    %v2152 = vld [vmem:[%s7 + $0x28] sm:$0xf]
    %v2153 = vld [vmem:[%s7 + $0x2c] sm:$0xf]
    %v2154 = vld [vmem:[%s7 + $0x30] sm:$0xf]
    %v2155 = vld [vmem:[%s7 + $0x34] sm:$0xf]
    %v2156 = vld [vmem:[%s7 + $0x38] sm:$0xf]
    %v2157 = vld [vmem:[%s7 + $0x3c] sm:$0xf]
    %v2158 = vld [vmem:[%s7 + $0x40] sm:$0xf]
    %v2159 = vld [vmem:[%s7 + $0x44] sm:$0xf]
    %v2160 = vld [vmem:[%s7 + $0x48] sm:$0xf]
    %v2161 = vld [vmem:[%s7 + $0x4c] sm:$0xf]
    %v2162 = vld [vmem:[%s7 + $0x50] sm:$0xf]
    %v2163 = vld [vmem:[%s7 + $0x54] sm:$0xf]
    %v2164 = vld [vmem:[%s7 + $0x58] sm:$0xf]
    %v2165 = vld [vmem:[%s7 + $0x5c] sm:$0xf]
    %v2166 = vld [vmem:[%s7 + $0x60] sm:$0xf]
    %v2167 = vld [vmem:[%s7 + $0x64] sm:$0xf]
    %v2168 = vld [vmem:[%s7 + $0x68] sm:$0xf]
    %v2169 = vld [vmem:[%s7 + $0x6c] sm:$0xf]
    %v2170 = vld [vmem:[%s7 + $0x70] sm:$0xf]
    %v2171 = vld [vmem:[%s7 + $0x74] sm:$0xf]
    %v2172 = vld [vmem:[%s7 + $0x78] sm:$0xf]
    %v2173 = vld [vmem:[%s7 + $0x7c] sm:$0xf]
    %v2174 = vld [vmem:[#allocation8] sm:$0x1]
    %v2175 = vperm.slane %v2174, 0
    %v2208 = vunpack.c.l.b16 %v2142
    %v2209 = vunpack.c.l.b16 %v2143
    %v2210 = vunpack.c.l.b16 %v2144
    %v2211 = vunpack.c.l.b16 %v2145
    %v2212 = vunpack.c.l.b16 %v2146
    %v2213 = vunpack.c.l.b16 %v2147
    %v2214 = vunpack.c.l.b16 %v2148
    %v2215 = vunpack.c.l.b16 %v2149
    %v2216 = vunpack.c.l.b16 %v2150
    %v2217 = vunpack.c.l.b16 %v2151
    %v2218 = vunpack.c.l.b16 %v2152
    %v2219 = vunpack.c.l.b16 %v2153
    %v2220 = vunpack.c.l.b16 %v2154
    %v2221 = vunpack.c.l.b16 %v2155
    %v2222 = vunpack.c.l.b16 %v2156
    %v2223 = vunpack.c.l.b16 %v2157
    %v2224 = vunpack.c.l.b16 %v2158
    %v2225 = vunpack.c.l.b16 %v2159
    %v2226 = vunpack.c.l.b16 %v2160
    %v2227 = vunpack.c.l.b16 %v2161
    %v2228 = vunpack.c.l.b16 %v2162
    %v2229 = vunpack.c.l.b16 %v2163
    %v2230 = vunpack.c.l.b16 %v2164
    %v2231 = vunpack.c.l.b16 %v2165
    %v2232 = vunpack.c.l.b16 %v2166
    %v2233 = vunpack.c.l.b16 %v2167
    %v2234 = vunpack.c.l.b16 %v2168
    %v2235 = vunpack.c.l.b16 %v2169
    %v2236 = vunpack.c.l.b16 %v2170
    %v2237 = vunpack.c.l.b16 %v2171
    %v2238 = vunpack.c.l.b16 %v2172
    %v2239 = vunpack.c.l.b16 %v2173
    %v2240 = vpack.c.b16 %v2209, %v2208
    %v2241 = vpack.c.b16 %v2211, %v2210
    %v2242 = vpack.c.b16 %v2213, %v2212
    %v2243 = vpack.c.b16 %v2215, %v2214
    %v2244 = vpack.c.b16 %v2217, %v2216
    %v2245 = vpack.c.b16 %v2219, %v2218
    %v2246 = vpack.c.b16 %v2221, %v2220
    %v2247 = vpack.c.b16 %v2223, %v2222
    %v2248 = vpack.c.b16 %v2225, %v2224
    %v2249 = vpack.c.b16 %v2227, %v2226
    %v2250 = vpack.c.b16 %v2229, %v2228
    %v2251 = vpack.c.b16 %v2231, %v2230
    %v2252 = vpack.c.b16 %v2233, %v2232
    %v2253 = vpack.c.b16 %v2235, %v2234
    %v2254 = vpack.c.b16 %v2237, %v2236
    %v2255 = vpack.c.b16 %v2239, %v2238
    %2272 = vmatpush.bf16.msra.mxu0 %v2247
    %2273 = vmatpush.bf16.msra.mxu0 %v2246
    %2274 = vmatpush.bf16.msra.mxu0 %v2245
    %2275 = vmatpush.bf16.msra.mxu0 %v2244
    %2276 = vmatpush.bf16.msra.mxu0 %v2243
    %2277 = vmatpush.bf16.msra.mxu0 %v2242
    %2278 = vmatpush.bf16.msra.mxu0 %v2241
    %2279 = vmatpush.bf16.msra.mxu0 %v2240
    %2280 = vmatmul.bf16.gmra.mxu0 %v2140
    %v2281 = vpop.f32.mrf.mxu0
    %v2282 = vadd.f32 %v2175, %v2281
    %v2283 = vpop.f32.mrf.mxu0
    %v2284 = vadd.f32 %v2175, %v2283
    %2285 = vdwg.mxu0
    %2286 = vmatpush.bf16.msra.mxu0 %v2255
    %2287 = vmatpush.bf16.msra.mxu0 %v2254
    %2288 = vmatpush.bf16.msra.mxu0 %v2253
    %2289 = vmatpush.bf16.msra.mxu0 %v2252
    %2290 = vmatpush.bf16.msra.mxu0 %v2251
    %2291 = vmatpush.bf16.msra.mxu0 %v2250
    %2292 = vmatpush.bf16.msra.mxu0 %v2249
    %2293 = vmatpush.bf16.msra.mxu0 %v2248
    %2294 = vmatmul.bf16.gmra.mxu0 %v2141
    %v2295 = vpop.f32.mrf.mxu0
    %v2296 = vadd.f32 %v2282, %v2295
    %v2297 = vpop.f32.mrf.mxu0
    %v2298 = vadd.f32 %v2284, %v2297
    %2299 = vdwg.mxu0
    %2302 = vrot.lane.b32.xlu0 %v633, 96
    %v2303 = vpop.permute.xlu0 %2302
    %2304 = vrot.lane.b32.xlu0 %v634, 96
    %v2305 = vpop.permute.xlu0 %2304
    %v2308 = vadd.f32 %v2296, %v2303
    %v2309 = vadd.f32 %v2298, %v2305
    %v2310 = vsel %vm722, %v2308, 0.0
    %2311 = vadd.xlane.f32.xlu0 %v2310
    %v2312 = vpop.xlane.xlu0 %2311
    %v2313 = vsel %vm722, %v2309, 0.0
    %2314 = vadd.xlane.f32.xlu0 %v2313
    %v2315 = vpop.xlane.xlu0 %2314
    %v2316 = vrcp.pop 8.0
    %v2317 = vmul.f32 8.0, %v2316
    %v2318 = vsub.f32 1.0, %v2317
    %v2319 = vmul.f32 %v2316, %v2318
    %v2320 = vadd.f32 %v2316, %v2319
    %vm2321 = vweird.f32 %v2316
    %v2322 = vsel %vm2321, %v2316, %v2320
    %v2323 = vmul.f32 %v2312, %v2322
    %v2324 = vmul.f32 %v2315, %v2322
    %v2325 = vsub.f32 %v2308, %v2323
    %v2326 = vsub.f32 %v2309, %v2324
    %v2327 = vmul.f32 %v2325, %v2325
    %v2328 = vmul.f32 %v2326, %v2326
    %v2329 = vsel %vm722, %v2327, 0.0
    %2330 = vadd.xlane.f32.xlu0 %v2329
    %v2331 = vpop.xlane.xlu0 %2330
    %v2332 = vsel %vm722, %v2328, 0.0
    %2333 = vadd.xlane.f32.xlu0 %v2332
    %v2334 = vpop.xlane.xlu0 %2333
    %v2335 = vmul.f32 %v2331, %v2322
    %v2336 = vmul.f32 %v2334, %v2322
    %v2337 = vadd.f32 %v2335, 1e-05
    %v2338 = vadd.f32 %v2336, 1e-05
    %v2339 = vrsqrt.pop %v2337
    %v2340 = vmul.f32 %v2339, %v2337
    %v2341 = vmul.f32 %v2340, %v2339
    %v2342 = vmul.f32 0.5, %v2341
    %v2343 = vsub.f32 1.5, %v2342
    %v2344 = vmul.f32 %v2339, %v2343
    %vm2345 = vweird.f32 %v2337
    %vm2346 = vweird.f32 %v2339
    %vm2347 = vmor %vm2345, %vm2346
    %v2348 = vsel %vm2347, %v2339, %v2344
    %v2349 = vrsqrt.pop %v2338
    %v2350 = vmul.f32 %v2349, %v2338
    %v2351 = vmul.f32 %v2350, %v2349
    %v2352 = vmul.f32 0.5, %v2351
    %v2353 = vsub.f32 1.5, %v2352
    %v2354 = vmul.f32 %v2349, %v2353
    %vm2355 = vweird.f32 %v2338
    %vm2356 = vweird.f32 %v2349
    %vm2357 = vmor %vm2355, %vm2356
    %v2358 = vsel %vm2357, %v2349, %v2354
    %v2359 = vmul.f32 %v2325, %v2348
    %v2360 = vmul.f32 %v2326, %v2358
    %v2361 = vld [vmem:[#allocation8 + $0x1] sm:$0x1]
    %v2362 = vperm.slane %v2361, 0
    %v2363 = vmul.f32 %v2359, %v2362
    %v2364 = vmul.f32 %v2360, %v2362
    %v2365 = vld [vmem:[#allocation8 + $0x2] sm:$0x1]
    %v2366 = vperm.slane %v2365, 0
    %v2367 = vadd.f32 %v2363, %v2366
    %v2368 = vadd.f32 %v2364, %v2366
    %2369 = vxpose.xlu0.b32.start [1/16] %v2367, 128
    %2370 = vxpose.xlu0.b32.cont [2/16] 0.0, 128
    %2371 = vxpose.xlu0.b32.cont [3/16] 0.0, 128
    %2372 = vxpose.xlu0.b32.cont [4/16] 0.0, 128
    %2373 = vxpose.xlu0.b32.cont [5/16] 0.0, 128
    %2374 = vxpose.xlu0.b32.cont [6/16] 0.0, 128
    %2375 = vxpose.xlu0.b32.cont [7/16] 0.0, 128
    %2376 = vxpose.xlu0.b32.cont [8/16] 0.0, 128
    %2377 = vxpose.xlu0.b32.cont [9/16] 0.0, 128
    %2378 = vxpose.xlu0.b32.cont [10/16] 0.0, 128
    %2379 = vxpose.xlu0.b32.cont [11/16] 0.0, 128
    %2380 = vxpose.xlu0.b32.cont [12/16] 0.0, 128
    %2381 = vxpose.xlu0.b32.cont [13/16] 0.0, 128
    %2382 = vxpose.xlu0.b32.cont [14/16] 0.0, 128
    %2383 = vxpose.xlu0.b32.cont [15/16] 0.0, 128
    %2384 = vxpose.xlu0.b32.end [16/16] 0.0, 128
    %v2385 = vpop.trf.xlu0
    %v2386 = vpop.trf.xlu0
    %v2387 = vpop.trf.xlu0
    %v2388 = vpop.trf.xlu0
    %v2389 = vpop.trf.xlu0
    %v2390 = vpop.trf.xlu0
    %v2391 = vpop.trf.xlu0
    %v2392 = vpop.trf.xlu0
    %v2393 = vpop.trf.xlu0
    %v2394 = vpop.trf.xlu0
    %v2395 = vpop.trf.xlu0
    %v2396 = vpop.trf.xlu0
    %v2397 = vpop.trf.xlu0
    %v2398 = vpop.trf.xlu0
    %v2399 = vpop.trf.xlu0
    %v2400 = vpop.trf.xlu0
    %2401 = vxpose.xlu0.b32.start [1/16] %v2368, 128
    %2402 = vxpose.xlu0.b32.cont [2/16] 0.0, 128
    %2403 = vxpose.xlu0.b32.cont [3/16] 0.0, 128
    %2404 = vxpose.xlu0.b32.cont [4/16] 0.0, 128
    %2405 = vxpose.xlu0.b32.cont [5/16] 0.0, 128
    %2406 = vxpose.xlu0.b32.cont [6/16] 0.0, 128
    %2407 = vxpose.xlu0.b32.cont [7/16] 0.0, 128
    %2408 = vxpose.xlu0.b32.cont [8/16] 0.0, 128
    %2409 = vxpose.xlu0.b32.cont [9/16] 0.0, 128
    %2410 = vxpose.xlu0.b32.cont [10/16] 0.0, 128
    %2411 = vxpose.xlu0.b32.cont [11/16] 0.0, 128
    %2412 = vxpose.xlu0.b32.cont [12/16] 0.0, 128
    %2413 = vxpose.xlu0.b32.cont [13/16] 0.0, 128
    %2414 = vxpose.xlu0.b32.cont [14/16] 0.0, 128
    %2415 = vxpose.xlu0.b32.cont [15/16] 0.0, 128
    %2416 = vxpose.xlu0.b32.end [16/16] 0.0, 128
    %v2417 = vpop.trf.xlu0
    %v2418 = vpop.trf.xlu0
    %v2419 = vpop.trf.xlu0
    %v2420 = vpop.trf.xlu0
    %v2421 = vpop.trf.xlu0
    %v2422 = vpop.trf.xlu0
    %v2423 = vpop.trf.xlu0
    %v2424 = vpop.trf.xlu0
    %v2425 = vpop.trf.xlu0
    %v2426 = vpop.trf.xlu0
    %v2427 = vpop.trf.xlu0
    %v2428 = vpop.trf.xlu0
    %v2429 = vpop.trf.xlu0
    %v2430 = vpop.trf.xlu0
    %v2431 = vpop.trf.xlu0
    %v2432 = vpop.trf.xlu0
    %2433 = vst.msk [vmem:[#allocation10] sm:$0xff] %vm722, %v2385
    %2434 = vst.msk [vmem:[#allocation10 + $0x8] sm:$0xff] %vm722, %v2417
    // Predicated region
    $region58: #{unet_block_forward.1} parent=1 // pred_check
      _
    $region59: #{unet_block_forward.1} parent=1 // pred_check_branch
      %2436 = sbr.rel (0) target = $region61
    $region60: #{unet_block_forward.1} parent=1 // pred_region
      %2438 = vsyncadd [#allocation4], 0
      %s2439 = sshll.u32 [#allocation10], 4
      %s2440 = int_to_ptr.vmem [resolvable:$true] %s2439
      %s2441 = sshll.u32 %s10, 4
      %s2442 = int_to_ptr.hbm [resolvable:$true] %s2441
      %2447 = dma.vmem_to_hbm [thread:$0]  %s2440, 256, %s2442, [#allocation4], 128, 128, 8
    $region61: #{unet_block_forward.1} parent=1 // pred_fallthru
      _
    // Predicated region
    $region62: #{unet_block_forward.1} parent=1 // pred_check
      _
    $region63: #{unet_block_forward.1} parent=1 // pred_check_branch
      %2449 = sbr.rel (0) target = $region65
    $region64: #{unet_block_forward.1} parent=1 // pred_region
      %2451 = dma.done [#allocation4], 256
    $region65: #{unet_block_forward.1} parent=1 // pred_fallthru
      _
    %2452 = vsyncpa [#allocation3], 1
    %2453 = vsyncpa [#allocation6], 1
    %2454 = vsyncpa [#allocation9], 1
    %2455 = vsyncpa [#allocation4], 1

</llo_original>
